<compile_context>
chip_gen: v7x
topology: tpu7x:2x2x1
jax: 0.10.0
libtpu: 0.0.40
codegen_flags: <defaults>
</compile_context>

<pallas_src>
import functools

import jax
import jax.numpy as jnp
import numpy as np
from jax.experimental import pallas as pl
from jax.experimental.pallas import tpu as pltpu


def _views_rhs(x_ref, keep, *, W, HW, Nb):
    """Build the (4*Cin, Nb*HW) matmul RHS from the padded flat input block.

    x_ref: (Nb, Cin, HW + 2*W) flat image(s), 2 zero rows of bottom padding.
    keep : (1, HW) mask zeroing the x01/x11 views where w+1 wraps to the next row.
    """
    cols = []
    for n in range(Nb):
        x00 = x_ref[n, :, pl.ds(0, HW)]
        x01 = x_ref[n, :, pl.ds(1, HW)] * keep
        x10 = x_ref[n, :, pl.ds(W, HW)]
        x11 = x_ref[n, :, pl.ds(W + 1, HW)] * keep
        cols.append(jnp.concatenate([x00, x01, x10, x11], axis=0))   # (4*Cin, HW)
    return jnp.concatenate(cols, axis=1)                             # (4*Cin, Nb*HW)


def _convt_stats_kernel(x_ref, w_ref, mask_ref, stat_ref, *, W, HW, Nb):
    """Pass 1: transposed conv (one MXU matmul) -> per-step BN partial sums.

    stat_ref: (1, 4*Cout, 2) holding [sum, sumsq] per (quadrant, channel) row.
    """
    xs = _views_rhs(x_ref, mask_ref[...], W=W, HW=HW, Nb=Nb)
    y = jnp.dot(w_ref[...], xs, preferred_element_type=jnp.float32)  # (4*Cout, Nb*HW)
    rs = jnp.sum(y, axis=1, keepdims=True)                           # (4*Cout, 1)
    rq = jnp.sum(y * y, axis=1, keepdims=True)                       # (4*Cout, 1)
    stat_ref[0] = jnp.concatenate([rs, rq], axis=1)                  # (4*Cout, 2)


def _convt_bn_swish_kernel(x_ref, w_ref, mask_ref, scale_ref, shift_ref, perm_ref,
                           o_ref, *, W, HW, Cout, Nb):
    """Pass 2: conv recompute -> BatchNorm affine -> Swish -> NCHW-flat write.

    The quadrant->NCHW interleave is done as 4 accumulated matmuls with constant
    0/1 permutation blocks perm_ref[q]: exact in f32, MXU has plenty of slack.
    o_ref: (Nb, Cout, 4*HW) -- lane index is the flattened (Hout, Wout) position.
    """
    xs = _views_rhs(x_ref, mask_ref[...], W=W, HW=HW, Nb=Nb)
    y = jnp.dot(w_ref[...], xs, preferred_element_type=jnp.float32)  # (4*Cout, Nb*HW)
    y = y * scale_ref[...] + shift_ref[...]                          # BatchNorm (affine)
    y = y * jax.nn.sigmoid(y)                                        # Swish
    for n in range(Nb):
        acc = None
        for q in range(4):
            yq = y[q * Cout:(q + 1) * Cout, n * HW:(n + 1) * HW]     # (Cout, HW)
            t = jnp.dot(yq, perm_ref[q], preferred_element_type=jnp.float32)
            acc = t if acc is None else acc + t                      # (Cout, 4*HW)
        o_ref[n] = acc


@functools.partial(jax.jit, static_argnames=("batch_block",))
def upsample_block_forward(x_nchw, wt, bias, gamma, beta, eps=1e-5, *, batch_block=1):
    """x_nchw: (N, Cin, H, W); wt: (Cin, Cout, 3, 3) [PyTorch ConvTranspose2d layout].

    The ConvTranspose2d bias is accepted for API parity but is mathematically
    cancelled by train-mode BatchNorm (batch-mean subtraction), so it is unused.
    """
    del bias
    N, Cin, H, W = x_nchw.shape
    Cout = wt.shape[1]
    HW = H * W
    Hout, Wout = 2 * H, 2 * W
    HWout = Hout * Wout                       # == 4 * HW
    Nb = batch_block
    assert N % Nb == 0
    nsteps = N // Nb

    # ---- compile-time constants (numpy -> embedded constants under jit) --------
    # keep-mask: zero the +1-in-W views where they wrap into the next flat row.
    col = np.arange(HW, dtype=np.int32) % W
    keep = jnp.asarray((col < (W - 1)).astype(np.float32)[None, :])   # (1, HW)

    # lane permutation: quadrant lane (q*HW + m*W + w), q = 2*dy + dx,
    #                   -> NCHW-flat lane ((2m+dy)*Wout + 2w + dx).
    mm = np.arange(H).reshape(-1, 1)
    ww = np.arange(W).reshape(1, -1)
    src_sp = (mm * W + ww).reshape(-1)
    perm_np = np.zeros((4 * HW, HWout), np.float32)
    for dy in range(2):
        for dx in range(2):
            q = 2 * dy + dx
            dst = ((2 * mm + dy) * Wout + 2 * ww + dx).reshape(-1)
            perm_np[q * HW + src_sp, dst] = 1.0
    perm = jnp.asarray(perm_np.reshape(4, HW, HWout))

    # Block-structured weight: row-block q (output parity quadrant), col-block p
    # (neighbour view).  wq[kh, kw] = wt[:, :, kh, kw]^T  (Cout, Cin).
    wq = jnp.transpose(wt, (2, 3, 1, 0)).astype(jnp.float32)
    Z = jnp.zeros((Cout, Cin), jnp.float32)
    w_big = jnp.concatenate([
        jnp.concatenate([wq[1, 1], Z,        Z,        Z       ], axis=1),  # out[2m  ,2w  ]
        jnp.concatenate([wq[1, 2], wq[1, 0], Z,        Z       ], axis=1),  # out[2m  ,2w+1]
        jnp.concatenate([wq[2, 1], Z,        wq[0, 1], Z       ], axis=1),  # out[2m+1,2w  ]
        jnp.concatenate([wq[2, 2], wq[2, 0], wq[0, 2], wq[0, 0]], axis=1),  # out[2m+1,2w+1]
    ], axis=0)                                                               # (4*Cout, 4*Cin)

    # Single flat copy of x, padded with 2 zero rows so the four neighbour views
    # are in-bounds static lane-offset slices of one VMEM block.
    xf = x_nchw.astype(jnp.float32).reshape(N, Cin, HW)
    xpf = jnp.pad(xf, ((0, 0), (0, 0), (0, 2 * W)))                          # (N, Cin, HW+2W)
    HWp = HW + 2 * W

    # ---- pass 1: conv -> BatchNorm partial statistics (no big intermediate) ----
    stats = pl.pallas_call(
        functools.partial(_convt_stats_kernel, W=W, HW=HW, Nb=Nb),
        grid=(nsteps,),
        in_specs=[
            pl.BlockSpec((Nb, Cin, HWp), lambda b: (b, 0, 0)),
            pl.BlockSpec((4 * Cout, 4 * Cin), lambda b: (0, 0)),
            pl.BlockSpec((1, HW), lambda b: (0, 0)),
        ],
        out_specs=pl.BlockSpec((1, 4 * Cout, 2), lambda b: (b, 0, 0)),
        out_shape=jax.ShapeDtypeStruct((nsteps, 4 * Cout, 2), jnp.float32),
        compiler_params=pltpu.CompilerParams(dimension_semantics=("parallel",)),
    )(xpf, w_big, keep)

    # Tiny cross-step / cross-quadrant reduction in plain XLA.
    # NOTE: single-pass E[y^2]-E[y]^2 variance, kept fully in f32 (see review).
    tot = jnp.sum(stats, axis=0).reshape(4, Cout, 2).sum(axis=0)             # (Cout, 2)
    cnt = np.float32(N * HWout)
    mean = tot[:, 0] / cnt
    var = tot[:, 1] / cnt - mean * mean
    scale = gamma.astype(jnp.float32) / jnp.sqrt(var + eps)
    shift = beta.astype(jnp.float32) - mean * scale
    scale_t = jnp.tile(scale, 4).reshape(4 * Cout, 1)    # row q*Cout + c -> scale[c]
    shift_t = jnp.tile(shift, 4).reshape(4 * Cout, 1)

    # ---- pass 2: conv recompute -> BN -> Swish -> NCHW-flat (lane-dense) write --
    out_flat = pl.pallas_call(
        functools.partial(_convt_bn_swish_kernel, W=W, HW=HW, Cout=Cout, Nb=Nb),
        grid=(nsteps,),
        in_specs=[
            pl.BlockSpec((Nb, Cin, HWp), lambda b: (b, 0, 0)),
            pl.BlockSpec((4 * Cout, 4 * Cin), lambda b: (0, 0)),
            pl.BlockSpec((1, HW), lambda b: (0, 0)),
            pl.BlockSpec((4 * Cout, 1), lambda b: (0, 0)),
            pl.BlockSpec((4 * Cout, 1), lambda b: (0, 0)),
            pl.BlockSpec((4, HW, HWout), lambda b: (0, 0, 0)),
        ],
        out_specs=pl.BlockSpec((Nb, Cout, HWout), lambda b: (b, 0, 0)),
        out_shape=jax.ShapeDtypeStruct((N, Cout, HWout), jnp.float32),
        compiler_params=pltpu.CompilerParams(
            dimension_semantics=("parallel",),
            vmem_limit_bytes=32 * 1024 * 1024),   # headroom for the resident perm
    )(xpf, w_big, keep, scale_t, shift_t, perm)

    # lane index already equals ho*Wout + wo -> trailing-dim split is free.
    return out_flat.reshape(N, Cout, Hout, Wout)


def _ref_forward(x_nchw, wt, bias, gamma, beta, eps=1e-5):
    """Pure-JAX reference (same math as the PyTorch UpsampleBlock forward, train mode)."""
    w_flip = jnp.transpose(wt, (1, 0, 2, 3))[:, :, ::-1, ::-1]   # (Cout, Cin, 3, 3)
    z = jax.lax.conv_general_dilated(
        x_nchw, w_flip, window_strides=(1, 1),
        padding=((1, 2), (1, 2)), lhs_dilation=(2, 2), rhs_dilation=(1, 1),
        dimension_numbers=("NCHW", "OIHW", "NCHW"))
    z = z + bias[None, :, None, None]
    mean = z.mean(axis=(0, 2, 3), keepdims=True)
    var = ((z - mean) ** 2).mean(axis=(0, 2, 3), keepdims=True)
    y = (z - mean) / jnp.sqrt(var + eps)
    y = y * gamma[None, :, None, None] + beta[None, :, None, None]
    return y * jax.nn.sigmoid(y)


if __name__ == "__main__":
    key = jax.random.PRNGKey(0)
    k1, k2, k3, k4, k5 = jax.random.split(key, 5)
    N, Cin, Cout, H, W = 2, 4, 8, 16, 16

    x = jax.random.normal(k1, (N, Cin, H, W), jnp.float32)
    # deterministic synthetic parameters (shapes per the PyTorch module __init__)
    wt = 0.2 * jax.random.normal(k2, (Cin, Cout, 3, 3), jnp.float32)   # ConvTranspose2d.weight
    bias = 0.1 * jax.random.normal(k3, (Cout,), jnp.float32)           # ConvTranspose2d.bias
    gamma = 1.0 + 0.05 * jax.random.normal(k4, (Cout,), jnp.float32)   # BatchNorm2d.weight
    beta = 0.05 * jax.random.normal(k5, (Cout,), jnp.float32)          # BatchNorm2d.bias

    y = jax.block_until_ready(upsample_block_forward(x, wt, bias, gamma, beta))
    assert y.shape == (N, Cout, 2 * H, 2 * W)

    y_ref = jax.block_until_ready(_ref_forward(x, wt, bias, gamma, beta))
    np.testing.assert_allclose(np.asarray(y), np.asarray(y_ref), atol=1e-3, rtol=1e-3)
    print("KERNEL_OK")
</pallas_src>

<mosaic_0001>
module attributes {stable_mosaic.version = 11 : i64} {
  func.func @_convt_stats_kernel(%arg0: i32, %arg1: memref<1x4x288xf32, #tpu.memory_space<vmem>>, %arg2: memref<32x16xf32, #tpu.memory_space<vmem>>, %arg3: memref<1x256xf32, #tpu.memory_space<vmem>>, %arg4: memref<1x32x2xf32, #tpu.memory_space<vmem>>) attributes {dimension_semantics = [#tpu.dimension_semantics<parallel>], iteration_bounds = array<i64: 2>, scalar_prefetch = 0 : i64, scratch_operands = 0 : i64, tpu.core_type = #tpu.core_type<tc>, window_params = [{transform_indices = @transform_0, window_bounds = array<i64: 1, 4, 288>}, {pipeline_mode = #tpu.pipeline_mode<synchronous>, transform_indices = @transform_1, window_bounds = array<i64: 32, 16>}, {pipeline_mode = #tpu.pipeline_mode<synchronous>, transform_indices = @transform_2, window_bounds = array<i64: 1, 256>}, {transform_indices = @transform_3, window_bounds = array<i64: 1, 32, 2>}]} {
    %c0 = arith.constant 0 : index
    %c0_0 = arith.constant 0 : index
    %0 = vector.load %arg3[%c0, %c0_0] : memref<1x256xf32, #tpu.memory_space<vmem>>, vector<1x256xf32>
    %c0_1 = arith.constant 0 : index
    %c0_2 = arith.constant 0 : index
    %c0_3 = arith.constant 0 : index
    %1 = vector.load %arg1[%c0_1, %c0_2, %c0_3] : memref<1x4x288xf32, #tpu.memory_space<vmem>>, vector<1x4x256xf32>
    %2 = vector.shape_cast %1 : vector<1x4x256xf32> to vector<4x256xf32>
    %c0_4 = arith.constant 0 : index
    %c0_5 = arith.constant 0 : index
    %c1 = arith.constant 1 : index
    %3 = vector.load %arg1[%c0_4, %c0_5, %c1] : memref<1x4x288xf32, #tpu.memory_space<vmem>>, vector<1x4x256xf32>
    %4 = vector.shape_cast %3 : vector<1x4x256xf32> to vector<4x256xf32>
    %5 = vector.broadcast %0 : vector<1x256xf32> to vector<4x256xf32>
    %6 = arith.mulf %4, %5 : vector<4x256xf32>
    %c0_6 = arith.constant 0 : index
    %c0_7 = arith.constant 0 : index
    %c16 = arith.constant 16 : index
    %7 = vector.load %arg1[%c0_6, %c0_7, %c16] : memref<1x4x288xf32, #tpu.memory_space<vmem>>, vector<1x4x256xf32>
    %8 = vector.shape_cast %7 : vector<1x4x256xf32> to vector<4x256xf32>
    %c0_8 = arith.constant 0 : index
    %c0_9 = arith.constant 0 : index
    %c17 = arith.constant 17 : index
    %9 = vector.load %arg1[%c0_8, %c0_9, %c17] : memref<1x4x288xf32, #tpu.memory_space<vmem>>, vector<1x4x256xf32>
    %10 = vector.shape_cast %9 : vector<1x4x256xf32> to vector<4x256xf32>
    %11 = vector.broadcast %0 : vector<1x256xf32> to vector<4x256xf32>
    %12 = arith.mulf %10, %11 : vector<4x256xf32>
    %13 = tpu.concatenate %2, %6, %8, %12 in 0 : vector<4x256xf32>, vector<4x256xf32>, vector<4x256xf32>, vector<4x256xf32> -> vector<16x256xf32>
    %c0_10 = arith.constant 0 : index
    %c0_11 = arith.constant 0 : index
    %14 = vector.load %arg2[%c0_10, %c0_11] : memref<32x16xf32, #tpu.memory_space<vmem>>, vector<32x16xf32>
    %cst = arith.constant dense<0.000000e+00> : vector<32x256xf32>
    %15 = tpu.matmul %14, %13, %cst {dimension_numbers = #tpu.dot_dimension_numbers<[1], [0], [0], [1], [0, 0, 1, 1], [], []>} : vector<32x16xf32>, vector<16x256xf32>, vector<32x256xf32> -> vector<32x256xf32>
    %cst_12 = arith.constant dense<0.000000e+00> : vector<32xf32>
    %16 = vector.multi_reduction <add>, %15, %cst_12 [1] : vector<32x256xf32> to vector<32xf32>
    %17 = vector.shape_cast %16 : vector<32xf32> to vector<32x1xf32>
    %18 = arith.mulf %15, %15 : vector<32x256xf32>
    %cst_13 = arith.constant dense<0.000000e+00> : vector<32xf32>
    %19 = vector.multi_reduction <add>, %18, %cst_13 [1] : vector<32x256xf32> to vector<32xf32>
    %20 = vector.shape_cast %19 : vector<32xf32> to vector<32x1xf32>
    %21 = tpu.concatenate %17, %20 in 1 : vector<32x1xf32>, vector<32x1xf32> -> vector<32x2xf32>
    %c0_14 = arith.constant 0 : index
    %c0_15 = arith.constant 0 : index
    %c0_16 = arith.constant 0 : index
    %22 = vector.load %arg4[%c0_14, %c0_15, %c0_16] : memref<1x32x2xf32, #tpu.memory_space<vmem>>, vector<1x32x2xf32>
    %23 = vector.shape_cast %22 : vector<1x32x2xf32> to vector<32x2xf32>
    %24 = vector.shape_cast %21 : vector<32x2xf32> to vector<1x32x2xf32>
    tpu.vector_store %arg4[%c0_14, %c0_15, %c0_16], %24 {strides = array<i32>} : memref<1x32x2xf32, #tpu.memory_space<vmem>>, vector<1x32x2xf32>,
    return
  }
  func.func @transform_0(%arg0: i32) -> (i32, i32, i32) {
    %c0_i32 = arith.constant 0 : i32
    %c0_i32_0 = arith.constant 0 : i32
    %c0_i32_1 = arith.constant 0 : i32
    return %arg0, %c0_i32, %c0_i32_0 : i32, i32, i32
  }
  func.func @transform_1(%arg0: i32) -> (i32, i32) {
    %c0_i32 = arith.constant 0 : i32
    %c0_i32_0 = arith.constant 0 : i32
    %c0_i32_1 = arith.constant 0 : i32
    return %c0_i32, %c0_i32_0 : i32, i32
  }
  func.func @transform_2(%arg0: i32) -> (i32, i32) {
    %c0_i32 = arith.constant 0 : i32
    %c0_i32_0 = arith.constant 0 : i32
    %c0_i32_1 = arith.constant 0 : i32
    return %c0_i32, %c0_i32_0 : i32, i32
  }
  func.func @transform_3(%arg0: i32) -> (i32, i32, i32) {
    %c0_i32 = arith.constant 0 : i32
    %c0_i32_0 = arith.constant 0 : i32
    %c0_i32_1 = arith.constant 0 : i32
    return %arg0, %c0_i32, %c0_i32_0 : i32, i32, i32
  }
}

module attributes {stable_mosaic.version = 11 : i64} {
  func.func @_convt_bn_swish_kernel(%arg0: i32, %arg1: memref<1x4x288xf32, #tpu.memory_space<vmem>>, %arg2: memref<32x16xf32, #tpu.memory_space<vmem>>, %arg3: memref<1x256xf32, #tpu.memory_space<vmem>>, %arg4: memref<32x1xf32, #tpu.memory_space<vmem>>, %arg5: memref<32x1xf32, #tpu.memory_space<vmem>>, %arg6: memref<4x256x1024xf32, #tpu.memory_space<vmem>>, %arg7: memref<1x8x1024xf32, #tpu.memory_space<vmem>>) attributes {dimension_semantics = [#tpu.dimension_semantics<parallel>], iteration_bounds = array<i64: 2>, scalar_prefetch = 0 : i64, scratch_operands = 0 : i64, tpu.core_type = #tpu.core_type<tc>, window_params = [{transform_indices = @transform_0, window_bounds = array<i64: 1, 4, 288>}, {pipeline_mode = #tpu.pipeline_mode<synchronous>, transform_indices = @transform_1, window_bounds = array<i64: 32, 16>}, {pipeline_mode = #tpu.pipeline_mode<synchronous>, transform_indices = @transform_2, window_bounds = array<i64: 1, 256>}, {pipeline_mode = #tpu.pipeline_mode<synchronous>, transform_indices = @transform_3, window_bounds = array<i64: 32, 1>}, {pipeline_mode = #tpu.pipeline_mode<synchronous>, transform_indices = @transform_4, window_bounds = array<i64: 32, 1>}, {pipeline_mode = #tpu.pipeline_mode<synchronous>, transform_indices = @transform_5, window_bounds = array<i64: 4, 256, 1024>}, {transform_indices = @transform_6, window_bounds = array<i64: 1, 8, 1024>}]} {
    %c0 = arith.constant 0 : index
    %c0_0 = arith.constant 0 : index
    %0 = vector.load %arg3[%c0, %c0_0] : memref<1x256xf32, #tpu.memory_space<vmem>>, vector<1x256xf32>
    %c0_1 = arith.constant 0 : index
    %c0_2 = arith.constant 0 : index
    %c0_3 = arith.constant 0 : index
    %1 = vector.load %arg1[%c0_1, %c0_2, %c0_3] : memref<1x4x288xf32, #tpu.memory_space<vmem>>, vector<1x4x256xf32>
    %2 = vector.shape_cast %1 : vector<1x4x256xf32> to vector<4x256xf32>
    %c0_4 = arith.constant 0 : index
    %c0_5 = arith.constant 0 : index
    %c1 = arith.constant 1 : index
    %3 = vector.load %arg1[%c0_4, %c0_5, %c1] : memref<1x4x288xf32, #tpu.memory_space<vmem>>, vector<1x4x256xf32>
    %4 = vector.shape_cast %3 : vector<1x4x256xf32> to vector<4x256xf32>
    %5 = vector.broadcast %0 : vector<1x256xf32> to vector<4x256xf32>
    %6 = arith.mulf %4, %5 : vector<4x256xf32>
    %c0_6 = arith.constant 0 : index
    %c0_7 = arith.constant 0 : index
    %c16 = arith.constant 16 : index
    %7 = vector.load %arg1[%c0_6, %c0_7, %c16] : memref<1x4x288xf32, #tpu.memory_space<vmem>>, vector<1x4x256xf32>
    %8 = vector.shape_cast %7 : vector<1x4x256xf32> to vector<4x256xf32>
    %c0_8 = arith.constant 0 : index
    %c0_9 = arith.constant 0 : index
    %c17 = arith.constant 17 : index
    %9 = vector.load %arg1[%c0_8, %c0_9, %c17] : memref<1x4x288xf32, #tpu.memory_space<vmem>>, vector<1x4x256xf32>
    %10 = vector.shape_cast %9 : vector<1x4x256xf32> to vector<4x256xf32>
    %11 = vector.broadcast %0 : vector<1x256xf32> to vector<4x256xf32>
    %12 = arith.mulf %10, %11 : vector<4x256xf32>
    %13 = tpu.concatenate %2, %6, %8, %12 in 0 : vector<4x256xf32>, vector<4x256xf32>, vector<4x256xf32>, vector<4x256xf32> -> vector<16x256xf32>
    %c0_10 = arith.constant 0 : index
    %c0_11 = arith.constant 0 : index
    %14 = vector.load %arg2[%c0_10, %c0_11] : memref<32x16xf32, #tpu.memory_space<vmem>>, vector<32x16xf32>
    %cst = arith.constant dense<0.000000e+00> : vector<32x256xf32>
    %15 = tpu.matmul %14, %13, %cst {dimension_numbers = #tpu.dot_dimension_numbers<[1], [0], [0], [1], [0, 0, 1, 1], [], []>} : vector<32x16xf32>, vector<16x256xf32>, vector<32x256xf32> -> vector<32x256xf32>
    %c0_12 = arith.constant 0 : index
    %c0_13 = arith.constant 0 : index
    %16 = vector.load %arg4[%c0_12, %c0_13] : memref<32x1xf32, #tpu.memory_space<vmem>>, vector<32x1xf32>
    %17 = vector.broadcast %16 : vector<32x1xf32> to vector<32x256xf32>
    %18 = arith.mulf %15, %17 : vector<32x256xf32>
    %c0_14 = arith.constant 0 : index
    %c0_15 = arith.constant 0 : index
    %19 = vector.load %arg5[%c0_14, %c0_15] : memref<32x1xf32, #tpu.memory_space<vmem>>, vector<32x1xf32>
    %20 = vector.broadcast %19 : vector<32x1xf32> to vector<32x256xf32>
    %21 = arith.addf %18, %20 : vector<32x256xf32>
    %22 = arith.negf %21 : vector<32x256xf32>
    %23 = math.exp %22 : vector<32x256xf32>
    %cst_16 = arith.constant 1.000000e+00 : f32
    %24 = vector.broadcast %cst_16 : f32 to vector<32x256xf32>
    %25 = arith.addf %24, %23 : vector<32x256xf32>
    %26 = arith.divf %24, %25 : vector<32x256xf32>
    %27 = arith.mulf %21, %26 : vector<32x256xf32>
    %28 = vector.extract_strided_slice %27 {offsets = [0, 0], sizes = [8, 256], strides = [1, 1]} : vector<32x256xf32> to vector<8x256xf32>
    %c0_17 = arith.constant 0 : index
    %c0_18 = arith.constant 0 : index
    %c0_19 = arith.constant 0 : index
    %29 = vector.load %arg6[%c0_17, %c0_18, %c0_19] : memref<4x256x1024xf32, #tpu.memory_space<vmem>>, vector<1x256x1024xf32>
    %30 = vector.shape_cast %29 : vector<1x256x1024xf32> to vector<256x1024xf32>
    %cst_20 = arith.constant dense<0.000000e+00> : vector<8x1024xf32>
    %31 = tpu.matmul %28, %30, %cst_20 {dimension_numbers = #tpu.dot_dimension_numbers<[1], [0], [0], [1], [0, 0, 1, 1], [], []>} : vector<8x256xf32>, vector<256x1024xf32>, vector<8x1024xf32> -> vector<8x1024xf32>
    %32 = vector.extract_strided_slice %27 {offsets = [8, 0], sizes = [8, 256], strides = [1, 1]} : vector<32x256xf32> to vector<8x256xf32>
    %c1_21 = arith.constant 1 : index
    %c0_22 = arith.constant 0 : index
    %c0_23 = arith.constant 0 : index
    %33 = vector.load %arg6[%c1_21, %c0_22, %c0_23] : memref<4x256x1024xf32, #tpu.memory_space<vmem>>, vector<1x256x1024xf32>
    %34 = vector.shape_cast %33 : vector<1x256x1024xf32> to vector<256x1024xf32>
    %cst_24 = arith.constant dense<0.000000e+00> : vector<8x1024xf32>
    %35 = tpu.matmul %32, %34, %cst_24 {dimension_numbers = #tpu.dot_dimension_numbers<[1], [0], [0], [1], [0, 0, 1, 1], [], []>} : vector<8x256xf32>, vector<256x1024xf32>, vector<8x1024xf32> -> vector<8x1024xf32>
    %36 = arith.addf %31, %35 : vector<8x1024xf32>
    %37 = vector.extract_strided_slice %27 {offsets = [16, 0], sizes = [8, 256], strides = [1, 1]} : vector<32x256xf32> to vector<8x256xf32>
    %c2 = arith.constant 2 : index
    %c0_25 = arith.constant 0 : index
    %c0_26 = arith.constant 0 : index
    %38 = vector.load %arg6[%c2, %c0_25, %c0_26] : memref<4x256x1024xf32, #tpu.memory_space<vmem>>, vector<1x256x1024xf32>
    %39 = vector.shape_cast %38 : vector<1x256x1024xf32> to vector<256x1024xf32>
    %cst_27 = arith.constant dense<0.000000e+00> : vector<8x1024xf32>
    %40 = tpu.matmul %37, %39, %cst_27 {dimension_numbers = #tpu.dot_dimension_numbers<[1], [0], [0], [1], [0, 0, 1, 1], [], []>} : vector<8x256xf32>, vector<256x1024xf32>, vector<8x1024xf32> -> vector<8x1024xf32>
    %41 = arith.addf %36, %40 : vector<8x1024xf32>
    %42 = vector.extract_strided_slice %27 {offsets = [24, 0], sizes = [8, 256], strides = [1, 1]} : vector<32x256xf32> to vector<8x256xf32>
    %c3 = arith.constant 3 : index
    %c0_28 = arith.constant 0 : index
    %c0_29 = arith.constant 0 : index
    %43 = vector.load %arg6[%c3, %c0_28, %c0_29] : memref<4x256x1024xf32, #tpu.memory_space<vmem>>, vector<1x256x1024xf32>
    %44 = vector.shape_cast %43 : vector<1x256x1024xf32> to vector<256x1024xf32>
    %cst_30 = arith.constant dense<0.000000e+00> : vector<8x1024xf32>
    %45 = tpu.matmul %42, %44, %cst_30 {dimension_numbers = #tpu.dot_dimension_numbers<[1], [0], [0], [1], [0, 0, 1, 1], [], []>} : vector<8x256xf32>, vector<256x1024xf32>, vector<8x1024xf32> -> vector<8x1024xf32>
    %46 = arith.addf %41, %45 : vector<8x1024xf32>
    %c0_31 = arith.constant 0 : index
    %c0_32 = arith.constant 0 : index
    %c0_33 = arith.constant 0 : index
    %47 = vector.load %arg7[%c0_31, %c0_32, %c0_33] : memref<1x8x1024xf32, #tpu.memory_space<vmem>>, vector<1x8x1024xf32>
    %48 = vector.shape_cast %47 : vector<1x8x1024xf32> to vector<8x1024xf32>
    %49 = vector.shape_cast %46 : vector<8x1024xf32> to vector<1x8x1024xf32>
    tpu.vector_store %arg7[%c0_31, %c0_32, %c0_33], %49 {strides = array<i32>} : memref<1x8x1024xf32, #tpu.memory_space<vmem>>, vector<1x8x1024xf32>,
    return
  }
  func.func @transform_0(%arg0: i32) -> (i32, i32, i32) {
    %c0_i32 = arith.constant 0 : i32
    %c0_i32_0 = arith.constant 0 : i32
    %c0_i32_1 = arith.constant 0 : i32
    return %arg0, %c0_i32, %c0_i32_0 : i32, i32, i32
  }
  func.func @transform_1(%arg0: i32) -> (i32, i32) {
    %c0_i32 = arith.constant 0 : i32
    %c0_i32_0 = arith.constant 0 : i32
    %c0_i32_1 = arith.constant 0 : i32
    return %c0_i32, %c0_i32_0 : i32, i32
  }
  func.func @transform_2(%arg0: i32) -> (i32, i32) {
    %c0_i32 = arith.constant 0 : i32
    %c0_i32_0 = arith.constant 0 : i32
    %c0_i32_1 = arith.constant 0 : i32
    return %c0_i32, %c0_i32_0 : i32, i32
  }
  func.func @transform_3(%arg0: i32) -> (i32, i32) {
    %c0_i32 = arith.constant 0 : i32
    %c0_i32_0 = arith.constant 0 : i32
    %c0_i32_1 = arith.constant 0 : i32
    return %c0_i32, %c0_i32_0 : i32, i32
  }
  func.func @transform_4(%arg0: i32) -> (i32, i32) {
    %c0_i32 = arith.constant 0 : i32
    %c0_i32_0 = arith.constant 0 : i32
    %c0_i32_1 = arith.constant 0 : i32
    return %c0_i32, %c0_i32_0 : i32, i32
  }
  func.func @transform_5(%arg0: i32) -> (i32, i32, i32) {
    %c0_i32 = arith.constant 0 : i32
    %c0_i32_0 = arith.constant 0 : i32
    %c0_i32_1 = arith.constant 0 : i32
    %c0_i32_2 = arith.constant 0 : i32
    return %c0_i32, %c0_i32_0, %c0_i32_1 : i32, i32, i32
  }
  func.func @transform_6(%arg0: i32) -> (i32, i32, i32) {
    %c0_i32 = arith.constant 0 : i32
    %c0_i32_0 = arith.constant 0 : i32
    %c0_i32_1 = arith.constant 0 : i32
    return %arg0, %c0_i32, %c0_i32_0 : i32, i32, i32
  }
}

</mosaic_0001>

<llo_original>
// kernel: tile.18
$region0: #{tile.18}
  #allocation0 [shape = 's32[1]{0}', space=sflag, size = 0x4, scoped, tag = 'scoped memory for tile.18']
  %s0 = inlined_call_operand.vmem [shape: f32[8], index: 0, kind: input, shape index: {}]
  %s1 = inlined_call_operand.vmem [shape: f32[4,8], index: 1, kind: output, shape index: {}]
  // Predicated region
  $region2: #{tile.18} parent=0 // pred_check
    _
  $region3: #{tile.18} parent=0 // pred_check_branch
    %3 = sbr.rel (0) target = $region5
  $region4: #{tile.18} parent=0 // pred_region
    _
  $region5: #{tile.18} parent=0 // pred_fallthru
    _
  %v4 = vld [vmem:[%s0] ss:$0 sm:$0xff]
  %5 = vst [vmem:[%s1] sm:$0xf] %v4

// kernel: tile.0
$region0: #{tile.0}
  %s0 = inlined_call_operand.vmem [shape: f32[4,8], index: 0, kind: input, shape index: {}]
  %s1 = inlined_call_operand.vmem [shape: f32[32,1], index: 1, kind: output, shape index: {}]
  $region1: #{tile.0} parent=0
    #allocation0 [shape = 'u8[4096]{0}', space=vmem, size = 0x1000, scoped, tag = 'scoped mem for input reshape']
    %s3 = sshllo.u32 0, 4
    %v4 = vld [vmem:[%s0] sm:%s3]
    %5 = vst [vmem:[#allocation0] sm:%s3] %v4
    %v6 = vld [vmem:[#allocation0] sm:$0xf]
    %vm7 = vcmask 7168
    %8 = vst.msk [vmem:[%s1] ss:$8 sm:$0xf] %vm7, %v6
    %v9 = vld [vmem:[#allocation0] sm:$0xf]
    %10 = vrot.lane.b32.xlu0 %v9, 127
    %v11 = vpop.permute.xlu0 %10
    %vm12 = vcmask 7168
    %s13 = scalar_lea.vmem %s1, 1
    %14 = vst.msk [vmem:[%s13] ss:$8 sm:$0xf] %vm12, %v11
    %v15 = vld [vmem:[#allocation0] sm:$0xf]
    %16 = vrot.lane.b32.xlu0 %v15, 126
    %v17 = vpop.permute.xlu0 %16
    %vm18 = vcmask 7168
    %s19 = scalar_lea.vmem %s1, 2
    %20 = vst.msk [vmem:[%s19] ss:$8 sm:$0xf] %vm18, %v17
    %v21 = vld [vmem:[#allocation0] sm:$0xf]
    %22 = vrot.lane.b32.xlu0 %v21, 125
    %v23 = vpop.permute.xlu0 %22
    %vm24 = vcmask 7168
    %s25 = scalar_lea.vmem %s1, 3
    %26 = vst.msk [vmem:[%s25] ss:$8 sm:$0xf] %vm24, %v23
    %v27 = vld [vmem:[#allocation0] sm:$0xf]
    %28 = vrot.lane.b32.xlu0 %v27, 124
    %v29 = vpop.permute.xlu0 %28
    %vm30 = vcmask 7168
    %s31 = scalar_lea.vmem %s1, 4
    %32 = vst.msk [vmem:[%s31] ss:$8 sm:$0xf] %vm30, %v29
    %v33 = vld [vmem:[#allocation0] sm:$0xf]
    %34 = vrot.lane.b32.xlu0 %v33, 123
    %v35 = vpop.permute.xlu0 %34
    %vm36 = vcmask 7168
    %s37 = scalar_lea.vmem %s1, 5
    %38 = vst.msk [vmem:[%s37] ss:$8 sm:$0xf] %vm36, %v35
    %v39 = vld [vmem:[#allocation0] sm:$0xf]
    %40 = vrot.lane.b32.xlu0 %v39, 122
    %v41 = vpop.permute.xlu0 %40
    %vm42 = vcmask 7168
    %s43 = scalar_lea.vmem %s1, 6
    %44 = vst.msk [vmem:[%s43] ss:$8 sm:$0xf] %vm42, %v41
    %v45 = vld [vmem:[#allocation0] sm:$0xf]
    %46 = vrot.lane.b32.xlu0 %v45, 121
    %v47 = vpop.permute.xlu0 %46
    %vm48 = vcmask 7168
    %s49 = scalar_lea.vmem %s1, 7
    %50 = vst.msk [vmem:[%s49] ss:$8 sm:$0xf] %vm48, %v47

// kernel: upsample_block_forward.2
$region0: #{upsample_block_forward.2}
  #allocation0 [shape = 'u32[]', space=smem, size = 0x4, offset = 0x4, fixed_abs, tag = 'smem constant byte address 0x4 - core index']
  #allocation1 [shape = 'u32[144,128]{1,0:T(1,128)}', space=vmem, size = 0x12000, scoped, tag = 'internal scratch']
  %s0 = inlined_call_operand.vmem [shape: f32[2,4,288], index: 0, kind: input, shape index: {}]
  %s1 = inlined_call_operand.vmem [shape: f32[32,16], index: 1, kind: input, shape index: {}]
  %s2 = inlined_call_operand.hbm [shape: f32[1,256], index: 2, kind: input, shape index: {}]
  %s3 = inlined_call_operand.vmem [shape: f32[2,32,2], index: 3, kind: output, shape index: {}]
  %s4 = sld [smem:[#allocation0]]
  $region49: #{upsample_block_forward.2} parent=0
    _
  %s6 = ssub.s32 1, %s4
  %s7 = scalar_select 0, %s6, %s4
  $region1: #{upsample_block_forward.2} parent=0
    #allocation2 [shape = 'u8[1024]{0}', space=vmem, size = 0x400, scoped, tag = 'input window, operand 2, single buffered']
    #allocation3 [shape = 's32[2]{0}', space=sflag, size = 0x8, scoped, tag = 'scoped memory for upsample_block_forward.2']
    %8 = vsyncpa [#allocation3], 0
    loop: start=0, step=1, limit=4
    $region2: #{upsample_block_forward.2} parent=1 // loop_pre_header
      _
    $region3: #{upsample_block_forward.2} parent=1 // loop_header
      %s10 = sphi 0, %s14
      %p11 = scmp.ge.s32.totalorder %s10, 4
      %s20 = sphi 0, %s22
      %s23 = sphi 0, %s20
      %s24 = sphi 0, %s23
      %s40 = sphi 0, %s24
      %s44 = sphi 0, %s44
      %s46 = sphi 0, %s44
      %s47 = sphi 0, %s46
      %s61 = sphi 0, %s47
      %s65 = sphi 0, %s65
      %s67 = sphi 0, %s65
      %s68 = sphi 0, %s67
      %s82 = sphi 0, %s68
      %s88 = sphi 0, %s90
      %s91 = sphi 0, %s88
      %s92 = sphi 0, %s91
      %s108 = sphi 0, %s92
    $region4: #{upsample_block_forward.2} parent=1 // loop_header_branch
      %13 = sbr.rel (%p11) target = $region8
    $region5: #{upsample_block_forward.2} parent=1 // loop_body
      %s15 = ssub.s32 %s10, 1
      %s16 = ssub.s32 %s10, 2
      %s17 = sadd.s32 %s10, 1
      %s18 = ssub.s32 %s10, %s17
      %p19 = scmp.eq.s32.totalorder %s18, 0
      %s21 = sadd.s32 %s20, 1
      %s22 = scalar_select %p19, %s20, %s21
      %p25 = pneg %p19
      %p26 = scmp.eq.s32.totalorder %s10, 1
      %p27 = por %p25, %p26
      %p28 = scmp.ne.s32.totalorder %s20, %s23
      %p29 = scmp.eq.s32.totalorder %s10, 0
      %p30 = por %p28, %p29
      %p31 = scmp.ne.s32.totalorder %s20, %s23
      %p32 = scmp.eq.s32.totalorder %s15, 1
      %p33 = por %p31, %p32
      %p34 = scmp.ne.s32.totalorder %s23, %s24
      %p35 = scmp.eq.s32.totalorder %s15, 0
      %p36 = por %p34, %p35
      %p37 = scmp.ne.s32.totalorder %s23, %s24
      %p38 = scmp.eq.s32.totalorder %s16, 1
      %p39 = por %p37, %p38
      %p41 = scmp.ne.s32.totalorder %s24, %s40
      %p42 = scmp.eq.s32.totalorder %s16, 0
      %p43 = por %p41, %p42
      %s45 = sadd.s32 %s44, 1
      %p48 = scmp.eq.s32.totalorder %s10, 1
      %p49 = scmp.ne.s32.totalorder %s44, %s46
      %p50 = scmp.eq.s32.totalorder %s10, 0
      %p51 = por %p49, %p50
      %p52 = scmp.ne.s32.totalorder %s44, %s46
      %p53 = scmp.eq.s32.totalorder %s15, 1
      %p54 = por %p52, %p53
      %p55 = scmp.ne.s32.totalorder %s46, %s47
      %p56 = scmp.eq.s32.totalorder %s15, 0
      %p57 = por %p55, %p56
      %p58 = scmp.ne.s32.totalorder %s46, %s47
      %p59 = scmp.eq.s32.totalorder %s16, 1
      %p60 = por %p58, %p59
      %p62 = scmp.ne.s32.totalorder %s47, %s61
      %p63 = scmp.eq.s32.totalorder %s16, 0
      %p64 = por %p62, %p63
      %s66 = sadd.s32 %s65, 1
      %p69 = scmp.eq.s32.totalorder %s10, 1
      %p70 = scmp.ne.s32.totalorder %s65, %s67
      %p71 = scmp.eq.s32.totalorder %s10, 0
      %p72 = por %p70, %p71
      %p73 = scmp.ne.s32.totalorder %s65, %s67
      %p74 = scmp.eq.s32.totalorder %s15, 1
      %p75 = por %p73, %p74
      %p76 = scmp.ne.s32.totalorder %s67, %s68
      %p77 = scmp.eq.s32.totalorder %s15, 0
      %p78 = por %p76, %p77
      %p79 = scmp.ne.s32.totalorder %s67, %s68
      %p80 = scmp.eq.s32.totalorder %s16, 1
      %p81 = por %p79, %p80
      %p83 = scmp.ne.s32.totalorder %s68, %s82
      %p84 = scmp.eq.s32.totalorder %s16, 0
      %p85 = por %p83, %p84
      %s86 = ssub.s32 %s10, %s17
      %p87 = scmp.eq.s32.totalorder %s86, 0
      %s89 = sadd.s32 %s88, 1
      %s90 = scalar_select %p87, %s88, %s89
      %p93 = pneg %p87
      %p94 = scmp.eq.s32.totalorder %s10, 1
      %p95 = por %p93, %p94
      %p96 = scmp.ne.s32.totalorder %s88, %s91
      %p97 = scmp.eq.s32.totalorder %s10, 0
      %p98 = por %p96, %p97
      %p99 = scmp.ne.s32.totalorder %s88, %s91
      %p100 = scmp.eq.s32.totalorder %s15, 1
      %p101 = por %p99, %p100
      %p102 = scmp.ne.s32.totalorder %s91, %s92
      %p103 = scmp.eq.s32.totalorder %s15, 0
      %p104 = por %p102, %p103
      %p105 = scmp.ne.s32.totalorder %s91, %s92
      %p106 = scmp.eq.s32.totalorder %s16, 1
      %p107 = por %p105, %p106
      %p109 = scmp.ne.s32.totalorder %s92, %s108
      %p110 = scmp.eq.s32.totalorder %s16, 0
      %p111 = por %p109, %p110
      %p112 = scmp.le.s32.totalorder 1, %s10
      %p113 = scmp.lt.s32.totalorder %s10, 3
      %p114 = pnand %p112, %p113
      %p115 = pneg %p114
      // Predicated region
      $region9: #{upsample_block_forward.2} parent=5 // pred_check
        _
      $region10: #{upsample_block_forward.2} parent=5 // pred_check_branch
        %117 = sbr.rel (%p114) target = $region12
      $region11: #{upsample_block_forward.2} parent=5 // pred_region
        %s118 = ssub.s32 %s10, 1
        // Predicated region
        $region13: #{upsample_block_forward.2} parent=11 // pred_check
          %p119 = pneg %p57
        $region14: #{upsample_block_forward.2} parent=11 // pred_check_branch
          %121 = sbr.rel (%p119) target = $region16
        $region15: #{upsample_block_forward.2} parent=11 // pred_region
          _
        $region16: #{upsample_block_forward.2} parent=11 // pred_fallthru
          _
        // Predicated region
        $region17: #{upsample_block_forward.2} parent=11 // pred_check
          %p122 = pneg %p78
        $region18: #{upsample_block_forward.2} parent=11 // pred_check_branch
          %124 = sbr.rel (%p122) target = $region20
        $region19: #{upsample_block_forward.2} parent=11 // pred_region
          %s126 = ssub.s32 32, 32
          %127 = vsyncadd [#allocation3], %s126
          %s129 = sshll.u32 [#allocation2], 4
          %s130 = int_to_ptr.vmem [resolvable:$true] %s129
          %132 = dma.hbm_to_vmem [thread:$0]  %s2, 32, %s130, [#allocation3]
        $region20: #{upsample_block_forward.2} parent=11 // pred_fallthru
          _
      $region12: #{upsample_block_forward.2} parent=5 // pred_fallthru
        _
      %p133 = scmp.lt.s32.totalorder %s10, 2
      // Predicated region
      $region21: #{upsample_block_forward.2} parent=5 // pred_check
        %p134 = pneg %p133
      $region22: #{upsample_block_forward.2} parent=5 // pred_check_branch
        %136 = sbr.rel (%p134) target = $region24
      $region23: #{upsample_block_forward.2} parent=5 // pred_region
        // Predicated region
        $region25: #{upsample_block_forward.2} parent=23 // pred_check
          %p137 = pneg %p30
        $region26: #{upsample_block_forward.2} parent=23 // pred_check_branch
          %139 = sbr.rel (%p137) target = $region28
        $region27: #{upsample_block_forward.2} parent=23 // pred_region
          %p140 = scmp.lt.s32.totalorder %s10, 1
          %s141 = scalar_select %p140, %s10, 1
          %s142 = smul.addr %s141, 3
          %s143 = smul.addr %s142, 4
          %s144 = scalar_lea.vmem %s0, %s143
        $region28: #{upsample_block_forward.2} parent=23 // pred_fallthru
          _
      $region24: #{upsample_block_forward.2} parent=5 // pred_fallthru
        _
      %p145 = scmp.le.s32.totalorder 1, %s10
      %p146 = scmp.lt.s32.totalorder %s10, 3
      %p147 = pnand %p145, %p146
      %p148 = pneg %p147
      // Predicated region
      $region29: #{upsample_block_forward.2} parent=5 // pred_check
        _
      $region30: #{upsample_block_forward.2} parent=5 // pred_check_branch
        %150 = sbr.rel (%p147) target = $region32
      $region31: #{upsample_block_forward.2} parent=5 // pred_region
        %s151 = ssub.s32 %s10, 1
        // Predicated region
        $region33: #{upsample_block_forward.2} parent=31 // pred_check
          %p152 = pneg %p78
        $region34: #{upsample_block_forward.2} parent=31 // pred_check_branch
          %154 = sbr.rel (%p152) target = $region36
        $region35: #{upsample_block_forward.2} parent=31 // pred_region
          %155 = dma.done [#allocation3], 32
        $region36: #{upsample_block_forward.2} parent=31 // pred_fallthru
          _
        %p156 = scmp.lt.s32.totalorder %s15, 1
        %s157 = scalar_select %p156, %s15, 1
        %s158 = smul.addr %s157, 3
        %s159 = smul.addr %s158, 4
        %s160 = scalar_lea.vmem %s0, %s159
        %p161 = pneg %p36
        %p162 = pneg %p33
        %p163 = pneg %p57
        %p164 = pneg %p54
        %p165 = pneg %p78
        %p166 = pneg %p75
        %p167 = pneg %p104
        %p168 = pneg %p101
        %p169 = scmp.lt.s32.totalorder %s15, 1
        %s170 = scalar_select %p169, %s15, 1
        %s171 = smul.addr %s170, 4
        %s172 = smul.addr %s171, 8
        %s173 = scalar_lea.vmem %s3, %s172
        %p174 = scmp.lt.s32.totalorder %s15, 1
        %s175 = scalar_select %p174, %s15, 1
        %s176 = smul.addr %s175, 3
        %s177 = smul.addr %s176, 4
        %s178 = scalar_lea.vmem %s0, %s177
        %p179 = scmp.lt.s32.totalorder %s15, 1
        %s180 = scalar_select %p179, %s15, 1
        %s181 = smul.addr %s180, 4
        %s182 = smul.addr %s181, 8
        %s183 = scalar_lea.vmem %s3, %s182
        %v184 = vld [vmem:[#allocation2] sm:$0x3]
        %v185 = vld [vmem:[%s178] sm:$0xff]
        %v186 = vld [vmem:[%s178 + $0x8] sm:$0xf]
        %v188 = vlaneseq
        %v189 = vshrl.u32 %v188, 7
        %v190 = vsub.s32 0, %v189
        %v191 = vrot.slane %v184, %v190
        %v192 = vlaneseq
        %v193 = vshrl.u32 %v192, 7
        %v194 = vsub.s32 1, %v193
        %v195 = vrot.slane %v184, %v194
        %v196 = vcombine.low %v191, %v195
        %197 = vrot.lane.b32.xlu0 %v196, 1
        %v198 = vpop.permute.xlu0 %197
        %v199 = vrot.slane %v198, 4
        %vm200 = vcmask 7168
        %v201 = vsel %vm200, %v199, %v198
        %v204 = vmul.f32 %v185, %v201
        %v205 = vmul.f32 %v186, %v199
        %206 = vrot.lane.b32.xlu0 %v196, 17
        %v207 = vpop.permute.xlu0 %206
        %v208 = vrot.slane %v207, 4
        %vm209 = vcmask 138240
        %v210 = vsel %vm209, %v208, %v207
        %v213 = vmul.f32 %v185, %v210
        %v214 = vmul.f32 %v186, %v208
        %v216 = vcombine.high %v185, %v185
        %v220 = vcombine.low %v204, %v204
        %v221 = vcombine.low %v205, %v205
        %222 = vrot.lane.b32.xlu0 %v220, 127
        %v223 = vpop.permute.xlu0 %222
        %224 = vrot.lane.b32.xlu0 %v204, 127
        %v225 = vpop.permute.xlu0 %224
        %226 = vrot.lane.b32.xlu0 %v221, 127
        %v227 = vpop.permute.xlu0 %226
        %vm228 = vcmask 1039360
        %v229 = vsel %vm228, %v223, %v225
        %v230 = vsel %vm228, %v225, %v227
        %234 = vrot.lane.b32.xlu0 %v185, 112
        %v235 = vpop.permute.xlu0 %234
        %236 = vrot.lane.b32.xlu0 %v216, 112
        %v237 = vpop.permute.xlu0 %236
        %238 = vrot.lane.b32.xlu0 %v186, 112
        %v239 = vpop.permute.xlu0 %238
        %vm240 = vcmask 916480
        %v241 = vsel %vm240, %v235, %v237
        %v242 = vsel %vm240, %v237, %v239
        %v247 = vcombine.low %v213, %v213
        %v248 = vcombine.low %v214, %v214
        %249 = vrot.lane.b32.xlu0 %v247, 111
        %v250 = vpop.permute.xlu0 %249
        %251 = vrot.lane.b32.xlu0 %v213, 111
        %v252 = vpop.permute.xlu0 %251
        %253 = vrot.lane.b32.xlu0 %v248, 111
        %v254 = vpop.permute.xlu0 %253
        %vm255 = vcmask 908288
        %v256 = vsel %vm255, %v250, %v252
        %v257 = vsel %vm255, %v252, %v254
        %vm260 = vcmask 1043456
        %v261 = vsel %vm260, %v185, %v229
        %v262 = vsel %vm260, %v216, %v230
        %v263 = vsel %vm260, %v241, %v256
        %v264 = vsel %vm260, %v242, %v257
        %v265 = vld [vmem:[%s1] sm:$0xff]
        %v266 = vld [vmem:[%s1 + $0x8] sm:$0xff]
        %v267 = vld [vmem:[%s1 + $0x10] sm:$0xff]
        %v268 = vld [vmem:[%s1 + $0x18] sm:$0xff]
        %vm269 = vcmask 130048
        %v271 = vsel %vm269, %v265, 0
        %v274 = vsel %vm269, %v266, 0
        %v277 = vsel %vm269, %v267, 0
        %v280 = vsel %vm269, %v268, 0
        %282 = vmatprep.subr.mxu0 %v262
        %283 = vmatpush1.msra.mxu0 %v261
        %284 = vmatprep.subr.mxu0 %v264
        %285 = vmatpush1.msra.mxu0 %v263
        %286 = vmatprep.subr.mxu0 0.0
        %287 = vmatpush1.msra.mxu0 0.0
        %288 = vmatprep.subr.mxu0 0.0
        %289 = vmatpush1.msra.mxu0 0.0
        %290 = vmatprep.subr.mxu0 0.0
        %291 = vmatpush1.msra.mxu0 0.0
        %292 = vmatprep.subr.mxu0 0.0
        %293 = vmatpush1.msra.mxu0 0.0
        %294 = vmatprep.subr.mxu0 0.0
        %295 = vmatpush1.msra.mxu0 0.0
        %296 = vmatprep.subr.mxu0 0.0
        %297 = vmatpush1.msra.mxu0 0.0
        %298 = vmatprep.subr.mxu0 0.0
        %299 = vmatpush1.msra.mxu0 0.0
        %300 = vmatprep.subr.mxu0 0.0
        %301 = vmatpush1.msra.mxu0 0.0
        %302 = vmatprep.subr.mxu0 0.0
        %303 = vmatpush1.msra.mxu0 0.0
        %304 = vmatprep.subr.mxu0 0.0
        %305 = vmatpush1.msra.mxu0 0.0
        %306 = vmatprep.subr.mxu0 0.0
        %307 = vmatpush1.msra.mxu0 0.0
        %308 = vmatprep.subr.mxu0 0.0
        %309 = vmatpush1.msra.mxu0 0.0
        %310 = vmatprep.subr.mxu0 0.0
        %311 = vmatpush1.msra.mxu0 0.0
        %312 = vmatprep.subr.mxu0 0.0
        %313 = vmatpush1.msra.mxu0 0.0
        %314 = vmatprep.subr.mxu0 0.0
        %315 = vmatpush1.msra.mxu0 0.0
        %316 = vmatprep.subr.mxu0 0.0
        %317 = vmatpush1.msra.mxu0 0.0
        %318 = vmatprep.subr.mxu0 0.0
        %319 = vmatpush1.msra.mxu0 0.0
        %320 = vmatprep.subr.mxu0 0.0
        %321 = vmatpush1.msra.mxu0 0.0
        %322 = vmatprep.subr.mxu0 0.0
        %323 = vmatpush1.msra.mxu0 0.0
        %324 = vmatprep.subr.mxu0 0.0
        %325 = vmatpush1.msra.mxu0 0.0
        %326 = vmatprep.subr.mxu0 0.0
        %327 = vmatpush1.msra.mxu0 0.0
        %328 = vmatprep.subr.mxu0 0.0
        %329 = vmatpush1.msra.mxu0 0.0
        %330 = vmatprep.subr.mxu0 0.0
        %331 = vmatpush1.msra.mxu0 0.0
        %332 = vmatprep.subr.mxu0 0.0
        %333 = vmatpush1.msra.mxu0 0.0
        %334 = vmatprep.subr.mxu0 0.0
        %335 = vmatpush1.msra.mxu0 0.0
        %336 = vmatprep.subr.mxu0 0.0
        %337 = vmatpush1.msra.mxu0 0.0
        %338 = vmatprep.subr.mxu0 0.0
        %339 = vmatpush1.msra.mxu0 0.0
        %340 = vmatprep.subr.mxu0 0.0
        %341 = vmatpush1.msra.mxu0 0.0
        %342 = vmatprep.subr.mxu0 0.0
        %343 = vmatpush1.msra.mxu0 0.0
        %344 = vmatprep.subr.mxu0 0.0
        %345 = vmatpush1.msra.mxu0 0.0
        %346 = vmatprep.mubr.f32.mxu0 0.0
        %347 = vmatmul.mubr.f32.gmra.mrb[0].mxu0 %v271
        %v348 = vpop.f32.mrb[0].mxu0
        %v349 = vadd.f32 0.0, %v348
        %v350 = vpop.f32.mrb[0].mxu0
        %v351 = vadd.f32 0.0, %v350
        %352 = vmatprep.mubr.f32.mxu0 0.0
        %353 = vmatmul.mubr.f32.gmra.mrb[0].mxu0 %v274
        %v354 = vpop.f32.mrb[0].mxu0
        %v355 = vadd.f32 0.0, %v354
        %v356 = vpop.f32.mrb[0].mxu0
        %v357 = vadd.f32 0.0, %v356
        %358 = vmatprep.mubr.f32.mxu0 0.0
        %359 = vmatmul.mubr.f32.gmra.mrb[0].mxu0 %v277
        %v360 = vpop.f32.mrb[0].mxu0
        %v361 = vadd.f32 0.0, %v360
        %v362 = vpop.f32.mrb[0].mxu0
        %v363 = vadd.f32 0.0, %v362
        %364 = vmatprep.mubr.f32.mxu0 0.0
        %365 = vmatmul.mubr.f32.gmra.mrb[0].mxu0 %v280
        %v366 = vpop.f32.mrb[0].mxu0
        %v367 = vadd.f32 0.0, %v366
        %v368 = vpop.f32.mrb[0].mxu0
        %v369 = vadd.f32 0.0, %v368
        %370 = vdwg.mxu0
        %v371 = vadd.f32 %v349, %v351
        %372 = vadd.xlane.f32.xlu0 %v371
        %v373 = vpop.xlane.xlu0 %372
        %v374 = vadd.f32 %v355, %v357
        %375 = vadd.xlane.f32.xlu0 %v374
        %v376 = vpop.xlane.xlu0 %375
        %v377 = vadd.f32 %v361, %v363
        %378 = vadd.xlane.f32.xlu0 %v377
        %v379 = vpop.xlane.xlu0 %378
        %v380 = vadd.f32 %v367, %v369
        %381 = vadd.xlane.f32.xlu0 %v380
        %v382 = vpop.xlane.xlu0 %381
        %v383 = vmul.f32 %v349, %v349
        %v384 = vmul.f32 %v351, %v351
        %v385 = vmul.f32 %v355, %v355
        %v386 = vmul.f32 %v357, %v357
        %v387 = vmul.f32 %v361, %v361
        %v388 = vmul.f32 %v363, %v363
        %v389 = vmul.f32 %v367, %v367
        %v390 = vmul.f32 %v369, %v369
        %v391 = vadd.f32 %v383, %v384
        %392 = vadd.xlane.f32.xlu0 %v391
        %v393 = vpop.xlane.xlu0 %392
        %v394 = vadd.f32 %v385, %v386
        %395 = vadd.xlane.f32.xlu0 %v394
        %v396 = vpop.xlane.xlu0 %395
        %v397 = vadd.f32 %v387, %v388
        %398 = vadd.xlane.f32.xlu0 %v397
        %v399 = vpop.xlane.xlu0 %398
        %v400 = vadd.f32 %v389, %v390
        %401 = vadd.xlane.f32.xlu0 %v400
        %v402 = vpop.xlane.xlu0 %401
        %v403 = vsel %vm200, %v373, %v393
        %v404 = vsel %vm200, %v376, %v396
        %v405 = vsel %vm200, %v379, %v399
        %v406 = vsel %vm200, %v382, %v402
        %vm407 = vcmask 15360
        %408 = vst.msk [vmem:[%s183] sm:$0xff] %vm407, %v403
        %409 = vst.msk [vmem:[%s183 + $0x8] sm:$0xff] %vm407, %v404
        %410 = vst.msk [vmem:[%s183 + $0x10] sm:$0xff] %vm407, %v405
        %411 = vst.msk [vmem:[%s183 + $0x18] sm:$0xff] %vm407, %v406
        %p412 = scmp.lt.s32.totalorder %s15, 1
        %s413 = scalar_select %p412, %s15, 1
        %s414 = smul.addr %s413, 4
        %s415 = smul.addr %s414, 8
        %s416 = scalar_lea.vmem %s3, %s415
        // Predicated region
        $region37: #{upsample_block_forward.2} parent=31 // pred_check
          %p417 = pneg %p101
        $region38: #{upsample_block_forward.2} parent=31 // pred_check_branch
          %419 = sbr.rel (%p417) target = $region40
        $region39: #{upsample_block_forward.2} parent=31 // pred_region
          _
        $region40: #{upsample_block_forward.2} parent=31 // pred_fallthru
          _
      $region32: #{upsample_block_forward.2} parent=5 // pred_fallthru
        _
      %p420 = scmp.le.s32.totalorder 2, %s10
      // Predicated region
      $region41: #{upsample_block_forward.2} parent=5 // pred_check
        %p421 = pneg %p420
      $region42: #{upsample_block_forward.2} parent=5 // pred_check_branch
        %423 = sbr.rel (%p421) target = $region44
      $region43: #{upsample_block_forward.2} parent=5 // pred_region
        %s424 = ssub.s32 %s10, 2
        // Predicated region
        $region45: #{upsample_block_forward.2} parent=43 // pred_check
          %p425 = pneg %p107
        $region46: #{upsample_block_forward.2} parent=43 // pred_check_branch
          %427 = sbr.rel (%p425) target = $region48
        $region47: #{upsample_block_forward.2} parent=43 // pred_region
          %p428 = scmp.lt.s32.totalorder %s16, 1
          %s429 = scalar_select %p428, %s16, 1
          %s430 = smul.addr %s429, 4
          %s431 = smul.addr %s430, 8
          %s432 = scalar_lea.vmem %s3, %s431
        $region48: #{upsample_block_forward.2} parent=43 // pred_fallthru
          _
      $region44: #{upsample_block_forward.2} parent=5 // pred_fallthru
        _
    $region6: #{upsample_block_forward.2} parent=1 // loop_footer
      %s14 = sadd.s32 1, %s10
    $region7: #{upsample_block_forward.2} parent=1 // loop_footer_branch
      %9 = sbr.rel target = $region3
    $region8: #{upsample_block_forward.2} parent=1 // loop_exit
      _
    %433 = vsyncpa [#allocation3], 1
    %s434 = scalar_lea.sflag [#allocation3], 1
    %435 = vsyncpa %s434, 1

// kernel: upsample_block_forward.3
$region0: #{upsample_block_forward.3}
  #allocation0 [shape = 'u32[]', space=smem, size = 0x4, offset = 0x4, fixed_abs, tag = 'smem constant byte address 0x4 - core index']
  #allocation1 [shape = 'u32[144,128]{1,0:T(1,128)}', space=vmem, size = 0x12000, scoped, tag = 'internal scratch']
  %s0 = inlined_call_operand.vmem [shape: f32[2,4,288], index: 0, kind: input, shape index: {}]
  %s1 = inlined_call_operand.vmem [shape: f32[32,16], index: 1, kind: input, shape index: {}]
  %s2 = inlined_call_operand.hbm [shape: f32[1,256], index: 2, kind: input, shape index: {}]
  %s3 = inlined_call_operand.vmem [shape: f32[32,1], index: 3, kind: input, shape index: {}]
  %s4 = inlined_call_operand.vmem [shape: f32[32,1], index: 4, kind: input, shape index: {}]
  %s5 = inlined_call_operand.hbm [shape: f32[4,256,1024], index: 5, kind: input, shape index: {}]
  %s6 = inlined_call_operand.vmem [shape: f32[2,8,1024], index: 6, kind: output, shape index: {}]
  %s7 = sld [smem:[#allocation0]]
  $region65: #{upsample_block_forward.3} parent=0
    _
  %s9 = ssub.s32 1, %s7
  %s10 = scalar_select 0, %s9, %s7
  $region1: #{upsample_block_forward.3} parent=0
    #allocation2 [shape = 'u8[1024]{0}', space=vmem, size = 0x400, scoped, tag = 'input window, operand 2, single buffered']
    #allocation3 [shape = 's32[2]{0}', space=sflag, size = 0x8, scoped, tag = 'scoped memory for upsample_block_forward.3']
    #allocation4 [shape = 'u8[4194304]{0}', space=vmem, size = 0x400000, scoped, tag = 'input window, operand 5, single buffered']
    #allocation5 [shape = 's32[1]{0}', space=sflag, size = 0x4, scoped, tag = 'scoped memory for upsample_block_forward.3']
    %11 = vsyncpa [#allocation3], 0
    %12 = vsyncpa [#allocation5], 0
    loop: start=0, step=1, limit=4
    $region2: #{upsample_block_forward.3} parent=1 // loop_pre_header
      _
    $region3: #{upsample_block_forward.3} parent=1 // loop_header
      %s14 = sphi 0, %s18
      %p15 = scmp.ge.s32.totalorder %s14, 4
      %s24 = sphi 0, %s26
      %s27 = sphi 0, %s24
      %s28 = sphi 0, %s27
      %s44 = sphi 0, %s28
      %s48 = sphi 0, %s48
      %s50 = sphi 0, %s48
      %s51 = sphi 0, %s50
      %s65 = sphi 0, %s51
      %s69 = sphi 0, %s69
      %s71 = sphi 0, %s69
      %s72 = sphi 0, %s71
      %s86 = sphi 0, %s72
      %s90 = sphi 0, %s90
      %s92 = sphi 0, %s90
      %s93 = sphi 0, %s92
      %s107 = sphi 0, %s93
      %s111 = sphi 0, %s111
      %s113 = sphi 0, %s111
      %s114 = sphi 0, %s113
      %s128 = sphi 0, %s114
      %s132 = sphi 0, %s132
      %s134 = sphi 0, %s132
      %s135 = sphi 0, %s134
      %s149 = sphi 0, %s135
      %s155 = sphi 0, %s157
      %s158 = sphi 0, %s155
      %s159 = sphi 0, %s158
      %s175 = sphi 0, %s159
    $region4: #{upsample_block_forward.3} parent=1 // loop_header_branch
      %17 = sbr.rel (%p15) target = $region8
    $region5: #{upsample_block_forward.3} parent=1 // loop_body
      %s19 = ssub.s32 %s14, 1
      %s20 = ssub.s32 %s14, 2
      %s21 = sadd.s32 %s14, 1
      %s22 = ssub.s32 %s14, %s21
      %p23 = scmp.eq.s32.totalorder %s22, 0
      %s25 = sadd.s32 %s24, 1
      %s26 = scalar_select %p23, %s24, %s25
      %p29 = pneg %p23
      %p30 = scmp.eq.s32.totalorder %s14, 1
      %p31 = por %p29, %p30
      %p32 = scmp.ne.s32.totalorder %s24, %s27
      %p33 = scmp.eq.s32.totalorder %s14, 0
      %p34 = por %p32, %p33
      %p35 = scmp.ne.s32.totalorder %s24, %s27
      %p36 = scmp.eq.s32.totalorder %s19, 1
      %p37 = por %p35, %p36
      %p38 = scmp.ne.s32.totalorder %s27, %s28
      %p39 = scmp.eq.s32.totalorder %s19, 0
      %p40 = por %p38, %p39
      %p41 = scmp.ne.s32.totalorder %s27, %s28
      %p42 = scmp.eq.s32.totalorder %s20, 1
      %p43 = por %p41, %p42
      %p45 = scmp.ne.s32.totalorder %s28, %s44
      %p46 = scmp.eq.s32.totalorder %s20, 0
      %p47 = por %p45, %p46
      %s49 = sadd.s32 %s48, 1
      %p52 = scmp.eq.s32.totalorder %s14, 1
      %p53 = scmp.ne.s32.totalorder %s48, %s50
      %p54 = scmp.eq.s32.totalorder %s14, 0
      %p55 = por %p53, %p54
      %p56 = scmp.ne.s32.totalorder %s48, %s50
      %p57 = scmp.eq.s32.totalorder %s19, 1
      %p58 = por %p56, %p57
      %p59 = scmp.ne.s32.totalorder %s50, %s51
      %p60 = scmp.eq.s32.totalorder %s19, 0
      %p61 = por %p59, %p60
      %p62 = scmp.ne.s32.totalorder %s50, %s51
      %p63 = scmp.eq.s32.totalorder %s20, 1
      %p64 = por %p62, %p63
      %p66 = scmp.ne.s32.totalorder %s51, %s65
      %p67 = scmp.eq.s32.totalorder %s20, 0
      %p68 = por %p66, %p67
      %s70 = sadd.s32 %s69, 1
      %p73 = scmp.eq.s32.totalorder %s14, 1
      %p74 = scmp.ne.s32.totalorder %s69, %s71
      %p75 = scmp.eq.s32.totalorder %s14, 0
      %p76 = por %p74, %p75
      %p77 = scmp.ne.s32.totalorder %s69, %s71
      %p78 = scmp.eq.s32.totalorder %s19, 1
      %p79 = por %p77, %p78
      %p80 = scmp.ne.s32.totalorder %s71, %s72
      %p81 = scmp.eq.s32.totalorder %s19, 0
      %p82 = por %p80, %p81
      %p83 = scmp.ne.s32.totalorder %s71, %s72
      %p84 = scmp.eq.s32.totalorder %s20, 1
      %p85 = por %p83, %p84
      %p87 = scmp.ne.s32.totalorder %s72, %s86
      %p88 = scmp.eq.s32.totalorder %s20, 0
      %p89 = por %p87, %p88
      %s91 = sadd.s32 %s90, 1
      %p94 = scmp.eq.s32.totalorder %s14, 1
      %p95 = scmp.ne.s32.totalorder %s90, %s92
      %p96 = scmp.eq.s32.totalorder %s14, 0
      %p97 = por %p95, %p96
      %p98 = scmp.ne.s32.totalorder %s90, %s92
      %p99 = scmp.eq.s32.totalorder %s19, 1
      %p100 = por %p98, %p99
      %p101 = scmp.ne.s32.totalorder %s92, %s93
      %p102 = scmp.eq.s32.totalorder %s19, 0
      %p103 = por %p101, %p102
      %p104 = scmp.ne.s32.totalorder %s92, %s93
      %p105 = scmp.eq.s32.totalorder %s20, 1
      %p106 = por %p104, %p105
      %p108 = scmp.ne.s32.totalorder %s93, %s107
      %p109 = scmp.eq.s32.totalorder %s20, 0
      %p110 = por %p108, %p109
      %s112 = sadd.s32 %s111, 1
      %p115 = scmp.eq.s32.totalorder %s14, 1
      %p116 = scmp.ne.s32.totalorder %s111, %s113
      %p117 = scmp.eq.s32.totalorder %s14, 0
      %p118 = por %p116, %p117
      %p119 = scmp.ne.s32.totalorder %s111, %s113
      %p120 = scmp.eq.s32.totalorder %s19, 1
      %p121 = por %p119, %p120
      %p122 = scmp.ne.s32.totalorder %s113, %s114
      %p123 = scmp.eq.s32.totalorder %s19, 0
      %p124 = por %p122, %p123
      %p125 = scmp.ne.s32.totalorder %s113, %s114
      %p126 = scmp.eq.s32.totalorder %s20, 1
      %p127 = por %p125, %p126
      %p129 = scmp.ne.s32.totalorder %s114, %s128
      %p130 = scmp.eq.s32.totalorder %s20, 0
      %p131 = por %p129, %p130
      %s133 = sadd.s32 %s132, 1
      %p136 = scmp.eq.s32.totalorder %s14, 1
      %p137 = scmp.ne.s32.totalorder %s132, %s134
      %p138 = scmp.eq.s32.totalorder %s14, 0
      %p139 = por %p137, %p138
      %p140 = scmp.ne.s32.totalorder %s132, %s134
      %p141 = scmp.eq.s32.totalorder %s19, 1
      %p142 = por %p140, %p141
      %p143 = scmp.ne.s32.totalorder %s134, %s135
      %p144 = scmp.eq.s32.totalorder %s19, 0
      %p145 = por %p143, %p144
      %p146 = scmp.ne.s32.totalorder %s134, %s135
      %p147 = scmp.eq.s32.totalorder %s20, 1
      %p148 = por %p146, %p147
      %p150 = scmp.ne.s32.totalorder %s135, %s149
      %p151 = scmp.eq.s32.totalorder %s20, 0
      %p152 = por %p150, %p151
      %s153 = ssub.s32 %s14, %s21
      %p154 = scmp.eq.s32.totalorder %s153, 0
      %s156 = sadd.s32 %s155, 1
      %s157 = scalar_select %p154, %s155, %s156
      %p160 = pneg %p154
      %p161 = scmp.eq.s32.totalorder %s14, 1
      %p162 = por %p160, %p161
      %p163 = scmp.ne.s32.totalorder %s155, %s158
      %p164 = scmp.eq.s32.totalorder %s14, 0
      %p165 = por %p163, %p164
      %p166 = scmp.ne.s32.totalorder %s155, %s158
      %p167 = scmp.eq.s32.totalorder %s19, 1
      %p168 = por %p166, %p167
      %p169 = scmp.ne.s32.totalorder %s158, %s159
      %p170 = scmp.eq.s32.totalorder %s19, 0
      %p171 = por %p169, %p170
      %p172 = scmp.ne.s32.totalorder %s158, %s159
      %p173 = scmp.eq.s32.totalorder %s20, 1
      %p174 = por %p172, %p173
      %p176 = scmp.ne.s32.totalorder %s159, %s175
      %p177 = scmp.eq.s32.totalorder %s20, 0
      %p178 = por %p176, %p177
      %p179 = scmp.le.s32.totalorder 1, %s14
      %p180 = scmp.lt.s32.totalorder %s14, 3
      %p181 = pnand %p179, %p180
      %p182 = pneg %p181
      // Predicated region
      $region9: #{upsample_block_forward.3} parent=5 // pred_check
        _
      $region10: #{upsample_block_forward.3} parent=5 // pred_check_branch
        %184 = sbr.rel (%p181) target = $region12
      $region11: #{upsample_block_forward.3} parent=5 // pred_region
        %s185 = ssub.s32 %s14, 1
        // Predicated region
        $region13: #{upsample_block_forward.3} parent=11 // pred_check
          %p186 = pneg %p61
        $region14: #{upsample_block_forward.3} parent=11 // pred_check_branch
          %188 = sbr.rel (%p186) target = $region16
        $region15: #{upsample_block_forward.3} parent=11 // pred_region
          _
        $region16: #{upsample_block_forward.3} parent=11 // pred_fallthru
          _
        // Predicated region
        $region17: #{upsample_block_forward.3} parent=11 // pred_check
          %p189 = pneg %p82
        $region18: #{upsample_block_forward.3} parent=11 // pred_check_branch
          %191 = sbr.rel (%p189) target = $region20
        $region19: #{upsample_block_forward.3} parent=11 // pred_region
          %s193 = ssub.s32 32, 32
          %194 = vsyncadd [#allocation3], %s193
          %s196 = sshll.u32 [#allocation2], 4
          %s197 = int_to_ptr.vmem [resolvable:$true] %s196
          %199 = dma.hbm_to_vmem [thread:$0]  %s2, 32, %s197, [#allocation3]
        $region20: #{upsample_block_forward.3} parent=11 // pred_fallthru
          _
        // Predicated region
        $region21: #{upsample_block_forward.3} parent=11 // pred_check
          %p200 = pneg %p103
        $region22: #{upsample_block_forward.3} parent=11 // pred_check_branch
          %202 = sbr.rel (%p200) target = $region24
        $region23: #{upsample_block_forward.3} parent=11 // pred_region
          _
        $region24: #{upsample_block_forward.3} parent=11 // pred_fallthru
          _
        // Predicated region
        $region25: #{upsample_block_forward.3} parent=11 // pred_check
          %p203 = pneg %p124
        $region26: #{upsample_block_forward.3} parent=11 // pred_check_branch
          %205 = sbr.rel (%p203) target = $region28
        $region27: #{upsample_block_forward.3} parent=11 // pred_region
          _
        $region28: #{upsample_block_forward.3} parent=11 // pred_fallthru
          _
        // Predicated region
        $region29: #{upsample_block_forward.3} parent=11 // pred_check
          %p206 = pneg %p145
        $region30: #{upsample_block_forward.3} parent=11 // pred_check_branch
          %208 = sbr.rel (%p206) target = $region32
        $region31: #{upsample_block_forward.3} parent=11 // pred_region
          %s210 = ssub.s32 131072, 131072
          %211 = vsyncadd [#allocation5], %s210
          %s212 = sshll.u32 [#allocation4], 4
          %s213 = int_to_ptr.vmem [resolvable:$true] %s212
          %218 = dma.hbm_to_vmem [thread:$0]  %s5, 131072, %s213, [#allocation5], 1024, 1024, 64
        $region32: #{upsample_block_forward.3} parent=11 // pred_fallthru
          _
      $region12: #{upsample_block_forward.3} parent=5 // pred_fallthru
        _
      %p219 = scmp.lt.s32.totalorder %s14, 2
      // Predicated region
      $region33: #{upsample_block_forward.3} parent=5 // pred_check
        %p220 = pneg %p219
      $region34: #{upsample_block_forward.3} parent=5 // pred_check_branch
        %222 = sbr.rel (%p220) target = $region36
      $region35: #{upsample_block_forward.3} parent=5 // pred_region
        // Predicated region
        $region37: #{upsample_block_forward.3} parent=35 // pred_check
          %p223 = pneg %p34
        $region38: #{upsample_block_forward.3} parent=35 // pred_check_branch
          %225 = sbr.rel (%p223) target = $region40
        $region39: #{upsample_block_forward.3} parent=35 // pred_region
          %p226 = scmp.lt.s32.totalorder %s14, 1
          %s227 = scalar_select %p226, %s14, 1
          %s228 = smul.addr %s227, 3
          %s229 = smul.addr %s228, 4
          %s230 = scalar_lea.vmem %s0, %s229
        $region40: #{upsample_block_forward.3} parent=35 // pred_fallthru
          _
      $region36: #{upsample_block_forward.3} parent=5 // pred_fallthru
        _
      %p231 = scmp.le.s32.totalorder 1, %s14
      %p232 = scmp.lt.s32.totalorder %s14, 3
      %p233 = pnand %p231, %p232
      %p234 = pneg %p233
      // Predicated region
      $region41: #{upsample_block_forward.3} parent=5 // pred_check
        _
      $region42: #{upsample_block_forward.3} parent=5 // pred_check_branch
        %236 = sbr.rel (%p233) target = $region44
      $region43: #{upsample_block_forward.3} parent=5 // pred_region
        %s237 = ssub.s32 %s14, 1
        // Predicated region
        $region45: #{upsample_block_forward.3} parent=43 // pred_check
          %p238 = pneg %p82
        $region46: #{upsample_block_forward.3} parent=43 // pred_check_branch
          %240 = sbr.rel (%p238) target = $region48
        $region47: #{upsample_block_forward.3} parent=43 // pred_region
          %241 = dma.done [#allocation3], 32
        $region48: #{upsample_block_forward.3} parent=43 // pred_fallthru
          _
        // Predicated region
        $region49: #{upsample_block_forward.3} parent=43 // pred_check
          %p242 = pneg %p145
        $region50: #{upsample_block_forward.3} parent=43 // pred_check_branch
          %244 = sbr.rel (%p242) target = $region52
        $region51: #{upsample_block_forward.3} parent=43 // pred_region
          %245 = dma.done [#allocation5], 131072
        $region52: #{upsample_block_forward.3} parent=43 // pred_fallthru
          _
        %p246 = scmp.lt.s32.totalorder %s19, 1
        %s247 = scalar_select %p246, %s19, 1
        %s248 = smul.addr %s247, 3
        %s249 = smul.addr %s248, 4
        %s250 = scalar_lea.vmem %s0, %s249
        %p251 = pneg %p40
        %p252 = pneg %p37
        %p253 = pneg %p61
        %p254 = pneg %p58
        %p255 = pneg %p82
        %p256 = pneg %p79
        %p257 = pneg %p103
        %p258 = pneg %p100
        %p259 = pneg %p124
        %p260 = pneg %p121
        %p261 = pneg %p145
        %p262 = pneg %p142
        %p263 = pneg %p171
        %p264 = pneg %p168
        %p265 = scmp.lt.s32.totalorder %s19, 1
        %s266 = scalar_select %p265, %s19, 1
        %s267 = smul.addr %s266, 8
        %s268 = smul.addr %s267, 8
        %s269 = scalar_lea.vmem %s6, %s268
        %p270 = scmp.lt.s32.totalorder %s19, 1
        %s271 = scalar_select %p270, %s19, 1
        %s272 = smul.addr %s271, 3
        %s273 = smul.addr %s272, 4
        %s274 = scalar_lea.vmem %s0, %s273
        %p275 = scmp.lt.s32.totalorder %s19, 1
        %s276 = scalar_select %p275, %s19, 1
        %s277 = smul.addr %s276, 8
        %s278 = smul.addr %s277, 8
        %s279 = scalar_lea.vmem %s6, %s278
        %v280 = vld [vmem:[#allocation2] sm:$0x3]
        %v281 = vld [vmem:[%s274] sm:$0xff]
        %v282 = vld [vmem:[%s274 + $0x8] sm:$0xf]
        %v284 = vlaneseq
        %v285 = vshrl.u32 %v284, 7
        %v286 = vsub.s32 0, %v285
        %v287 = vrot.slane %v280, %v286
        %v288 = vlaneseq
        %v289 = vshrl.u32 %v288, 7
        %v290 = vsub.s32 1, %v289
        %v291 = vrot.slane %v280, %v290
        %v292 = vcombine.low %v287, %v291
        %293 = vrot.lane.b32.xlu0 %v292, 1
        %v294 = vpop.permute.xlu0 %293
        %v295 = vrot.slane %v294, 4
        %vm296 = vcmask 7168
        %v297 = vsel %vm296, %v295, %v294
        %v300 = vmul.f32 %v281, %v297
        %v301 = vmul.f32 %v282, %v295
        %302 = vrot.lane.b32.xlu0 %v292, 17
        %v303 = vpop.permute.xlu0 %302
        %v304 = vrot.slane %v303, 4
        %vm305 = vcmask 138240
        %v306 = vsel %vm305, %v304, %v303
        %v309 = vmul.f32 %v281, %v306
        %v310 = vmul.f32 %v282, %v304
        %v312 = vcombine.high %v281, %v281
        %v316 = vcombine.low %v300, %v300
        %v317 = vcombine.low %v301, %v301
        %318 = vrot.lane.b32.xlu0 %v316, 127
        %v319 = vpop.permute.xlu0 %318
        %320 = vrot.lane.b32.xlu0 %v300, 127
        %v321 = vpop.permute.xlu0 %320
        %322 = vrot.lane.b32.xlu0 %v317, 127
        %v323 = vpop.permute.xlu0 %322
        %vm324 = vcmask 1039360
        %v325 = vsel %vm324, %v319, %v321
        %v326 = vsel %vm324, %v321, %v323
        %330 = vrot.lane.b32.xlu0 %v281, 112
        %v331 = vpop.permute.xlu0 %330
        %332 = vrot.lane.b32.xlu0 %v312, 112
        %v333 = vpop.permute.xlu0 %332
        %334 = vrot.lane.b32.xlu0 %v282, 112
        %v335 = vpop.permute.xlu0 %334
        %vm336 = vcmask 916480
        %v337 = vsel %vm336, %v331, %v333
        %v338 = vsel %vm336, %v333, %v335
        %v343 = vcombine.low %v309, %v309
        %v344 = vcombine.low %v310, %v310
        %345 = vrot.lane.b32.xlu0 %v343, 111
        %v346 = vpop.permute.xlu0 %345
        %347 = vrot.lane.b32.xlu0 %v309, 111
        %v348 = vpop.permute.xlu0 %347
        %349 = vrot.lane.b32.xlu0 %v344, 111
        %v350 = vpop.permute.xlu0 %349
        %vm351 = vcmask 908288
        %v352 = vsel %vm351, %v346, %v348
        %v353 = vsel %vm351, %v348, %v350
        %vm356 = vcmask 1043456
        %v357 = vsel %vm356, %v281, %v325
        %v358 = vsel %vm356, %v312, %v326
        %v359 = vsel %vm356, %v337, %v352
        %v360 = vsel %vm356, %v338, %v353
        %v361 = vld [vmem:[%s1] sm:$0xff]
        %v362 = vld [vmem:[%s1 + $0x8] sm:$0xff]
        %v363 = vld [vmem:[%s1 + $0x10] sm:$0xff]
        %v364 = vld [vmem:[%s1 + $0x18] sm:$0xff]
        %vm365 = vcmask 130048
        %v367 = vsel %vm365, %v361, 0
        %v370 = vsel %vm365, %v362, 0
        %v373 = vsel %vm365, %v363, 0
        %v376 = vsel %vm365, %v364, 0
        %378 = vmatprep.subr.mxu0 %v358
        %379 = vmatpush1.msra.mxu0 %v357
        %380 = vmatprep.subr.mxu0 %v360
        %381 = vmatpush1.msra.mxu0 %v359
        %382 = vmatprep.subr.mxu0 0.0
        %383 = vmatpush1.msra.mxu0 0.0
        %384 = vmatprep.subr.mxu0 0.0
        %385 = vmatpush1.msra.mxu0 0.0
        %386 = vmatprep.subr.mxu0 0.0
        %387 = vmatpush1.msra.mxu0 0.0
        %388 = vmatprep.subr.mxu0 0.0
        %389 = vmatpush1.msra.mxu0 0.0
        %390 = vmatprep.subr.mxu0 0.0
        %391 = vmatpush1.msra.mxu0 0.0
        %392 = vmatprep.subr.mxu0 0.0
        %393 = vmatpush1.msra.mxu0 0.0
        %394 = vmatprep.subr.mxu0 0.0
        %395 = vmatpush1.msra.mxu0 0.0
        %396 = vmatprep.subr.mxu0 0.0
        %397 = vmatpush1.msra.mxu0 0.0
        %398 = vmatprep.subr.mxu0 0.0
        %399 = vmatpush1.msra.mxu0 0.0
        %400 = vmatprep.subr.mxu0 0.0
        %401 = vmatpush1.msra.mxu0 0.0
        %402 = vmatprep.subr.mxu0 0.0
        %403 = vmatpush1.msra.mxu0 0.0
        %404 = vmatprep.subr.mxu0 0.0
        %405 = vmatpush1.msra.mxu0 0.0
        %406 = vmatprep.subr.mxu0 0.0
        %407 = vmatpush1.msra.mxu0 0.0
        %408 = vmatprep.subr.mxu0 0.0
        %409 = vmatpush1.msra.mxu0 0.0
        %410 = vmatprep.subr.mxu0 0.0
        %411 = vmatpush1.msra.mxu0 0.0
        %412 = vmatprep.subr.mxu0 0.0
        %413 = vmatpush1.msra.mxu0 0.0
        %414 = vmatprep.subr.mxu0 0.0
        %415 = vmatpush1.msra.mxu0 0.0
        %416 = vmatprep.subr.mxu0 0.0
        %417 = vmatpush1.msra.mxu0 0.0
        %418 = vmatprep.subr.mxu0 0.0
        %419 = vmatpush1.msra.mxu0 0.0
        %420 = vmatprep.subr.mxu0 0.0
        %421 = vmatpush1.msra.mxu0 0.0
        %422 = vmatprep.subr.mxu0 0.0
        %423 = vmatpush1.msra.mxu0 0.0
        %424 = vmatprep.subr.mxu0 0.0
        %425 = vmatpush1.msra.mxu0 0.0
        %426 = vmatprep.subr.mxu0 0.0
        %427 = vmatpush1.msra.mxu0 0.0
        %428 = vmatprep.subr.mxu0 0.0
        %429 = vmatpush1.msra.mxu0 0.0
        %430 = vmatprep.subr.mxu0 0.0
        %431 = vmatpush1.msra.mxu0 0.0
        %432 = vmatprep.subr.mxu0 0.0
        %433 = vmatpush1.msra.mxu0 0.0
        %434 = vmatprep.subr.mxu0 0.0
        %435 = vmatpush1.msra.mxu0 0.0
        %436 = vmatprep.subr.mxu0 0.0
        %437 = vmatpush1.msra.mxu0 0.0
        %438 = vmatprep.subr.mxu0 0.0
        %439 = vmatpush1.msra.mxu0 0.0
        %440 = vmatprep.subr.mxu0 0.0
        %441 = vmatpush1.msra.mxu0 0.0
        %442 = vmatprep.mubr.f32.mxu0 0.0
        %443 = vmatmul.mubr.f32.gmra.mrb[0].mxu0 %v367
        %v444 = vpop.f32.mrb[0].mxu0
        %v445 = vadd.f32 0.0, %v444
        %v446 = vpop.f32.mrb[0].mxu0
        %v447 = vadd.f32 0.0, %v446
        %448 = vmatprep.mubr.f32.mxu0 0.0
        %449 = vmatmul.mubr.f32.gmra.mrb[0].mxu0 %v370
        %v450 = vpop.f32.mrb[0].mxu0
        %v451 = vadd.f32 0.0, %v450
        %v452 = vpop.f32.mrb[0].mxu0
        %v453 = vadd.f32 0.0, %v452
        %454 = vmatprep.mubr.f32.mxu0 0.0
        %455 = vmatmul.mubr.f32.gmra.mrb[0].mxu0 %v373
        %v456 = vpop.f32.mrb[0].mxu0
        %v457 = vadd.f32 0.0, %v456
        %v458 = vpop.f32.mrb[0].mxu0
        %v459 = vadd.f32 0.0, %v458
        %460 = vmatprep.mubr.f32.mxu0 0.0
        %461 = vmatmul.mubr.f32.gmra.mrb[0].mxu0 %v376
        %v462 = vpop.f32.mrb[0].mxu0
        %v463 = vadd.f32 0.0, %v462
        %v464 = vpop.f32.mrb[0].mxu0
        %v465 = vadd.f32 0.0, %v464
        %466 = vdwg.mxu0
        %v467 = vld [vmem:[%s3] sm:$0xff]
        %v468 = vld [vmem:[%s3 + $0x8] sm:$0xff]
        %v469 = vld [vmem:[%s3 + $0x10] sm:$0xff]
        %v470 = vld [vmem:[%s3 + $0x18] sm:$0xff]
        %472 = vset.pattern.permute.xlu0 0
        %473 = vperm.xlu0 %472, %v467
        %v474 = vpop.permute.xlu0 %473
        %477 = vset.pattern.permute.xlu0 0
        %478 = vperm.xlu0 %477, %v468
        %v479 = vpop.permute.xlu0 %478
        %482 = vset.pattern.permute.xlu0 0
        %483 = vperm.xlu0 %482, %v469
        %v484 = vpop.permute.xlu0 %483
        %487 = vset.pattern.permute.xlu0 0
        %488 = vperm.xlu0 %487, %v470
        %v489 = vpop.permute.xlu0 %488
        %v491 = vmul.f32 %v445, %v474
        %v492 = vmul.f32 %v447, %v474
        %v493 = vmul.f32 %v451, %v479
        %v494 = vmul.f32 %v453, %v479
        %v495 = vmul.f32 %v457, %v484
        %v496 = vmul.f32 %v459, %v484
        %v497 = vmul.f32 %v463, %v489
        %v498 = vmul.f32 %v465, %v489
        %v499 = vld [vmem:[%s4] sm:$0xff]
        %v500 = vld [vmem:[%s4 + $0x8] sm:$0xff]
        %v501 = vld [vmem:[%s4 + $0x10] sm:$0xff]
        %v502 = vld [vmem:[%s4 + $0x18] sm:$0xff]
        %504 = vset.pattern.permute.xlu0 0
        %505 = vperm.xlu0 %504, %v499
        %v506 = vpop.permute.xlu0 %505
        %509 = vset.pattern.permute.xlu0 0
        %510 = vperm.xlu0 %509, %v500
        %v511 = vpop.permute.xlu0 %510
        %514 = vset.pattern.permute.xlu0 0
        %515 = vperm.xlu0 %514, %v501
        %v516 = vpop.permute.xlu0 %515
        %519 = vset.pattern.permute.xlu0 0
        %520 = vperm.xlu0 %519, %v502
        %v521 = vpop.permute.xlu0 %520
        %v523 = vadd.f32 %v491, %v506
        %v524 = vadd.f32 %v492, %v506
        %v525 = vadd.f32 %v493, %v511
        %v526 = vadd.f32 %v494, %v511
        %v527 = vadd.f32 %v495, %v516
        %v528 = vadd.f32 %v496, %v516
        %v529 = vadd.f32 %v497, %v521
        %v530 = vadd.f32 %v498, %v521
        %v531 = vxor.u32 %v523, 2147483648
        %v532 = vxor.u32 %v524, 2147483648
        %v533 = vxor.u32 %v525, 2147483648
        %v534 = vxor.u32 %v526, 2147483648
        %v535 = vxor.u32 %v527, 2147483648
        %v536 = vxor.u32 %v528, 2147483648
        %v537 = vxor.u32 %v529, 2147483648
        %v538 = vxor.u32 %v530, 2147483648
        %v539 = vmul.f32 %v531, 1.442695
        %v540 = vpow.pop %v539
        %v541 = vmul.f32 %v532, 1.442695
        %v542 = vpow.pop %v541
        %v543 = vmul.f32 %v533, 1.442695
        %v544 = vpow.pop %v543
        %v545 = vmul.f32 %v534, 1.442695
        %v546 = vpow.pop %v545
        %v547 = vmul.f32 %v535, 1.442695
        %v548 = vpow.pop %v547
        %v549 = vmul.f32 %v536, 1.442695
        %v550 = vpow.pop %v549
        %v551 = vmul.f32 %v537, 1.442695
        %v552 = vpow.pop %v551
        %v553 = vmul.f32 %v538, 1.442695
        %v554 = vpow.pop %v553
        %v555 = vadd.f32 %v540, 1.0
        %v556 = vadd.f32 %v542, 1.0
        %v557 = vadd.f32 %v544, 1.0
        %v558 = vadd.f32 %v546, 1.0
        %v559 = vadd.f32 %v548, 1.0
        %v560 = vadd.f32 %v550, 1.0
        %v561 = vadd.f32 %v552, 1.0
        %v562 = vadd.f32 %v554, 1.0
        %v563 = vrcp.pop %v555
        %v564 = vmul.f32 1.0, %v563
        %v565 = vrcp.pop %v556
        %v566 = vmul.f32 1.0, %v565
        %v567 = vrcp.pop %v557
        %v568 = vmul.f32 1.0, %v567
        %v569 = vrcp.pop %v558
        %v570 = vmul.f32 1.0, %v569
        %v571 = vrcp.pop %v559
        %v572 = vmul.f32 1.0, %v571
        %v573 = vrcp.pop %v560
        %v574 = vmul.f32 1.0, %v573
        %v575 = vrcp.pop %v561
        %v576 = vmul.f32 1.0, %v575
        %v577 = vrcp.pop %v562
        %v578 = vmul.f32 1.0, %v577
        %v579 = vmul.f32 %v523, %v564
        %v580 = vmul.f32 %v524, %v566
        %v581 = vmul.f32 %v525, %v568
        %v582 = vmul.f32 %v526, %v570
        %v583 = vmul.f32 %v527, %v572
        %v584 = vmul.f32 %v528, %v574
        %v585 = vmul.f32 %v529, %v576
        %v586 = vmul.f32 %v530, %v578
        %v587 = vld [vmem:[#allocation4] sm:$0xff]
        %v588 = vld [vmem:[#allocation4 + $0x8] sm:$0xff]
        %v589 = vld [vmem:[#allocation4 + $0x10] sm:$0xff]
        %v590 = vld [vmem:[#allocation4 + $0x18] sm:$0xff]
        %v591 = vld [vmem:[#allocation4 + $0x20] sm:$0xff]
        %v592 = vld [vmem:[#allocation4 + $0x28] sm:$0xff]
        %v593 = vld [vmem:[#allocation4 + $0x30] sm:$0xff]
        %v594 = vld [vmem:[#allocation4 + $0x38] sm:$0xff]
        %v595 = vld [vmem:[#allocation4 + $0x40] sm:$0xff]
        %v596 = vld [vmem:[#allocation4 + $0x48] sm:$0xff]
        %v597 = vld [vmem:[#allocation4 + $0x50] sm:$0xff]
        %v598 = vld [vmem:[#allocation4 + $0x58] sm:$0xff]
        %v599 = vld [vmem:[#allocation4 + $0x60] sm:$0xff]
        %v600 = vld [vmem:[#allocation4 + $0x68] sm:$0xff]
        %v601 = vld [vmem:[#allocation4 + $0x70] sm:$0xff]
        %v602 = vld [vmem:[#allocation4 + $0x78] sm:$0xff]
        %v603 = vld [vmem:[#allocation4 + $0x80] sm:$0xff]
        %v604 = vld [vmem:[#allocation4 + $0x88] sm:$0xff]
        %v605 = vld [vmem:[#allocation4 + $0x90] sm:$0xff]
        %v606 = vld [vmem:[#allocation4 + $0x98] sm:$0xff]
        %v607 = vld [vmem:[#allocation4 + $0xa0] sm:$0xff]
        %v608 = vld [vmem:[#allocation4 + $0xa8] sm:$0xff]
        %v609 = vld [vmem:[#allocation4 + $0xb0] sm:$0xff]
        %v610 = vld [vmem:[#allocation4 + $0xb8] sm:$0xff]
        %v611 = vld [vmem:[#allocation4 + $0xc0] sm:$0xff]
        %v612 = vld [vmem:[#allocation4 + $0xc8] sm:$0xff]
        %v613 = vld [vmem:[#allocation4 + $0xd0] sm:$0xff]
        %v614 = vld [vmem:[#allocation4 + $0xd8] sm:$0xff]
        %v615 = vld [vmem:[#allocation4 + $0xe0] sm:$0xff]
        %v616 = vld [vmem:[#allocation4 + $0xe8] sm:$0xff]
        %v617 = vld [vmem:[#allocation4 + $0xf0] sm:$0xff]
        %v618 = vld [vmem:[#allocation4 + $0xf8] sm:$0xff]
        %v619 = vld [vmem:[#allocation4 + $0x100] sm:$0xff]
        %v620 = vld [vmem:[#allocation4 + $0x108] sm:$0xff]
        %v621 = vld [vmem:[#allocation4 + $0x110] sm:$0xff]
        %v622 = vld [vmem:[#allocation4 + $0x118] sm:$0xff]
        %v623 = vld [vmem:[#allocation4 + $0x120] sm:$0xff]
        %v624 = vld [vmem:[#allocation4 + $0x128] sm:$0xff]
        %v625 = vld [vmem:[#allocation4 + $0x130] sm:$0xff]
        %v626 = vld [vmem:[#allocation4 + $0x138] sm:$0xff]
        %v627 = vld [vmem:[#allocation4 + $0x140] sm:$0xff]
        %v628 = vld [vmem:[#allocation4 + $0x148] sm:$0xff]
        %v629 = vld [vmem:[#allocation4 + $0x150] sm:$0xff]
        %v630 = vld [vmem:[#allocation4 + $0x158] sm:$0xff]
        %v631 = vld [vmem:[#allocation4 + $0x160] sm:$0xff]
        %v632 = vld [vmem:[#allocation4 + $0x168] sm:$0xff]
        %v633 = vld [vmem:[#allocation4 + $0x170] sm:$0xff]
        %v634 = vld [vmem:[#allocation4 + $0x178] sm:$0xff]
        %v635 = vld [vmem:[#allocation4 + $0x180] sm:$0xff]
        %v636 = vld [vmem:[#allocation4 + $0x188] sm:$0xff]
        %v637 = vld [vmem:[#allocation4 + $0x190] sm:$0xff]
        %v638 = vld [vmem:[#allocation4 + $0x198] sm:$0xff]
        %v639 = vld [vmem:[#allocation4 + $0x1a0] sm:$0xff]
        %v640 = vld [vmem:[#allocation4 + $0x1a8] sm:$0xff]
        %v641 = vld [vmem:[#allocation4 + $0x1b0] sm:$0xff]
        %v642 = vld [vmem:[#allocation4 + $0x1b8] sm:$0xff]
        %v643 = vld [vmem:[#allocation4 + $0x1c0] sm:$0xff]
        %v644 = vld [vmem:[#allocation4 + $0x1c8] sm:$0xff]
        %v645 = vld [vmem:[#allocation4 + $0x1d0] sm:$0xff]
        %v646 = vld [vmem:[#allocation4 + $0x1d8] sm:$0xff]
        %v647 = vld [vmem:[#allocation4 + $0x1e0] sm:$0xff]
        %v648 = vld [vmem:[#allocation4 + $0x1e8] sm:$0xff]
        %v649 = vld [vmem:[#allocation4 + $0x1f0] sm:$0xff]
        %v650 = vld [vmem:[#allocation4 + $0x1f8] sm:$0xff]
        %v651 = vld [vmem:[#allocation4 + $0x200] sm:$0xff]
        %v652 = vld [vmem:[#allocation4 + $0x208] sm:$0xff]
        %v653 = vld [vmem:[#allocation4 + $0x210] sm:$0xff]
        %v654 = vld [vmem:[#allocation4 + $0x218] sm:$0xff]
        %v655 = vld [vmem:[#allocation4 + $0x220] sm:$0xff]
        %v656 = vld [vmem:[#allocation4 + $0x228] sm:$0xff]
        %v657 = vld [vmem:[#allocation4 + $0x230] sm:$0xff]
        %v658 = vld [vmem:[#allocation4 + $0x238] sm:$0xff]
        %v659 = vld [vmem:[#allocation4 + $0x240] sm:$0xff]
        %v660 = vld [vmem:[#allocation4 + $0x248] sm:$0xff]
        %v661 = vld [vmem:[#allocation4 + $0x250] sm:$0xff]
        %v662 = vld [vmem:[#allocation4 + $0x258] sm:$0xff]
        %v663 = vld [vmem:[#allocation4 + $0x260] sm:$0xff]
        %v664 = vld [vmem:[#allocation4 + $0x268] sm:$0xff]
        %v665 = vld [vmem:[#allocation4 + $0x270] sm:$0xff]
        %v666 = vld [vmem:[#allocation4 + $0x278] sm:$0xff]
        %v667 = vld [vmem:[#allocation4 + $0x280] sm:$0xff]
        %v668 = vld [vmem:[#allocation4 + $0x288] sm:$0xff]
        %v669 = vld [vmem:[#allocation4 + $0x290] sm:$0xff]
        %v670 = vld [vmem:[#allocation4 + $0x298] sm:$0xff]
        %v671 = vld [vmem:[#allocation4 + $0x2a0] sm:$0xff]
        %v672 = vld [vmem:[#allocation4 + $0x2a8] sm:$0xff]
        %v673 = vld [vmem:[#allocation4 + $0x2b0] sm:$0xff]
        %v674 = vld [vmem:[#allocation4 + $0x2b8] sm:$0xff]
        %v675 = vld [vmem:[#allocation4 + $0x2c0] sm:$0xff]
        %v676 = vld [vmem:[#allocation4 + $0x2c8] sm:$0xff]
        %v677 = vld [vmem:[#allocation4 + $0x2d0] sm:$0xff]
        %v678 = vld [vmem:[#allocation4 + $0x2d8] sm:$0xff]
        %v679 = vld [vmem:[#allocation4 + $0x2e0] sm:$0xff]
        %v680 = vld [vmem:[#allocation4 + $0x2e8] sm:$0xff]
        %v681 = vld [vmem:[#allocation4 + $0x2f0] sm:$0xff]
        %v682 = vld [vmem:[#allocation4 + $0x2f8] sm:$0xff]
        %v683 = vld [vmem:[#allocation4 + $0x300] sm:$0xff]
        %v684 = vld [vmem:[#allocation4 + $0x308] sm:$0xff]
        %v685 = vld [vmem:[#allocation4 + $0x310] sm:$0xff]
        %v686 = vld [vmem:[#allocation4 + $0x318] sm:$0xff]
        %v687 = vld [vmem:[#allocation4 + $0x320] sm:$0xff]
        %v688 = vld [vmem:[#allocation4 + $0x328] sm:$0xff]
        %v689 = vld [vmem:[#allocation4 + $0x330] sm:$0xff]
        %v690 = vld [vmem:[#allocation4 + $0x338] sm:$0xff]
        %v691 = vld [vmem:[#allocation4 + $0x340] sm:$0xff]
        %v692 = vld [vmem:[#allocation4 + $0x348] sm:$0xff]
        %v693 = vld [vmem:[#allocation4 + $0x350] sm:$0xff]
        %v694 = vld [vmem:[#allocation4 + $0x358] sm:$0xff]
        %v695 = vld [vmem:[#allocation4 + $0x360] sm:$0xff]
        %v696 = vld [vmem:[#allocation4 + $0x368] sm:$0xff]
        %v697 = vld [vmem:[#allocation4 + $0x370] sm:$0xff]
        %v698 = vld [vmem:[#allocation4 + $0x378] sm:$0xff]
        %v699 = vld [vmem:[#allocation4 + $0x380] sm:$0xff]
        %v700 = vld [vmem:[#allocation4 + $0x388] sm:$0xff]
        %v701 = vld [vmem:[#allocation4 + $0x390] sm:$0xff]
        %v702 = vld [vmem:[#allocation4 + $0x398] sm:$0xff]
        %v703 = vld [vmem:[#allocation4 + $0x3a0] sm:$0xff]
        %v704 = vld [vmem:[#allocation4 + $0x3a8] sm:$0xff]
        %v705 = vld [vmem:[#allocation4 + $0x3b0] sm:$0xff]
        %v706 = vld [vmem:[#allocation4 + $0x3b8] sm:$0xff]
        %v707 = vld [vmem:[#allocation4 + $0x3c0] sm:$0xff]
        %v708 = vld [vmem:[#allocation4 + $0x3c8] sm:$0xff]
        %v709 = vld [vmem:[#allocation4 + $0x3d0] sm:$0xff]
        %v710 = vld [vmem:[#allocation4 + $0x3d8] sm:$0xff]
        %v711 = vld [vmem:[#allocation4 + $0x3e0] sm:$0xff]
        %v712 = vld [vmem:[#allocation4 + $0x3e8] sm:$0xff]
        %v713 = vld [vmem:[#allocation4 + $0x3f0] sm:$0xff]
        %v714 = vld [vmem:[#allocation4 + $0x3f8] sm:$0xff]
        %v715 = vld [vmem:[#allocation4 + $0x400] sm:$0xff]
        %v716 = vld [vmem:[#allocation4 + $0x408] sm:$0xff]
        %v717 = vld [vmem:[#allocation4 + $0x410] sm:$0xff]
        %v718 = vld [vmem:[#allocation4 + $0x418] sm:$0xff]
        %v719 = vld [vmem:[#allocation4 + $0x420] sm:$0xff]
        %v720 = vld [vmem:[#allocation4 + $0x428] sm:$0xff]
        %v721 = vld [vmem:[#allocation4 + $0x430] sm:$0xff]
        %v722 = vld [vmem:[#allocation4 + $0x438] sm:$0xff]
        %v723 = vld [vmem:[#allocation4 + $0x440] sm:$0xff]
        %v724 = vld [vmem:[#allocation4 + $0x448] sm:$0xff]
        %v725 = vld [vmem:[#allocation4 + $0x450] sm:$0xff]
        %v726 = vld [vmem:[#allocation4 + $0x458] sm:$0xff]
        %v727 = vld [vmem:[#allocation4 + $0x460] sm:$0xff]
        %v728 = vld [vmem:[#allocation4 + $0x468] sm:$0xff]
        %v729 = vld [vmem:[#allocation4 + $0x470] sm:$0xff]
        %v730 = vld [vmem:[#allocation4 + $0x478] sm:$0xff]
        %v731 = vld [vmem:[#allocation4 + $0x480] sm:$0xff]
        %v732 = vld [vmem:[#allocation4 + $0x488] sm:$0xff]
        %v733 = vld [vmem:[#allocation4 + $0x490] sm:$0xff]
        %v734 = vld [vmem:[#allocation4 + $0x498] sm:$0xff]
        %v735 = vld [vmem:[#allocation4 + $0x4a0] sm:$0xff]
        %v736 = vld [vmem:[#allocation4 + $0x4a8] sm:$0xff]
        %v737 = vld [vmem:[#allocation4 + $0x4b0] sm:$0xff]
        %v738 = vld [vmem:[#allocation4 + $0x4b8] sm:$0xff]
        %v739 = vld [vmem:[#allocation4 + $0x4c0] sm:$0xff]
        %v740 = vld [vmem:[#allocation4 + $0x4c8] sm:$0xff]
        %v741 = vld [vmem:[#allocation4 + $0x4d0] sm:$0xff]
        %v742 = vld [vmem:[#allocation4 + $0x4d8] sm:$0xff]
        %v743 = vld [vmem:[#allocation4 + $0x4e0] sm:$0xff]
        %v744 = vld [vmem:[#allocation4 + $0x4e8] sm:$0xff]
        %v745 = vld [vmem:[#allocation4 + $0x4f0] sm:$0xff]
        %v746 = vld [vmem:[#allocation4 + $0x4f8] sm:$0xff]
        %v747 = vld [vmem:[#allocation4 + $0x500] sm:$0xff]
        %v748 = vld [vmem:[#allocation4 + $0x508] sm:$0xff]
        %v749 = vld [vmem:[#allocation4 + $0x510] sm:$0xff]
        %v750 = vld [vmem:[#allocation4 + $0x518] sm:$0xff]
        %v751 = vld [vmem:[#allocation4 + $0x520] sm:$0xff]
        %v752 = vld [vmem:[#allocation4 + $0x528] sm:$0xff]
        %v753 = vld [vmem:[#allocation4 + $0x530] sm:$0xff]
        %v754 = vld [vmem:[#allocation4 + $0x538] sm:$0xff]
        %v755 = vld [vmem:[#allocation4 + $0x540] sm:$0xff]
        %v756 = vld [vmem:[#allocation4 + $0x548] sm:$0xff]
        %v757 = vld [vmem:[#allocation4 + $0x550] sm:$0xff]
        %v758 = vld [vmem:[#allocation4 + $0x558] sm:$0xff]
        %v759 = vld [vmem:[#allocation4 + $0x560] sm:$0xff]
        %v760 = vld [vmem:[#allocation4 + $0x568] sm:$0xff]
        %v761 = vld [vmem:[#allocation4 + $0x570] sm:$0xff]
        %v762 = vld [vmem:[#allocation4 + $0x578] sm:$0xff]
        %v763 = vld [vmem:[#allocation4 + $0x580] sm:$0xff]
        %v764 = vld [vmem:[#allocation4 + $0x588] sm:$0xff]
        %v765 = vld [vmem:[#allocation4 + $0x590] sm:$0xff]
        %v766 = vld [vmem:[#allocation4 + $0x598] sm:$0xff]
        %v767 = vld [vmem:[#allocation4 + $0x5a0] sm:$0xff]
        %v768 = vld [vmem:[#allocation4 + $0x5a8] sm:$0xff]
        %v769 = vld [vmem:[#allocation4 + $0x5b0] sm:$0xff]
        %v770 = vld [vmem:[#allocation4 + $0x5b8] sm:$0xff]
        %v771 = vld [vmem:[#allocation4 + $0x5c0] sm:$0xff]
        %v772 = vld [vmem:[#allocation4 + $0x5c8] sm:$0xff]
        %v773 = vld [vmem:[#allocation4 + $0x5d0] sm:$0xff]
        %v774 = vld [vmem:[#allocation4 + $0x5d8] sm:$0xff]
        %v775 = vld [vmem:[#allocation4 + $0x5e0] sm:$0xff]
        %v776 = vld [vmem:[#allocation4 + $0x5e8] sm:$0xff]
        %v777 = vld [vmem:[#allocation4 + $0x5f0] sm:$0xff]
        %v778 = vld [vmem:[#allocation4 + $0x5f8] sm:$0xff]
        %v779 = vld [vmem:[#allocation4 + $0x600] sm:$0xff]
        %v780 = vld [vmem:[#allocation4 + $0x608] sm:$0xff]
        %v781 = vld [vmem:[#allocation4 + $0x610] sm:$0xff]
        %v782 = vld [vmem:[#allocation4 + $0x618] sm:$0xff]
        %v783 = vld [vmem:[#allocation4 + $0x620] sm:$0xff]
        %v784 = vld [vmem:[#allocation4 + $0x628] sm:$0xff]
        %v785 = vld [vmem:[#allocation4 + $0x630] sm:$0xff]
        %v786 = vld [vmem:[#allocation4 + $0x638] sm:$0xff]
        %v787 = vld [vmem:[#allocation4 + $0x640] sm:$0xff]
        %v788 = vld [vmem:[#allocation4 + $0x648] sm:$0xff]
        %v789 = vld [vmem:[#allocation4 + $0x650] sm:$0xff]
        %v790 = vld [vmem:[#allocation4 + $0x658] sm:$0xff]
        %v791 = vld [vmem:[#allocation4 + $0x660] sm:$0xff]
        %v792 = vld [vmem:[#allocation4 + $0x668] sm:$0xff]
        %v793 = vld [vmem:[#allocation4 + $0x670] sm:$0xff]
        %v794 = vld [vmem:[#allocation4 + $0x678] sm:$0xff]
        %v795 = vld [vmem:[#allocation4 + $0x680] sm:$0xff]
        %v796 = vld [vmem:[#allocation4 + $0x688] sm:$0xff]
        %v797 = vld [vmem:[#allocation4 + $0x690] sm:$0xff]
        %v798 = vld [vmem:[#allocation4 + $0x698] sm:$0xff]
        %v799 = vld [vmem:[#allocation4 + $0x6a0] sm:$0xff]
        %v800 = vld [vmem:[#allocation4 + $0x6a8] sm:$0xff]
        %v801 = vld [vmem:[#allocation4 + $0x6b0] sm:$0xff]
        %v802 = vld [vmem:[#allocation4 + $0x6b8] sm:$0xff]
        %v803 = vld [vmem:[#allocation4 + $0x6c0] sm:$0xff]
        %v804 = vld [vmem:[#allocation4 + $0x6c8] sm:$0xff]
        %v805 = vld [vmem:[#allocation4 + $0x6d0] sm:$0xff]
        %v806 = vld [vmem:[#allocation4 + $0x6d8] sm:$0xff]
        %v807 = vld [vmem:[#allocation4 + $0x6e0] sm:$0xff]
        %v808 = vld [vmem:[#allocation4 + $0x6e8] sm:$0xff]
        %v809 = vld [vmem:[#allocation4 + $0x6f0] sm:$0xff]
        %v810 = vld [vmem:[#allocation4 + $0x6f8] sm:$0xff]
        %v811 = vld [vmem:[#allocation4 + $0x700] sm:$0xff]
        %v812 = vld [vmem:[#allocation4 + $0x708] sm:$0xff]
        %v813 = vld [vmem:[#allocation4 + $0x710] sm:$0xff]
        %v814 = vld [vmem:[#allocation4 + $0x718] sm:$0xff]
        %v815 = vld [vmem:[#allocation4 + $0x720] sm:$0xff]
        %v816 = vld [vmem:[#allocation4 + $0x728] sm:$0xff]
        %v817 = vld [vmem:[#allocation4 + $0x730] sm:$0xff]
        %v818 = vld [vmem:[#allocation4 + $0x738] sm:$0xff]
        %v819 = vld [vmem:[#allocation4 + $0x740] sm:$0xff]
        %v820 = vld [vmem:[#allocation4 + $0x748] sm:$0xff]
        %v821 = vld [vmem:[#allocation4 + $0x750] sm:$0xff]
        %v822 = vld [vmem:[#allocation4 + $0x758] sm:$0xff]
        %v823 = vld [vmem:[#allocation4 + $0x760] sm:$0xff]
        %v824 = vld [vmem:[#allocation4 + $0x768] sm:$0xff]
        %v825 = vld [vmem:[#allocation4 + $0x770] sm:$0xff]
        %v826 = vld [vmem:[#allocation4 + $0x778] sm:$0xff]
        %v827 = vld [vmem:[#allocation4 + $0x780] sm:$0xff]
        %v828 = vld [vmem:[#allocation4 + $0x788] sm:$0xff]
        %v829 = vld [vmem:[#allocation4 + $0x790] sm:$0xff]
        %v830 = vld [vmem:[#allocation4 + $0x798] sm:$0xff]
        %v831 = vld [vmem:[#allocation4 + $0x7a0] sm:$0xff]
        %v832 = vld [vmem:[#allocation4 + $0x7a8] sm:$0xff]
        %v833 = vld [vmem:[#allocation4 + $0x7b0] sm:$0xff]
        %v834 = vld [vmem:[#allocation4 + $0x7b8] sm:$0xff]
        %v835 = vld [vmem:[#allocation4 + $0x7c0] sm:$0xff]
        %v836 = vld [vmem:[#allocation4 + $0x7c8] sm:$0xff]
        %v837 = vld [vmem:[#allocation4 + $0x7d0] sm:$0xff]
        %v838 = vld [vmem:[#allocation4 + $0x7d8] sm:$0xff]
        %v839 = vld [vmem:[#allocation4 + $0x7e0] sm:$0xff]
        %v840 = vld [vmem:[#allocation4 + $0x7e8] sm:$0xff]
        %v841 = vld [vmem:[#allocation4 + $0x7f0] sm:$0xff]
        %v842 = vld [vmem:[#allocation4 + $0x7f8] sm:$0xff]
        %s843 = scalar_lea.vmem [#allocation4], 2048
        %v844 = vld [vmem:[%s843] sm:$0xff]
        %v845 = vld [vmem:[%s843 + $0x8] sm:$0xff]
        %v846 = vld [vmem:[%s843 + $0x10] sm:$0xff]
        %v847 = vld [vmem:[%s843 + $0x18] sm:$0xff]
        %v848 = vld [vmem:[%s843 + $0x20] sm:$0xff]
        %v849 = vld [vmem:[%s843 + $0x28] sm:$0xff]
        %v850 = vld [vmem:[%s843 + $0x30] sm:$0xff]
        %v851 = vld [vmem:[%s843 + $0x38] sm:$0xff]
        %v852 = vld [vmem:[%s843 + $0x40] sm:$0xff]
        %v853 = vld [vmem:[%s843 + $0x48] sm:$0xff]
        %v854 = vld [vmem:[%s843 + $0x50] sm:$0xff]
        %v855 = vld [vmem:[%s843 + $0x58] sm:$0xff]
        %v856 = vld [vmem:[%s843 + $0x60] sm:$0xff]
        %v857 = vld [vmem:[%s843 + $0x68] sm:$0xff]
        %v858 = vld [vmem:[%s843 + $0x70] sm:$0xff]
        %v859 = vld [vmem:[%s843 + $0x78] sm:$0xff]
        %v860 = vld [vmem:[%s843 + $0x80] sm:$0xff]
        %v861 = vld [vmem:[%s843 + $0x88] sm:$0xff]
        %v862 = vld [vmem:[%s843 + $0x90] sm:$0xff]
        %v863 = vld [vmem:[%s843 + $0x98] sm:$0xff]
        %v864 = vld [vmem:[%s843 + $0xa0] sm:$0xff]
        %v865 = vld [vmem:[%s843 + $0xa8] sm:$0xff]
        %v866 = vld [vmem:[%s843 + $0xb0] sm:$0xff]
        %v867 = vld [vmem:[%s843 + $0xb8] sm:$0xff]
        %v868 = vld [vmem:[%s843 + $0xc0] sm:$0xff]
        %v869 = vld [vmem:[%s843 + $0xc8] sm:$0xff]
        %v870 = vld [vmem:[%s843 + $0xd0] sm:$0xff]
        %v871 = vld [vmem:[%s843 + $0xd8] sm:$0xff]
        %v872 = vld [vmem:[%s843 + $0xe0] sm:$0xff]
        %v873 = vld [vmem:[%s843 + $0xe8] sm:$0xff]
        %v874 = vld [vmem:[%s843 + $0xf0] sm:$0xff]
        %v875 = vld [vmem:[%s843 + $0xf8] sm:$0xff]
        %v876 = vld [vmem:[%s843 + $0x100] sm:$0xff]
        %v877 = vld [vmem:[%s843 + $0x108] sm:$0xff]
        %v878 = vld [vmem:[%s843 + $0x110] sm:$0xff]
        %v879 = vld [vmem:[%s843 + $0x118] sm:$0xff]
        %v880 = vld [vmem:[%s843 + $0x120] sm:$0xff]
        %v881 = vld [vmem:[%s843 + $0x128] sm:$0xff]
        %v882 = vld [vmem:[%s843 + $0x130] sm:$0xff]
        %v883 = vld [vmem:[%s843 + $0x138] sm:$0xff]
        %v884 = vld [vmem:[%s843 + $0x140] sm:$0xff]
        %v885 = vld [vmem:[%s843 + $0x148] sm:$0xff]
        %v886 = vld [vmem:[%s843 + $0x150] sm:$0xff]
        %v887 = vld [vmem:[%s843 + $0x158] sm:$0xff]
        %v888 = vld [vmem:[%s843 + $0x160] sm:$0xff]
        %v889 = vld [vmem:[%s843 + $0x168] sm:$0xff]
        %v890 = vld [vmem:[%s843 + $0x170] sm:$0xff]
        %v891 = vld [vmem:[%s843 + $0x178] sm:$0xff]
        %v892 = vld [vmem:[%s843 + $0x180] sm:$0xff]
        %v893 = vld [vmem:[%s843 + $0x188] sm:$0xff]
        %v894 = vld [vmem:[%s843 + $0x190] sm:$0xff]
        %v895 = vld [vmem:[%s843 + $0x198] sm:$0xff]
        %v896 = vld [vmem:[%s843 + $0x1a0] sm:$0xff]
        %v897 = vld [vmem:[%s843 + $0x1a8] sm:$0xff]
        %v898 = vld [vmem:[%s843 + $0x1b0] sm:$0xff]
        %v899 = vld [vmem:[%s843 + $0x1b8] sm:$0xff]
        %v900 = vld [vmem:[%s843 + $0x1c0] sm:$0xff]
        %v901 = vld [vmem:[%s843 + $0x1c8] sm:$0xff]
        %v902 = vld [vmem:[%s843 + $0x1d0] sm:$0xff]
        %v903 = vld [vmem:[%s843 + $0x1d8] sm:$0xff]
        %v904 = vld [vmem:[%s843 + $0x1e0] sm:$0xff]
        %v905 = vld [vmem:[%s843 + $0x1e8] sm:$0xff]
        %v906 = vld [vmem:[%s843 + $0x1f0] sm:$0xff]
        %v907 = vld [vmem:[%s843 + $0x1f8] sm:$0xff]
        %v908 = vld [vmem:[%s843 + $0x200] sm:$0xff]
        %v909 = vld [vmem:[%s843 + $0x208] sm:$0xff]
        %v910 = vld [vmem:[%s843 + $0x210] sm:$0xff]
        %v911 = vld [vmem:[%s843 + $0x218] sm:$0xff]
        %v912 = vld [vmem:[%s843 + $0x220] sm:$0xff]
        %v913 = vld [vmem:[%s843 + $0x228] sm:$0xff]
        %v914 = vld [vmem:[%s843 + $0x230] sm:$0xff]
        %v915 = vld [vmem:[%s843 + $0x238] sm:$0xff]
        %v916 = vld [vmem:[%s843 + $0x240] sm:$0xff]
        %v917 = vld [vmem:[%s843 + $0x248] sm:$0xff]
        %v918 = vld [vmem:[%s843 + $0x250] sm:$0xff]
        %v919 = vld [vmem:[%s843 + $0x258] sm:$0xff]
        %v920 = vld [vmem:[%s843 + $0x260] sm:$0xff]
        %v921 = vld [vmem:[%s843 + $0x268] sm:$0xff]
        %v922 = vld [vmem:[%s843 + $0x270] sm:$0xff]
        %v923 = vld [vmem:[%s843 + $0x278] sm:$0xff]
        %v924 = vld [vmem:[%s843 + $0x280] sm:$0xff]
        %v925 = vld [vmem:[%s843 + $0x288] sm:$0xff]
        %v926 = vld [vmem:[%s843 + $0x290] sm:$0xff]
        %v927 = vld [vmem:[%s843 + $0x298] sm:$0xff]
        %v928 = vld [vmem:[%s843 + $0x2a0] sm:$0xff]
        %v929 = vld [vmem:[%s843 + $0x2a8] sm:$0xff]
        %v930 = vld [vmem:[%s843 + $0x2b0] sm:$0xff]
        %v931 = vld [vmem:[%s843 + $0x2b8] sm:$0xff]
        %v932 = vld [vmem:[%s843 + $0x2c0] sm:$0xff]
        %v933 = vld [vmem:[%s843 + $0x2c8] sm:$0xff]
        %v934 = vld [vmem:[%s843 + $0x2d0] sm:$0xff]
        %v935 = vld [vmem:[%s843 + $0x2d8] sm:$0xff]
        %v936 = vld [vmem:[%s843 + $0x2e0] sm:$0xff]
        %v937 = vld [vmem:[%s843 + $0x2e8] sm:$0xff]
        %v938 = vld [vmem:[%s843 + $0x2f0] sm:$0xff]
        %v939 = vld [vmem:[%s843 + $0x2f8] sm:$0xff]
        %v940 = vld [vmem:[%s843 + $0x300] sm:$0xff]
        %v941 = vld [vmem:[%s843 + $0x308] sm:$0xff]
        %v942 = vld [vmem:[%s843 + $0x310] sm:$0xff]
        %v943 = vld [vmem:[%s843 + $0x318] sm:$0xff]
        %v944 = vld [vmem:[%s843 + $0x320] sm:$0xff]
        %v945 = vld [vmem:[%s843 + $0x328] sm:$0xff]
        %v946 = vld [vmem:[%s843 + $0x330] sm:$0xff]
        %v947 = vld [vmem:[%s843 + $0x338] sm:$0xff]
        %v948 = vld [vmem:[%s843 + $0x340] sm:$0xff]
        %v949 = vld [vmem:[%s843 + $0x348] sm:$0xff]
        %v950 = vld [vmem:[%s843 + $0x350] sm:$0xff]
        %v951 = vld [vmem:[%s843 + $0x358] sm:$0xff]
        %v952 = vld [vmem:[%s843 + $0x360] sm:$0xff]
        %v953 = vld [vmem:[%s843 + $0x368] sm:$0xff]
        %v954 = vld [vmem:[%s843 + $0x370] sm:$0xff]
        %v955 = vld [vmem:[%s843 + $0x378] sm:$0xff]
        %v956 = vld [vmem:[%s843 + $0x380] sm:$0xff]
        %v957 = vld [vmem:[%s843 + $0x388] sm:$0xff]
        %v958 = vld [vmem:[%s843 + $0x390] sm:$0xff]
        %v959 = vld [vmem:[%s843 + $0x398] sm:$0xff]
        %v960 = vld [vmem:[%s843 + $0x3a0] sm:$0xff]
        %v961 = vld [vmem:[%s843 + $0x3a8] sm:$0xff]
        %v962 = vld [vmem:[%s843 + $0x3b0] sm:$0xff]
        %v963 = vld [vmem:[%s843 + $0x3b8] sm:$0xff]
        %v964 = vld [vmem:[%s843 + $0x3c0] sm:$0xff]
        %v965 = vld [vmem:[%s843 + $0x3c8] sm:$0xff]
        %v966 = vld [vmem:[%s843 + $0x3d0] sm:$0xff]
        %v967 = vld [vmem:[%s843 + $0x3d8] sm:$0xff]
        %v968 = vld [vmem:[%s843 + $0x3e0] sm:$0xff]
        %v969 = vld [vmem:[%s843 + $0x3e8] sm:$0xff]
        %v970 = vld [vmem:[%s843 + $0x3f0] sm:$0xff]
        %v971 = vld [vmem:[%s843 + $0x3f8] sm:$0xff]
        %v972 = vld [vmem:[%s843 + $0x400] sm:$0xff]
        %v973 = vld [vmem:[%s843 + $0x408] sm:$0xff]
        %v974 = vld [vmem:[%s843 + $0x410] sm:$0xff]
        %v975 = vld [vmem:[%s843 + $0x418] sm:$0xff]
        %v976 = vld [vmem:[%s843 + $0x420] sm:$0xff]
        %v977 = vld [vmem:[%s843 + $0x428] sm:$0xff]
        %v978 = vld [vmem:[%s843 + $0x430] sm:$0xff]
        %v979 = vld [vmem:[%s843 + $0x438] sm:$0xff]
        %v980 = vld [vmem:[%s843 + $0x440] sm:$0xff]
        %v981 = vld [vmem:[%s843 + $0x448] sm:$0xff]
        %v982 = vld [vmem:[%s843 + $0x450] sm:$0xff]
        %v983 = vld [vmem:[%s843 + $0x458] sm:$0xff]
        %v984 = vld [vmem:[%s843 + $0x460] sm:$0xff]
        %v985 = vld [vmem:[%s843 + $0x468] sm:$0xff]
        %v986 = vld [vmem:[%s843 + $0x470] sm:$0xff]
        %v987 = vld [vmem:[%s843 + $0x478] sm:$0xff]
        %v988 = vld [vmem:[%s843 + $0x480] sm:$0xff]
        %v989 = vld [vmem:[%s843 + $0x488] sm:$0xff]
        %v990 = vld [vmem:[%s843 + $0x490] sm:$0xff]
        %v991 = vld [vmem:[%s843 + $0x498] sm:$0xff]
        %v992 = vld [vmem:[%s843 + $0x4a0] sm:$0xff]
        %v993 = vld [vmem:[%s843 + $0x4a8] sm:$0xff]
        %v994 = vld [vmem:[%s843 + $0x4b0] sm:$0xff]
        %v995 = vld [vmem:[%s843 + $0x4b8] sm:$0xff]
        %v996 = vld [vmem:[%s843 + $0x4c0] sm:$0xff]
        %v997 = vld [vmem:[%s843 + $0x4c8] sm:$0xff]
        %v998 = vld [vmem:[%s843 + $0x4d0] sm:$0xff]
        %v999 = vld [vmem:[%s843 + $0x4d8] sm:$0xff]
        %v1000 = vld [vmem:[%s843 + $0x4e0] sm:$0xff]
        %v1001 = vld [vmem:[%s843 + $0x4e8] sm:$0xff]
        %v1002 = vld [vmem:[%s843 + $0x4f0] sm:$0xff]
        %v1003 = vld [vmem:[%s843 + $0x4f8] sm:$0xff]
        %v1004 = vld [vmem:[%s843 + $0x500] sm:$0xff]
        %v1005 = vld [vmem:[%s843 + $0x508] sm:$0xff]
        %v1006 = vld [vmem:[%s843 + $0x510] sm:$0xff]
        %v1007 = vld [vmem:[%s843 + $0x518] sm:$0xff]
        %v1008 = vld [vmem:[%s843 + $0x520] sm:$0xff]
        %v1009 = vld [vmem:[%s843 + $0x528] sm:$0xff]
        %v1010 = vld [vmem:[%s843 + $0x530] sm:$0xff]
        %v1011 = vld [vmem:[%s843 + $0x538] sm:$0xff]
        %v1012 = vld [vmem:[%s843 + $0x540] sm:$0xff]
        %v1013 = vld [vmem:[%s843 + $0x548] sm:$0xff]
        %v1014 = vld [vmem:[%s843 + $0x550] sm:$0xff]
        %v1015 = vld [vmem:[%s843 + $0x558] sm:$0xff]
        %v1016 = vld [vmem:[%s843 + $0x560] sm:$0xff]
        %v1017 = vld [vmem:[%s843 + $0x568] sm:$0xff]
        %v1018 = vld [vmem:[%s843 + $0x570] sm:$0xff]
        %v1019 = vld [vmem:[%s843 + $0x578] sm:$0xff]
        %v1020 = vld [vmem:[%s843 + $0x580] sm:$0xff]
        %v1021 = vld [vmem:[%s843 + $0x588] sm:$0xff]
        %v1022 = vld [vmem:[%s843 + $0x590] sm:$0xff]
        %v1023 = vld [vmem:[%s843 + $0x598] sm:$0xff]
        %v1024 = vld [vmem:[%s843 + $0x5a0] sm:$0xff]
        %v1025 = vld [vmem:[%s843 + $0x5a8] sm:$0xff]
        %v1026 = vld [vmem:[%s843 + $0x5b0] sm:$0xff]
        %v1027 = vld [vmem:[%s843 + $0x5b8] sm:$0xff]
        %v1028 = vld [vmem:[%s843 + $0x5c0] sm:$0xff]
        %v1029 = vld [vmem:[%s843 + $0x5c8] sm:$0xff]
        %v1030 = vld [vmem:[%s843 + $0x5d0] sm:$0xff]
        %v1031 = vld [vmem:[%s843 + $0x5d8] sm:$0xff]
        %v1032 = vld [vmem:[%s843 + $0x5e0] sm:$0xff]
        %v1033 = vld [vmem:[%s843 + $0x5e8] sm:$0xff]
        %v1034 = vld [vmem:[%s843 + $0x5f0] sm:$0xff]
        %v1035 = vld [vmem:[%s843 + $0x5f8] sm:$0xff]
        %v1036 = vld [vmem:[%s843 + $0x600] sm:$0xff]
        %v1037 = vld [vmem:[%s843 + $0x608] sm:$0xff]
        %v1038 = vld [vmem:[%s843 + $0x610] sm:$0xff]
        %v1039 = vld [vmem:[%s843 + $0x618] sm:$0xff]
        %v1040 = vld [vmem:[%s843 + $0x620] sm:$0xff]
        %v1041 = vld [vmem:[%s843 + $0x628] sm:$0xff]
        %v1042 = vld [vmem:[%s843 + $0x630] sm:$0xff]
        %v1043 = vld [vmem:[%s843 + $0x638] sm:$0xff]
        %v1044 = vld [vmem:[%s843 + $0x640] sm:$0xff]
        %v1045 = vld [vmem:[%s843 + $0x648] sm:$0xff]
        %v1046 = vld [vmem:[%s843 + $0x650] sm:$0xff]
        %v1047 = vld [vmem:[%s843 + $0x658] sm:$0xff]
        %v1048 = vld [vmem:[%s843 + $0x660] sm:$0xff]
        %v1049 = vld [vmem:[%s843 + $0x668] sm:$0xff]
        %v1050 = vld [vmem:[%s843 + $0x670] sm:$0xff]
        %v1051 = vld [vmem:[%s843 + $0x678] sm:$0xff]
        %v1052 = vld [vmem:[%s843 + $0x680] sm:$0xff]
        %v1053 = vld [vmem:[%s843 + $0x688] sm:$0xff]
        %v1054 = vld [vmem:[%s843 + $0x690] sm:$0xff]
        %v1055 = vld [vmem:[%s843 + $0x698] sm:$0xff]
        %v1056 = vld [vmem:[%s843 + $0x6a0] sm:$0xff]
        %v1057 = vld [vmem:[%s843 + $0x6a8] sm:$0xff]
        %v1058 = vld [vmem:[%s843 + $0x6b0] sm:$0xff]
        %v1059 = vld [vmem:[%s843 + $0x6b8] sm:$0xff]
        %v1060 = vld [vmem:[%s843 + $0x6c0] sm:$0xff]
        %v1061 = vld [vmem:[%s843 + $0x6c8] sm:$0xff]
        %v1062 = vld [vmem:[%s843 + $0x6d0] sm:$0xff]
        %v1063 = vld [vmem:[%s843 + $0x6d8] sm:$0xff]
        %v1064 = vld [vmem:[%s843 + $0x6e0] sm:$0xff]
        %v1065 = vld [vmem:[%s843 + $0x6e8] sm:$0xff]
        %v1066 = vld [vmem:[%s843 + $0x6f0] sm:$0xff]
        %v1067 = vld [vmem:[%s843 + $0x6f8] sm:$0xff]
        %v1068 = vld [vmem:[%s843 + $0x700] sm:$0xff]
        %v1069 = vld [vmem:[%s843 + $0x708] sm:$0xff]
        %v1070 = vld [vmem:[%s843 + $0x710] sm:$0xff]
        %v1071 = vld [vmem:[%s843 + $0x718] sm:$0xff]
        %v1072 = vld [vmem:[%s843 + $0x720] sm:$0xff]
        %v1073 = vld [vmem:[%s843 + $0x728] sm:$0xff]
        %v1074 = vld [vmem:[%s843 + $0x730] sm:$0xff]
        %v1075 = vld [vmem:[%s843 + $0x738] sm:$0xff]
        %v1076 = vld [vmem:[%s843 + $0x740] sm:$0xff]
        %v1077 = vld [vmem:[%s843 + $0x748] sm:$0xff]
        %v1078 = vld [vmem:[%s843 + $0x750] sm:$0xff]
        %v1079 = vld [vmem:[%s843 + $0x758] sm:$0xff]
        %v1080 = vld [vmem:[%s843 + $0x760] sm:$0xff]
        %v1081 = vld [vmem:[%s843 + $0x768] sm:$0xff]
        %v1082 = vld [vmem:[%s843 + $0x770] sm:$0xff]
        %v1083 = vld [vmem:[%s843 + $0x778] sm:$0xff]
        %v1084 = vld [vmem:[%s843 + $0x780] sm:$0xff]
        %v1085 = vld [vmem:[%s843 + $0x788] sm:$0xff]
        %v1086 = vld [vmem:[%s843 + $0x790] sm:$0xff]
        %v1087 = vld [vmem:[%s843 + $0x798] sm:$0xff]
        %v1088 = vld [vmem:[%s843 + $0x7a0] sm:$0xff]
        %v1089 = vld [vmem:[%s843 + $0x7a8] sm:$0xff]
        %v1090 = vld [vmem:[%s843 + $0x7b0] sm:$0xff]
        %v1091 = vld [vmem:[%s843 + $0x7b8] sm:$0xff]
        %v1092 = vld [vmem:[%s843 + $0x7c0] sm:$0xff]
        %v1093 = vld [vmem:[%s843 + $0x7c8] sm:$0xff]
        %v1094 = vld [vmem:[%s843 + $0x7d0] sm:$0xff]
        %v1095 = vld [vmem:[%s843 + $0x7d8] sm:$0xff]
        %v1096 = vld [vmem:[%s843 + $0x7e0] sm:$0xff]
        %v1097 = vld [vmem:[%s843 + $0x7e8] sm:$0xff]
        %v1098 = vld [vmem:[%s843 + $0x7f0] sm:$0xff]
        %v1099 = vld [vmem:[%s843 + $0x7f8] sm:$0xff]
        %1100 = vmatprep.subr.mxu0 %v845
        %1101 = vmatpush1.msra.mxu0 %v844
        %1102 = vmatprep.subr.mxu0 %v853
        %1103 = vmatpush1.msra.mxu0 %v852
        %1104 = vmatprep.subr.mxu0 %v861
        %1105 = vmatpush1.msra.mxu0 %v860
        %1106 = vmatprep.subr.mxu0 %v869
        %1107 = vmatpush1.msra.mxu0 %v868
        %1108 = vmatprep.subr.mxu0 %v877
        %1109 = vmatpush1.msra.mxu0 %v876
        %1110 = vmatprep.subr.mxu0 %v885
        %1111 = vmatpush1.msra.mxu0 %v884
        %1112 = vmatprep.subr.mxu0 %v893
        %1113 = vmatpush1.msra.mxu0 %v892
        %1114 = vmatprep.subr.mxu0 %v901
        %1115 = vmatpush1.msra.mxu0 %v900
        %1116 = vmatprep.subr.mxu0 %v909
        %1117 = vmatpush1.msra.mxu0 %v908
        %1118 = vmatprep.subr.mxu0 %v917
        %1119 = vmatpush1.msra.mxu0 %v916
        %1120 = vmatprep.subr.mxu0 %v925
        %1121 = vmatpush1.msra.mxu0 %v924
        %1122 = vmatprep.subr.mxu0 %v933
        %1123 = vmatpush1.msra.mxu0 %v932
        %1124 = vmatprep.subr.mxu0 %v941
        %1125 = vmatpush1.msra.mxu0 %v940
        %1126 = vmatprep.subr.mxu0 %v949
        %1127 = vmatpush1.msra.mxu0 %v948
        %1128 = vmatprep.subr.mxu0 %v957
        %1129 = vmatpush1.msra.mxu0 %v956
        %1130 = vmatprep.subr.mxu0 %v965
        %1131 = vmatpush1.msra.mxu0 %v964
        %1132 = vmatprep.subr.mxu0 %v973
        %1133 = vmatpush1.msra.mxu0 %v972
        %1134 = vmatprep.subr.mxu0 %v981
        %1135 = vmatpush1.msra.mxu0 %v980
        %1136 = vmatprep.subr.mxu0 %v989
        %1137 = vmatpush1.msra.mxu0 %v988
        %1138 = vmatprep.subr.mxu0 %v997
        %1139 = vmatpush1.msra.mxu0 %v996
        %1140 = vmatprep.subr.mxu0 %v1005
        %1141 = vmatpush1.msra.mxu0 %v1004
        %1142 = vmatprep.subr.mxu0 %v1013
        %1143 = vmatpush1.msra.mxu0 %v1012
        %1144 = vmatprep.subr.mxu0 %v1021
        %1145 = vmatpush1.msra.mxu0 %v1020
        %1146 = vmatprep.subr.mxu0 %v1029
        %1147 = vmatpush1.msra.mxu0 %v1028
        %1148 = vmatprep.subr.mxu0 %v1037
        %1149 = vmatpush1.msra.mxu0 %v1036
        %1150 = vmatprep.subr.mxu0 %v1045
        %1151 = vmatpush1.msra.mxu0 %v1044
        %1152 = vmatprep.subr.mxu0 %v1053
        %1153 = vmatpush1.msra.mxu0 %v1052
        %1154 = vmatprep.subr.mxu0 %v1061
        %1155 = vmatpush1.msra.mxu0 %v1060
        %1156 = vmatprep.subr.mxu0 %v1069
        %1157 = vmatpush1.msra.mxu0 %v1068
        %1158 = vmatprep.subr.mxu0 %v1077
        %1159 = vmatpush1.msra.mxu0 %v1076
        %1160 = vmatprep.subr.mxu0 %v1085
        %1161 = vmatpush1.msra.mxu0 %v1084
        %1162 = vmatprep.subr.mxu0 %v1093
        %1163 = vmatpush1.msra.mxu0 %v1092
        %1164 = vmatprep.mubr.f32.mxu0 %v582
        %1165 = vmatmul.mubr.f32.gmra.mrb[0].mxu0 %v581
        %v1166 = vpop.f32.mrb[0].mxu0
        %v1167 = vadd.f32 0.0, %v1166
        %v1168 = vpop.f32.mrb[0].mxu0
        %v1169 = vadd.f32 0.0, %v1168
        %1170 = vdwg.mxu0
        %1171 = vmatprep.subr.mxu0 %v847
        %1172 = vmatpush1.msra.mxu0 %v846
        %1173 = vmatprep.subr.mxu0 %v855
        %1174 = vmatpush1.msra.mxu0 %v854
        %1175 = vmatprep.subr.mxu0 %v863
        %1176 = vmatpush1.msra.mxu0 %v862
        %1177 = vmatprep.subr.mxu0 %v871
        %1178 = vmatpush1.msra.mxu0 %v870
        %1179 = vmatprep.subr.mxu0 %v879
        %1180 = vmatpush1.msra.mxu0 %v878
        %1181 = vmatprep.subr.mxu0 %v887
        %1182 = vmatpush1.msra.mxu0 %v886
        %1183 = vmatprep.subr.mxu0 %v895
        %1184 = vmatpush1.msra.mxu0 %v894
        %1185 = vmatprep.subr.mxu0 %v903
        %1186 = vmatpush1.msra.mxu0 %v902
        %1187 = vmatprep.subr.mxu0 %v911
        %1188 = vmatpush1.msra.mxu0 %v910
        %1189 = vmatprep.subr.mxu0 %v919
        %1190 = vmatpush1.msra.mxu0 %v918
        %1191 = vmatprep.subr.mxu0 %v927
        %1192 = vmatpush1.msra.mxu0 %v926
        %1193 = vmatprep.subr.mxu0 %v935
        %1194 = vmatpush1.msra.mxu0 %v934
        %1195 = vmatprep.subr.mxu0 %v943
        %1196 = vmatpush1.msra.mxu0 %v942
        %1197 = vmatprep.subr.mxu0 %v951
        %1198 = vmatpush1.msra.mxu0 %v950
        %1199 = vmatprep.subr.mxu0 %v959
        %1200 = vmatpush1.msra.mxu0 %v958
        %1201 = vmatprep.subr.mxu0 %v967
        %1202 = vmatpush1.msra.mxu0 %v966
        %1203 = vmatprep.subr.mxu0 %v975
        %1204 = vmatpush1.msra.mxu0 %v974
        %1205 = vmatprep.subr.mxu0 %v983
        %1206 = vmatpush1.msra.mxu0 %v982
        %1207 = vmatprep.subr.mxu0 %v991
        %1208 = vmatpush1.msra.mxu0 %v990
        %1209 = vmatprep.subr.mxu0 %v999
        %1210 = vmatpush1.msra.mxu0 %v998
        %1211 = vmatprep.subr.mxu0 %v1007
        %1212 = vmatpush1.msra.mxu0 %v1006
        %1213 = vmatprep.subr.mxu0 %v1015
        %1214 = vmatpush1.msra.mxu0 %v1014
        %1215 = vmatprep.subr.mxu0 %v1023
        %1216 = vmatpush1.msra.mxu0 %v1022
        %1217 = vmatprep.subr.mxu0 %v1031
        %1218 = vmatpush1.msra.mxu0 %v1030
        %1219 = vmatprep.subr.mxu0 %v1039
        %1220 = vmatpush1.msra.mxu0 %v1038
        %1221 = vmatprep.subr.mxu0 %v1047
        %1222 = vmatpush1.msra.mxu0 %v1046
        %1223 = vmatprep.subr.mxu0 %v1055
        %1224 = vmatpush1.msra.mxu0 %v1054
        %1225 = vmatprep.subr.mxu0 %v1063
        %1226 = vmatpush1.msra.mxu0 %v1062
        %1227 = vmatprep.subr.mxu0 %v1071
        %1228 = vmatpush1.msra.mxu0 %v1070
        %1229 = vmatprep.subr.mxu0 %v1079
        %1230 = vmatpush1.msra.mxu0 %v1078
        %1231 = vmatprep.subr.mxu0 %v1087
        %1232 = vmatpush1.msra.mxu0 %v1086
        %1233 = vmatprep.subr.mxu0 %v1095
        %1234 = vmatpush1.msra.mxu0 %v1094
        %1235 = vmatprep.mubr.f32.mxu0 %v582
        %1236 = vmatmul.mubr.f32.gmra.mrb[0].mxu0 %v581
        %v1237 = vpop.f32.mrb[0].mxu0
        %v1238 = vadd.f32 0.0, %v1237
        %v1239 = vpop.f32.mrb[0].mxu0
        %v1240 = vadd.f32 0.0, %v1239
        %1241 = vdwg.mxu0
        %1242 = vmatprep.subr.mxu0 %v849
        %1243 = vmatpush1.msra.mxu0 %v848
        %1244 = vmatprep.subr.mxu0 %v857
        %1245 = vmatpush1.msra.mxu0 %v856
        %1246 = vmatprep.subr.mxu0 %v865
        %1247 = vmatpush1.msra.mxu0 %v864
        %1248 = vmatprep.subr.mxu0 %v873
        %1249 = vmatpush1.msra.mxu0 %v872
        %1250 = vmatprep.subr.mxu0 %v881
        %1251 = vmatpush1.msra.mxu0 %v880
        %1252 = vmatprep.subr.mxu0 %v889
        %1253 = vmatpush1.msra.mxu0 %v888
        %1254 = vmatprep.subr.mxu0 %v897
        %1255 = vmatpush1.msra.mxu0 %v896
        %1256 = vmatprep.subr.mxu0 %v905
        %1257 = vmatpush1.msra.mxu0 %v904
        %1258 = vmatprep.subr.mxu0 %v913
        %1259 = vmatpush1.msra.mxu0 %v912
        %1260 = vmatprep.subr.mxu0 %v921
        %1261 = vmatpush1.msra.mxu0 %v920
        %1262 = vmatprep.subr.mxu0 %v929
        %1263 = vmatpush1.msra.mxu0 %v928
        %1264 = vmatprep.subr.mxu0 %v937
        %1265 = vmatpush1.msra.mxu0 %v936
        %1266 = vmatprep.subr.mxu0 %v945
        %1267 = vmatpush1.msra.mxu0 %v944
        %1268 = vmatprep.subr.mxu0 %v953
        %1269 = vmatpush1.msra.mxu0 %v952
        %1270 = vmatprep.subr.mxu0 %v961
        %1271 = vmatpush1.msra.mxu0 %v960
        %1272 = vmatprep.subr.mxu0 %v969
        %1273 = vmatpush1.msra.mxu0 %v968
        %1274 = vmatprep.subr.mxu0 %v977
        %1275 = vmatpush1.msra.mxu0 %v976
        %1276 = vmatprep.subr.mxu0 %v985
        %1277 = vmatpush1.msra.mxu0 %v984
        %1278 = vmatprep.subr.mxu0 %v993
        %1279 = vmatpush1.msra.mxu0 %v992
        %1280 = vmatprep.subr.mxu0 %v1001
        %1281 = vmatpush1.msra.mxu0 %v1000
        %1282 = vmatprep.subr.mxu0 %v1009
        %1283 = vmatpush1.msra.mxu0 %v1008
        %1284 = vmatprep.subr.mxu0 %v1017
        %1285 = vmatpush1.msra.mxu0 %v1016
        %1286 = vmatprep.subr.mxu0 %v1025
        %1287 = vmatpush1.msra.mxu0 %v1024
        %1288 = vmatprep.subr.mxu0 %v1033
        %1289 = vmatpush1.msra.mxu0 %v1032
        %1290 = vmatprep.subr.mxu0 %v1041
        %1291 = vmatpush1.msra.mxu0 %v1040
        %1292 = vmatprep.subr.mxu0 %v1049
        %1293 = vmatpush1.msra.mxu0 %v1048
        %1294 = vmatprep.subr.mxu0 %v1057
        %1295 = vmatpush1.msra.mxu0 %v1056
        %1296 = vmatprep.subr.mxu0 %v1065
        %1297 = vmatpush1.msra.mxu0 %v1064
        %1298 = vmatprep.subr.mxu0 %v1073
        %1299 = vmatpush1.msra.mxu0 %v1072
        %1300 = vmatprep.subr.mxu0 %v1081
        %1301 = vmatpush1.msra.mxu0 %v1080
        %1302 = vmatprep.subr.mxu0 %v1089
        %1303 = vmatpush1.msra.mxu0 %v1088
        %1304 = vmatprep.subr.mxu0 %v1097
        %1305 = vmatpush1.msra.mxu0 %v1096
        %1306 = vmatprep.mubr.f32.mxu0 %v582
        %1307 = vmatmul.mubr.f32.gmra.mrb[0].mxu0 %v581
        %v1308 = vpop.f32.mrb[0].mxu0
        %v1309 = vadd.f32 0.0, %v1308
        %v1310 = vpop.f32.mrb[0].mxu0
        %v1311 = vadd.f32 0.0, %v1310
        %1312 = vdwg.mxu0
        %1313 = vmatprep.subr.mxu0 %v851
        %1314 = vmatpush1.msra.mxu0 %v850
        %1315 = vmatprep.subr.mxu0 %v859
        %1316 = vmatpush1.msra.mxu0 %v858
        %1317 = vmatprep.subr.mxu0 %v867
        %1318 = vmatpush1.msra.mxu0 %v866
        %1319 = vmatprep.subr.mxu0 %v875
        %1320 = vmatpush1.msra.mxu0 %v874
        %1321 = vmatprep.subr.mxu0 %v883
        %1322 = vmatpush1.msra.mxu0 %v882
        %1323 = vmatprep.subr.mxu0 %v891
        %1324 = vmatpush1.msra.mxu0 %v890
        %1325 = vmatprep.subr.mxu0 %v899
        %1326 = vmatpush1.msra.mxu0 %v898
        %1327 = vmatprep.subr.mxu0 %v907
        %1328 = vmatpush1.msra.mxu0 %v906
        %1329 = vmatprep.subr.mxu0 %v915
        %1330 = vmatpush1.msra.mxu0 %v914
        %1331 = vmatprep.subr.mxu0 %v923
        %1332 = vmatpush1.msra.mxu0 %v922
        %1333 = vmatprep.subr.mxu0 %v931
        %1334 = vmatpush1.msra.mxu0 %v930
        %1335 = vmatprep.subr.mxu0 %v939
        %1336 = vmatpush1.msra.mxu0 %v938
        %1337 = vmatprep.subr.mxu0 %v947
        %1338 = vmatpush1.msra.mxu0 %v946
        %1339 = vmatprep.subr.mxu0 %v955
        %1340 = vmatpush1.msra.mxu0 %v954
        %1341 = vmatprep.subr.mxu0 %v963
        %1342 = vmatpush1.msra.mxu0 %v962
        %1343 = vmatprep.subr.mxu0 %v971
        %1344 = vmatpush1.msra.mxu0 %v970
        %1345 = vmatprep.subr.mxu0 %v979
        %1346 = vmatpush1.msra.mxu0 %v978
        %1347 = vmatprep.subr.mxu0 %v987
        %1348 = vmatpush1.msra.mxu0 %v986
        %1349 = vmatprep.subr.mxu0 %v995
        %1350 = vmatpush1.msra.mxu0 %v994
        %1351 = vmatprep.subr.mxu0 %v1003
        %1352 = vmatpush1.msra.mxu0 %v1002
        %1353 = vmatprep.subr.mxu0 %v1011
        %1354 = vmatpush1.msra.mxu0 %v1010
        %1355 = vmatprep.subr.mxu0 %v1019
        %1356 = vmatpush1.msra.mxu0 %v1018
        %1357 = vmatprep.subr.mxu0 %v1027
        %1358 = vmatpush1.msra.mxu0 %v1026
        %1359 = vmatprep.subr.mxu0 %v1035
        %1360 = vmatpush1.msra.mxu0 %v1034
        %1361 = vmatprep.subr.mxu0 %v1043
        %1362 = vmatpush1.msra.mxu0 %v1042
        %1363 = vmatprep.subr.mxu0 %v1051
        %1364 = vmatpush1.msra.mxu0 %v1050
        %1365 = vmatprep.subr.mxu0 %v1059
        %1366 = vmatpush1.msra.mxu0 %v1058
        %1367 = vmatprep.subr.mxu0 %v1067
        %1368 = vmatpush1.msra.mxu0 %v1066
        %1369 = vmatprep.subr.mxu0 %v1075
        %1370 = vmatpush1.msra.mxu0 %v1074
        %1371 = vmatprep.subr.mxu0 %v1083
        %1372 = vmatpush1.msra.mxu0 %v1082
        %1373 = vmatprep.subr.mxu0 %v1091
        %1374 = vmatpush1.msra.mxu0 %v1090
        %1375 = vmatprep.subr.mxu0 %v1099
        %1376 = vmatpush1.msra.mxu0 %v1098
        %1377 = vmatprep.mubr.f32.mxu0 %v582
        %1378 = vmatmul.mubr.f32.gmra.mrb[0].mxu0 %v581
        %v1379 = vpop.f32.mrb[0].mxu0
        %v1380 = vadd.f32 0.0, %v1379
        %v1381 = vpop.f32.mrb[0].mxu0
        %v1382 = vadd.f32 0.0, %v1381
        %1383 = vdwg.mxu0
        %1384 = vmatprep.subr.mxu0 %v588
        %1385 = vmatpush1.msra.mxu0 %v587
        %1386 = vmatprep.subr.mxu0 %v596
        %1387 = vmatpush1.msra.mxu0 %v595
        %1388 = vmatprep.subr.mxu0 %v604
        %1389 = vmatpush1.msra.mxu0 %v603
        %1390 = vmatprep.subr.mxu0 %v612
        %1391 = vmatpush1.msra.mxu0 %v611
        %1392 = vmatprep.subr.mxu0 %v620
        %1393 = vmatpush1.msra.mxu0 %v619
        %1394 = vmatprep.subr.mxu0 %v628
        %1395 = vmatpush1.msra.mxu0 %v627
        %1396 = vmatprep.subr.mxu0 %v636
        %1397 = vmatpush1.msra.mxu0 %v635
        %1398 = vmatprep.subr.mxu0 %v644
        %1399 = vmatpush1.msra.mxu0 %v643
        %1400 = vmatprep.subr.mxu0 %v652
        %1401 = vmatpush1.msra.mxu0 %v651
        %1402 = vmatprep.subr.mxu0 %v660
        %1403 = vmatpush1.msra.mxu0 %v659
        %1404 = vmatprep.subr.mxu0 %v668
        %1405 = vmatpush1.msra.mxu0 %v667
        %1406 = vmatprep.subr.mxu0 %v676
        %1407 = vmatpush1.msra.mxu0 %v675
        %1408 = vmatprep.subr.mxu0 %v684
        %1409 = vmatpush1.msra.mxu0 %v683
        %1410 = vmatprep.subr.mxu0 %v692
        %1411 = vmatpush1.msra.mxu0 %v691
        %1412 = vmatprep.subr.mxu0 %v700
        %1413 = vmatpush1.msra.mxu0 %v699
        %1414 = vmatprep.subr.mxu0 %v708
        %1415 = vmatpush1.msra.mxu0 %v707
        %1416 = vmatprep.subr.mxu0 %v716
        %1417 = vmatpush1.msra.mxu0 %v715
        %1418 = vmatprep.subr.mxu0 %v724
        %1419 = vmatpush1.msra.mxu0 %v723
        %1420 = vmatprep.subr.mxu0 %v732
        %1421 = vmatpush1.msra.mxu0 %v731
        %1422 = vmatprep.subr.mxu0 %v740
        %1423 = vmatpush1.msra.mxu0 %v739
        %1424 = vmatprep.subr.mxu0 %v748
        %1425 = vmatpush1.msra.mxu0 %v747
        %1426 = vmatprep.subr.mxu0 %v756
        %1427 = vmatpush1.msra.mxu0 %v755
        %1428 = vmatprep.subr.mxu0 %v764
        %1429 = vmatpush1.msra.mxu0 %v763
        %1430 = vmatprep.subr.mxu0 %v772
        %1431 = vmatpush1.msra.mxu0 %v771
        %1432 = vmatprep.subr.mxu0 %v780
        %1433 = vmatpush1.msra.mxu0 %v779
        %1434 = vmatprep.subr.mxu0 %v788
        %1435 = vmatpush1.msra.mxu0 %v787
        %1436 = vmatprep.subr.mxu0 %v796
        %1437 = vmatpush1.msra.mxu0 %v795
        %1438 = vmatprep.subr.mxu0 %v804
        %1439 = vmatpush1.msra.mxu0 %v803
        %1440 = vmatprep.subr.mxu0 %v812
        %1441 = vmatpush1.msra.mxu0 %v811
        %1442 = vmatprep.subr.mxu0 %v820
        %1443 = vmatpush1.msra.mxu0 %v819
        %1444 = vmatprep.subr.mxu0 %v828
        %1445 = vmatpush1.msra.mxu0 %v827
        %1446 = vmatprep.subr.mxu0 %v836
        %1447 = vmatpush1.msra.mxu0 %v835
        %1448 = vmatprep.mubr.f32.mxu0 %v580
        %1449 = vmatmul.mubr.f32.gmra.mrb[0].mxu0 %v579
        %v1450 = vpop.f32.mrb[0].mxu0
        %v1451 = vadd.f32 %v1167, %v1450
        %v1452 = vpop.f32.mrb[0].mxu0
        %v1453 = vadd.f32 %v1169, %v1452
        %1454 = vdwg.mxu0
        %1455 = vmatprep.subr.mxu0 %v590
        %1456 = vmatpush1.msra.mxu0 %v589
        %1457 = vmatprep.subr.mxu0 %v598
        %1458 = vmatpush1.msra.mxu0 %v597
        %1459 = vmatprep.subr.mxu0 %v606
        %1460 = vmatpush1.msra.mxu0 %v605
        %1461 = vmatprep.subr.mxu0 %v614
        %1462 = vmatpush1.msra.mxu0 %v613
        %1463 = vmatprep.subr.mxu0 %v622
        %1464 = vmatpush1.msra.mxu0 %v621
        %1465 = vmatprep.subr.mxu0 %v630
        %1466 = vmatpush1.msra.mxu0 %v629
        %1467 = vmatprep.subr.mxu0 %v638
        %1468 = vmatpush1.msra.mxu0 %v637
        %1469 = vmatprep.subr.mxu0 %v646
        %1470 = vmatpush1.msra.mxu0 %v645
        %1471 = vmatprep.subr.mxu0 %v654
        %1472 = vmatpush1.msra.mxu0 %v653
        %1473 = vmatprep.subr.mxu0 %v662
        %1474 = vmatpush1.msra.mxu0 %v661
        %1475 = vmatprep.subr.mxu0 %v670
        %1476 = vmatpush1.msra.mxu0 %v669
        %1477 = vmatprep.subr.mxu0 %v678
        %1478 = vmatpush1.msra.mxu0 %v677
        %1479 = vmatprep.subr.mxu0 %v686
        %1480 = vmatpush1.msra.mxu0 %v685
        %1481 = vmatprep.subr.mxu0 %v694
        %1482 = vmatpush1.msra.mxu0 %v693
        %1483 = vmatprep.subr.mxu0 %v702
        %1484 = vmatpush1.msra.mxu0 %v701
        %1485 = vmatprep.subr.mxu0 %v710
        %1486 = vmatpush1.msra.mxu0 %v709
        %1487 = vmatprep.subr.mxu0 %v718
        %1488 = vmatpush1.msra.mxu0 %v717
        %1489 = vmatprep.subr.mxu0 %v726
        %1490 = vmatpush1.msra.mxu0 %v725
        %1491 = vmatprep.subr.mxu0 %v734
        %1492 = vmatpush1.msra.mxu0 %v733
        %1493 = vmatprep.subr.mxu0 %v742
        %1494 = vmatpush1.msra.mxu0 %v741
        %1495 = vmatprep.subr.mxu0 %v750
        %1496 = vmatpush1.msra.mxu0 %v749
        %1497 = vmatprep.subr.mxu0 %v758
        %1498 = vmatpush1.msra.mxu0 %v757
        %1499 = vmatprep.subr.mxu0 %v766
        %1500 = vmatpush1.msra.mxu0 %v765
        %1501 = vmatprep.subr.mxu0 %v774
        %1502 = vmatpush1.msra.mxu0 %v773
        %1503 = vmatprep.subr.mxu0 %v782
        %1504 = vmatpush1.msra.mxu0 %v781
        %1505 = vmatprep.subr.mxu0 %v790
        %1506 = vmatpush1.msra.mxu0 %v789
        %1507 = vmatprep.subr.mxu0 %v798
        %1508 = vmatpush1.msra.mxu0 %v797
        %1509 = vmatprep.subr.mxu0 %v806
        %1510 = vmatpush1.msra.mxu0 %v805
        %1511 = vmatprep.subr.mxu0 %v814
        %1512 = vmatpush1.msra.mxu0 %v813
        %1513 = vmatprep.subr.mxu0 %v822
        %1514 = vmatpush1.msra.mxu0 %v821
        %1515 = vmatprep.subr.mxu0 %v830
        %1516 = vmatpush1.msra.mxu0 %v829
        %1517 = vmatprep.subr.mxu0 %v838
        %1518 = vmatpush1.msra.mxu0 %v837
        %1519 = vmatprep.mubr.f32.mxu0 %v580
        %1520 = vmatmul.mubr.f32.gmra.mrb[0].mxu0 %v579
        %v1521 = vpop.f32.mrb[0].mxu0
        %v1522 = vadd.f32 %v1238, %v1521
        %v1523 = vpop.f32.mrb[0].mxu0
        %v1524 = vadd.f32 %v1240, %v1523
        %1525 = vdwg.mxu0
        %1526 = vmatprep.subr.mxu0 %v592
        %1527 = vmatpush1.msra.mxu0 %v591
        %1528 = vmatprep.subr.mxu0 %v600
        %1529 = vmatpush1.msra.mxu0 %v599
        %1530 = vmatprep.subr.mxu0 %v608
        %1531 = vmatpush1.msra.mxu0 %v607
        %1532 = vmatprep.subr.mxu0 %v616
        %1533 = vmatpush1.msra.mxu0 %v615
        %1534 = vmatprep.subr.mxu0 %v624
        %1535 = vmatpush1.msra.mxu0 %v623
        %1536 = vmatprep.subr.mxu0 %v632
        %1537 = vmatpush1.msra.mxu0 %v631
        %1538 = vmatprep.subr.mxu0 %v640
        %1539 = vmatpush1.msra.mxu0 %v639
        %1540 = vmatprep.subr.mxu0 %v648
        %1541 = vmatpush1.msra.mxu0 %v647
        %1542 = vmatprep.subr.mxu0 %v656
        %1543 = vmatpush1.msra.mxu0 %v655
        %1544 = vmatprep.subr.mxu0 %v664
        %1545 = vmatpush1.msra.mxu0 %v663
        %1546 = vmatprep.subr.mxu0 %v672
        %1547 = vmatpush1.msra.mxu0 %v671
        %1548 = vmatprep.subr.mxu0 %v680
        %1549 = vmatpush1.msra.mxu0 %v679
        %1550 = vmatprep.subr.mxu0 %v688
        %1551 = vmatpush1.msra.mxu0 %v687
        %1552 = vmatprep.subr.mxu0 %v696
        %1553 = vmatpush1.msra.mxu0 %v695
        %1554 = vmatprep.subr.mxu0 %v704
        %1555 = vmatpush1.msra.mxu0 %v703
        %1556 = vmatprep.subr.mxu0 %v712
        %1557 = vmatpush1.msra.mxu0 %v711
        %1558 = vmatprep.subr.mxu0 %v720
        %1559 = vmatpush1.msra.mxu0 %v719
        %1560 = vmatprep.subr.mxu0 %v728
        %1561 = vmatpush1.msra.mxu0 %v727
        %1562 = vmatprep.subr.mxu0 %v736
        %1563 = vmatpush1.msra.mxu0 %v735
        %1564 = vmatprep.subr.mxu0 %v744
        %1565 = vmatpush1.msra.mxu0 %v743
        %1566 = vmatprep.subr.mxu0 %v752
        %1567 = vmatpush1.msra.mxu0 %v751
        %1568 = vmatprep.subr.mxu0 %v760
        %1569 = vmatpush1.msra.mxu0 %v759
        %1570 = vmatprep.subr.mxu0 %v768
        %1571 = vmatpush1.msra.mxu0 %v767
        %1572 = vmatprep.subr.mxu0 %v776
        %1573 = vmatpush1.msra.mxu0 %v775
        %1574 = vmatprep.subr.mxu0 %v784
        %1575 = vmatpush1.msra.mxu0 %v783
        %1576 = vmatprep.subr.mxu0 %v792
        %1577 = vmatpush1.msra.mxu0 %v791
        %1578 = vmatprep.subr.mxu0 %v800
        %1579 = vmatpush1.msra.mxu0 %v799
        %1580 = vmatprep.subr.mxu0 %v808
        %1581 = vmatpush1.msra.mxu0 %v807
        %1582 = vmatprep.subr.mxu0 %v816
        %1583 = vmatpush1.msra.mxu0 %v815
        %1584 = vmatprep.subr.mxu0 %v824
        %1585 = vmatpush1.msra.mxu0 %v823
        %1586 = vmatprep.subr.mxu0 %v832
        %1587 = vmatpush1.msra.mxu0 %v831
        %1588 = vmatprep.subr.mxu0 %v840
        %1589 = vmatpush1.msra.mxu0 %v839
        %1590 = vmatprep.mubr.f32.mxu0 %v580
        %1591 = vmatmul.mubr.f32.gmra.mrb[0].mxu0 %v579
        %v1592 = vpop.f32.mrb[0].mxu0
        %v1593 = vadd.f32 %v1309, %v1592
        %v1594 = vpop.f32.mrb[0].mxu0
        %v1595 = vadd.f32 %v1311, %v1594
        %1596 = vdwg.mxu0
        %1597 = vmatprep.subr.mxu0 %v594
        %1598 = vmatpush1.msra.mxu0 %v593
        %1599 = vmatprep.subr.mxu0 %v602
        %1600 = vmatpush1.msra.mxu0 %v601
        %1601 = vmatprep.subr.mxu0 %v610
        %1602 = vmatpush1.msra.mxu0 %v609
        %1603 = vmatprep.subr.mxu0 %v618
        %1604 = vmatpush1.msra.mxu0 %v617
        %1605 = vmatprep.subr.mxu0 %v626
        %1606 = vmatpush1.msra.mxu0 %v625
        %1607 = vmatprep.subr.mxu0 %v634
        %1608 = vmatpush1.msra.mxu0 %v633
        %1609 = vmatprep.subr.mxu0 %v642
        %1610 = vmatpush1.msra.mxu0 %v641
        %1611 = vmatprep.subr.mxu0 %v650
        %1612 = vmatpush1.msra.mxu0 %v649
        %1613 = vmatprep.subr.mxu0 %v658
        %1614 = vmatpush1.msra.mxu0 %v657
        %1615 = vmatprep.subr.mxu0 %v666
        %1616 = vmatpush1.msra.mxu0 %v665
        %1617 = vmatprep.subr.mxu0 %v674
        %1618 = vmatpush1.msra.mxu0 %v673
        %1619 = vmatprep.subr.mxu0 %v682
        %1620 = vmatpush1.msra.mxu0 %v681
        %1621 = vmatprep.subr.mxu0 %v690
        %1622 = vmatpush1.msra.mxu0 %v689
        %1623 = vmatprep.subr.mxu0 %v698
        %1624 = vmatpush1.msra.mxu0 %v697
        %1625 = vmatprep.subr.mxu0 %v706
        %1626 = vmatpush1.msra.mxu0 %v705
        %1627 = vmatprep.subr.mxu0 %v714
        %1628 = vmatpush1.msra.mxu0 %v713
        %1629 = vmatprep.subr.mxu0 %v722
        %1630 = vmatpush1.msra.mxu0 %v721
        %1631 = vmatprep.subr.mxu0 %v730
        %1632 = vmatpush1.msra.mxu0 %v729
        %1633 = vmatprep.subr.mxu0 %v738
        %1634 = vmatpush1.msra.mxu0 %v737
        %1635 = vmatprep.subr.mxu0 %v746
        %1636 = vmatpush1.msra.mxu0 %v745
        %1637 = vmatprep.subr.mxu0 %v754
        %1638 = vmatpush1.msra.mxu0 %v753
        %1639 = vmatprep.subr.mxu0 %v762
        %1640 = vmatpush1.msra.mxu0 %v761
        %1641 = vmatprep.subr.mxu0 %v770
        %1642 = vmatpush1.msra.mxu0 %v769
        %1643 = vmatprep.subr.mxu0 %v778
        %1644 = vmatpush1.msra.mxu0 %v777
        %1645 = vmatprep.subr.mxu0 %v786
        %1646 = vmatpush1.msra.mxu0 %v785
        %1647 = vmatprep.subr.mxu0 %v794
        %1648 = vmatpush1.msra.mxu0 %v793
        %1649 = vmatprep.subr.mxu0 %v802
        %1650 = vmatpush1.msra.mxu0 %v801
        %1651 = vmatprep.subr.mxu0 %v810
        %1652 = vmatpush1.msra.mxu0 %v809
        %1653 = vmatprep.subr.mxu0 %v818
        %1654 = vmatpush1.msra.mxu0 %v817
        %1655 = vmatprep.subr.mxu0 %v826
        %1656 = vmatpush1.msra.mxu0 %v825
        %1657 = vmatprep.subr.mxu0 %v834
        %1658 = vmatpush1.msra.mxu0 %v833
        %1659 = vmatprep.subr.mxu0 %v842
        %1660 = vmatpush1.msra.mxu0 %v841
        %1661 = vmatprep.mubr.f32.mxu0 %v580
        %1662 = vmatmul.mubr.f32.gmra.mrb[0].mxu0 %v579
        %v1663 = vpop.f32.mrb[0].mxu0
        %v1664 = vadd.f32 %v1380, %v1663
        %v1665 = vpop.f32.mrb[0].mxu0
        %v1666 = vadd.f32 %v1382, %v1665
        %1667 = vdwg.mxu0
        %s1668 = scalar_lea.vmem [#allocation4], 4096
        %v1669 = vld [vmem:[%s1668] sm:$0xff]
        %v1670 = vld [vmem:[%s1668 + $0x8] sm:$0xff]
        %v1671 = vld [vmem:[%s1668 + $0x10] sm:$0xff]
        %v1672 = vld [vmem:[%s1668 + $0x18] sm:$0xff]
        %v1673 = vld [vmem:[%s1668 + $0x20] sm:$0xff]
        %v1674 = vld [vmem:[%s1668 + $0x28] sm:$0xff]
        %v1675 = vld [vmem:[%s1668 + $0x30] sm:$0xff]
        %v1676 = vld [vmem:[%s1668 + $0x38] sm:$0xff]
        %v1677 = vld [vmem:[%s1668 + $0x40] sm:$0xff]
        %v1678 = vld [vmem:[%s1668 + $0x48] sm:$0xff]
        %v1679 = vld [vmem:[%s1668 + $0x50] sm:$0xff]
        %v1680 = vld [vmem:[%s1668 + $0x58] sm:$0xff]
        %v1681 = vld [vmem:[%s1668 + $0x60] sm:$0xff]
        %v1682 = vld [vmem:[%s1668 + $0x68] sm:$0xff]
        %v1683 = vld [vmem:[%s1668 + $0x70] sm:$0xff]
        %v1684 = vld [vmem:[%s1668 + $0x78] sm:$0xff]
        %v1685 = vld [vmem:[%s1668 + $0x80] sm:$0xff]
        %v1686 = vld [vmem:[%s1668 + $0x88] sm:$0xff]
        %v1687 = vld [vmem:[%s1668 + $0x90] sm:$0xff]
        %v1688 = vld [vmem:[%s1668 + $0x98] sm:$0xff]
        %v1689 = vld [vmem:[%s1668 + $0xa0] sm:$0xff]
        %v1690 = vld [vmem:[%s1668 + $0xa8] sm:$0xff]
        %v1691 = vld [vmem:[%s1668 + $0xb0] sm:$0xff]
        %v1692 = vld [vmem:[%s1668 + $0xb8] sm:$0xff]
        %v1693 = vld [vmem:[%s1668 + $0xc0] sm:$0xff]
        %v1694 = vld [vmem:[%s1668 + $0xc8] sm:$0xff]
        %v1695 = vld [vmem:[%s1668 + $0xd0] sm:$0xff]
        %v1696 = vld [vmem:[%s1668 + $0xd8] sm:$0xff]
        %v1697 = vld [vmem:[%s1668 + $0xe0] sm:$0xff]
        %v1698 = vld [vmem:[%s1668 + $0xe8] sm:$0xff]
        %v1699 = vld [vmem:[%s1668 + $0xf0] sm:$0xff]
        %v1700 = vld [vmem:[%s1668 + $0xf8] sm:$0xff]
        %v1701 = vld [vmem:[%s1668 + $0x100] sm:$0xff]
        %v1702 = vld [vmem:[%s1668 + $0x108] sm:$0xff]
        %v1703 = vld [vmem:[%s1668 + $0x110] sm:$0xff]
        %v1704 = vld [vmem:[%s1668 + $0x118] sm:$0xff]
        %v1705 = vld [vmem:[%s1668 + $0x120] sm:$0xff]
        %v1706 = vld [vmem:[%s1668 + $0x128] sm:$0xff]
        %v1707 = vld [vmem:[%s1668 + $0x130] sm:$0xff]
        %v1708 = vld [vmem:[%s1668 + $0x138] sm:$0xff]
        %v1709 = vld [vmem:[%s1668 + $0x140] sm:$0xff]
        %v1710 = vld [vmem:[%s1668 + $0x148] sm:$0xff]
        %v1711 = vld [vmem:[%s1668 + $0x150] sm:$0xff]
        %v1712 = vld [vmem:[%s1668 + $0x158] sm:$0xff]
        %v1713 = vld [vmem:[%s1668 + $0x160] sm:$0xff]
        %v1714 = vld [vmem:[%s1668 + $0x168] sm:$0xff]
        %v1715 = vld [vmem:[%s1668 + $0x170] sm:$0xff]
        %v1716 = vld [vmem:[%s1668 + $0x178] sm:$0xff]
        %v1717 = vld [vmem:[%s1668 + $0x180] sm:$0xff]
        %v1718 = vld [vmem:[%s1668 + $0x188] sm:$0xff]
        %v1719 = vld [vmem:[%s1668 + $0x190] sm:$0xff]
        %v1720 = vld [vmem:[%s1668 + $0x198] sm:$0xff]
        %v1721 = vld [vmem:[%s1668 + $0x1a0] sm:$0xff]
        %v1722 = vld [vmem:[%s1668 + $0x1a8] sm:$0xff]
        %v1723 = vld [vmem:[%s1668 + $0x1b0] sm:$0xff]
        %v1724 = vld [vmem:[%s1668 + $0x1b8] sm:$0xff]
        %v1725 = vld [vmem:[%s1668 + $0x1c0] sm:$0xff]
        %v1726 = vld [vmem:[%s1668 + $0x1c8] sm:$0xff]
        %v1727 = vld [vmem:[%s1668 + $0x1d0] sm:$0xff]
        %v1728 = vld [vmem:[%s1668 + $0x1d8] sm:$0xff]
        %v1729 = vld [vmem:[%s1668 + $0x1e0] sm:$0xff]
        %v1730 = vld [vmem:[%s1668 + $0x1e8] sm:$0xff]
        %v1731 = vld [vmem:[%s1668 + $0x1f0] sm:$0xff]
        %v1732 = vld [vmem:[%s1668 + $0x1f8] sm:$0xff]
        %v1733 = vld [vmem:[%s1668 + $0x200] sm:$0xff]
        %v1734 = vld [vmem:[%s1668 + $0x208] sm:$0xff]
        %v1735 = vld [vmem:[%s1668 + $0x210] sm:$0xff]
        %v1736 = vld [vmem:[%s1668 + $0x218] sm:$0xff]
        %v1737 = vld [vmem:[%s1668 + $0x220] sm:$0xff]
        %v1738 = vld [vmem:[%s1668 + $0x228] sm:$0xff]
        %v1739 = vld [vmem:[%s1668 + $0x230] sm:$0xff]
        %v1740 = vld [vmem:[%s1668 + $0x238] sm:$0xff]
        %v1741 = vld [vmem:[%s1668 + $0x240] sm:$0xff]
        %v1742 = vld [vmem:[%s1668 + $0x248] sm:$0xff]
        %v1743 = vld [vmem:[%s1668 + $0x250] sm:$0xff]
        %v1744 = vld [vmem:[%s1668 + $0x258] sm:$0xff]
        %v1745 = vld [vmem:[%s1668 + $0x260] sm:$0xff]
        %v1746 = vld [vmem:[%s1668 + $0x268] sm:$0xff]
        %v1747 = vld [vmem:[%s1668 + $0x270] sm:$0xff]
        %v1748 = vld [vmem:[%s1668 + $0x278] sm:$0xff]
        %v1749 = vld [vmem:[%s1668 + $0x280] sm:$0xff]
        %v1750 = vld [vmem:[%s1668 + $0x288] sm:$0xff]
        %v1751 = vld [vmem:[%s1668 + $0x290] sm:$0xff]
        %v1752 = vld [vmem:[%s1668 + $0x298] sm:$0xff]
        %v1753 = vld [vmem:[%s1668 + $0x2a0] sm:$0xff]
        %v1754 = vld [vmem:[%s1668 + $0x2a8] sm:$0xff]
        %v1755 = vld [vmem:[%s1668 + $0x2b0] sm:$0xff]
        %v1756 = vld [vmem:[%s1668 + $0x2b8] sm:$0xff]
        %v1757 = vld [vmem:[%s1668 + $0x2c0] sm:$0xff]
        %v1758 = vld [vmem:[%s1668 + $0x2c8] sm:$0xff]
        %v1759 = vld [vmem:[%s1668 + $0x2d0] sm:$0xff]
        %v1760 = vld [vmem:[%s1668 + $0x2d8] sm:$0xff]
        %v1761 = vld [vmem:[%s1668 + $0x2e0] sm:$0xff]
        %v1762 = vld [vmem:[%s1668 + $0x2e8] sm:$0xff]
        %v1763 = vld [vmem:[%s1668 + $0x2f0] sm:$0xff]
        %v1764 = vld [vmem:[%s1668 + $0x2f8] sm:$0xff]
        %v1765 = vld [vmem:[%s1668 + $0x300] sm:$0xff]
        %v1766 = vld [vmem:[%s1668 + $0x308] sm:$0xff]
        %v1767 = vld [vmem:[%s1668 + $0x310] sm:$0xff]
        %v1768 = vld [vmem:[%s1668 + $0x318] sm:$0xff]
        %v1769 = vld [vmem:[%s1668 + $0x320] sm:$0xff]
        %v1770 = vld [vmem:[%s1668 + $0x328] sm:$0xff]
        %v1771 = vld [vmem:[%s1668 + $0x330] sm:$0xff]
        %v1772 = vld [vmem:[%s1668 + $0x338] sm:$0xff]
        %v1773 = vld [vmem:[%s1668 + $0x340] sm:$0xff]
        %v1774 = vld [vmem:[%s1668 + $0x348] sm:$0xff]
        %v1775 = vld [vmem:[%s1668 + $0x350] sm:$0xff]
        %v1776 = vld [vmem:[%s1668 + $0x358] sm:$0xff]
        %v1777 = vld [vmem:[%s1668 + $0x360] sm:$0xff]
        %v1778 = vld [vmem:[%s1668 + $0x368] sm:$0xff]
        %v1779 = vld [vmem:[%s1668 + $0x370] sm:$0xff]
        %v1780 = vld [vmem:[%s1668 + $0x378] sm:$0xff]
        %v1781 = vld [vmem:[%s1668 + $0x380] sm:$0xff]
        %v1782 = vld [vmem:[%s1668 + $0x388] sm:$0xff]
        %v1783 = vld [vmem:[%s1668 + $0x390] sm:$0xff]
        %v1784 = vld [vmem:[%s1668 + $0x398] sm:$0xff]
        %v1785 = vld [vmem:[%s1668 + $0x3a0] sm:$0xff]
        %v1786 = vld [vmem:[%s1668 + $0x3a8] sm:$0xff]
        %v1787 = vld [vmem:[%s1668 + $0x3b0] sm:$0xff]
        %v1788 = vld [vmem:[%s1668 + $0x3b8] sm:$0xff]
        %v1789 = vld [vmem:[%s1668 + $0x3c0] sm:$0xff]
        %v1790 = vld [vmem:[%s1668 + $0x3c8] sm:$0xff]
        %v1791 = vld [vmem:[%s1668 + $0x3d0] sm:$0xff]
        %v1792 = vld [vmem:[%s1668 + $0x3d8] sm:$0xff]
        %v1793 = vld [vmem:[%s1668 + $0x3e0] sm:$0xff]
        %v1794 = vld [vmem:[%s1668 + $0x3e8] sm:$0xff]
        %v1795 = vld [vmem:[%s1668 + $0x3f0] sm:$0xff]
        %v1796 = vld [vmem:[%s1668 + $0x3f8] sm:$0xff]
        %v1797 = vld [vmem:[%s1668 + $0x400] sm:$0xff]
        %v1798 = vld [vmem:[%s1668 + $0x408] sm:$0xff]
        %v1799 = vld [vmem:[%s1668 + $0x410] sm:$0xff]
        %v1800 = vld [vmem:[%s1668 + $0x418] sm:$0xff]
        %v1801 = vld [vmem:[%s1668 + $0x420] sm:$0xff]
        %v1802 = vld [vmem:[%s1668 + $0x428] sm:$0xff]
        %v1803 = vld [vmem:[%s1668 + $0x430] sm:$0xff]
        %v1804 = vld [vmem:[%s1668 + $0x438] sm:$0xff]
        %v1805 = vld [vmem:[%s1668 + $0x440] sm:$0xff]
        %v1806 = vld [vmem:[%s1668 + $0x448] sm:$0xff]
        %v1807 = vld [vmem:[%s1668 + $0x450] sm:$0xff]
        %v1808 = vld [vmem:[%s1668 + $0x458] sm:$0xff]
        %v1809 = vld [vmem:[%s1668 + $0x460] sm:$0xff]
        %v1810 = vld [vmem:[%s1668 + $0x468] sm:$0xff]
        %v1811 = vld [vmem:[%s1668 + $0x470] sm:$0xff]
        %v1812 = vld [vmem:[%s1668 + $0x478] sm:$0xff]
        %v1813 = vld [vmem:[%s1668 + $0x480] sm:$0xff]
        %v1814 = vld [vmem:[%s1668 + $0x488] sm:$0xff]
        %v1815 = vld [vmem:[%s1668 + $0x490] sm:$0xff]
        %v1816 = vld [vmem:[%s1668 + $0x498] sm:$0xff]
        %v1817 = vld [vmem:[%s1668 + $0x4a0] sm:$0xff]
        %v1818 = vld [vmem:[%s1668 + $0x4a8] sm:$0xff]
        %v1819 = vld [vmem:[%s1668 + $0x4b0] sm:$0xff]
        %v1820 = vld [vmem:[%s1668 + $0x4b8] sm:$0xff]
        %v1821 = vld [vmem:[%s1668 + $0x4c0] sm:$0xff]
        %v1822 = vld [vmem:[%s1668 + $0x4c8] sm:$0xff]
        %v1823 = vld [vmem:[%s1668 + $0x4d0] sm:$0xff]
        %v1824 = vld [vmem:[%s1668 + $0x4d8] sm:$0xff]
        %v1825 = vld [vmem:[%s1668 + $0x4e0] sm:$0xff]
        %v1826 = vld [vmem:[%s1668 + $0x4e8] sm:$0xff]
        %v1827 = vld [vmem:[%s1668 + $0x4f0] sm:$0xff]
        %v1828 = vld [vmem:[%s1668 + $0x4f8] sm:$0xff]
        %v1829 = vld [vmem:[%s1668 + $0x500] sm:$0xff]
        %v1830 = vld [vmem:[%s1668 + $0x508] sm:$0xff]
        %v1831 = vld [vmem:[%s1668 + $0x510] sm:$0xff]
        %v1832 = vld [vmem:[%s1668 + $0x518] sm:$0xff]
        %v1833 = vld [vmem:[%s1668 + $0x520] sm:$0xff]
        %v1834 = vld [vmem:[%s1668 + $0x528] sm:$0xff]
        %v1835 = vld [vmem:[%s1668 + $0x530] sm:$0xff]
        %v1836 = vld [vmem:[%s1668 + $0x538] sm:$0xff]
        %v1837 = vld [vmem:[%s1668 + $0x540] sm:$0xff]
        %v1838 = vld [vmem:[%s1668 + $0x548] sm:$0xff]
        %v1839 = vld [vmem:[%s1668 + $0x550] sm:$0xff]
        %v1840 = vld [vmem:[%s1668 + $0x558] sm:$0xff]
        %v1841 = vld [vmem:[%s1668 + $0x560] sm:$0xff]
        %v1842 = vld [vmem:[%s1668 + $0x568] sm:$0xff]
        %v1843 = vld [vmem:[%s1668 + $0x570] sm:$0xff]
        %v1844 = vld [vmem:[%s1668 + $0x578] sm:$0xff]
        %v1845 = vld [vmem:[%s1668 + $0x580] sm:$0xff]
        %v1846 = vld [vmem:[%s1668 + $0x588] sm:$0xff]
        %v1847 = vld [vmem:[%s1668 + $0x590] sm:$0xff]
        %v1848 = vld [vmem:[%s1668 + $0x598] sm:$0xff]
        %v1849 = vld [vmem:[%s1668 + $0x5a0] sm:$0xff]
        %v1850 = vld [vmem:[%s1668 + $0x5a8] sm:$0xff]
        %v1851 = vld [vmem:[%s1668 + $0x5b0] sm:$0xff]
        %v1852 = vld [vmem:[%s1668 + $0x5b8] sm:$0xff]
        %v1853 = vld [vmem:[%s1668 + $0x5c0] sm:$0xff]
        %v1854 = vld [vmem:[%s1668 + $0x5c8] sm:$0xff]
        %v1855 = vld [vmem:[%s1668 + $0x5d0] sm:$0xff]
        %v1856 = vld [vmem:[%s1668 + $0x5d8] sm:$0xff]
        %v1857 = vld [vmem:[%s1668 + $0x5e0] sm:$0xff]
        %v1858 = vld [vmem:[%s1668 + $0x5e8] sm:$0xff]
        %v1859 = vld [vmem:[%s1668 + $0x5f0] sm:$0xff]
        %v1860 = vld [vmem:[%s1668 + $0x5f8] sm:$0xff]
        %v1861 = vld [vmem:[%s1668 + $0x600] sm:$0xff]
        %v1862 = vld [vmem:[%s1668 + $0x608] sm:$0xff]
        %v1863 = vld [vmem:[%s1668 + $0x610] sm:$0xff]
        %v1864 = vld [vmem:[%s1668 + $0x618] sm:$0xff]
        %v1865 = vld [vmem:[%s1668 + $0x620] sm:$0xff]
        %v1866 = vld [vmem:[%s1668 + $0x628] sm:$0xff]
        %v1867 = vld [vmem:[%s1668 + $0x630] sm:$0xff]
        %v1868 = vld [vmem:[%s1668 + $0x638] sm:$0xff]
        %v1869 = vld [vmem:[%s1668 + $0x640] sm:$0xff]
        %v1870 = vld [vmem:[%s1668 + $0x648] sm:$0xff]
        %v1871 = vld [vmem:[%s1668 + $0x650] sm:$0xff]
        %v1872 = vld [vmem:[%s1668 + $0x658] sm:$0xff]
        %v1873 = vld [vmem:[%s1668 + $0x660] sm:$0xff]
        %v1874 = vld [vmem:[%s1668 + $0x668] sm:$0xff]
        %v1875 = vld [vmem:[%s1668 + $0x670] sm:$0xff]
        %v1876 = vld [vmem:[%s1668 + $0x678] sm:$0xff]
        %v1877 = vld [vmem:[%s1668 + $0x680] sm:$0xff]
        %v1878 = vld [vmem:[%s1668 + $0x688] sm:$0xff]
        %v1879 = vld [vmem:[%s1668 + $0x690] sm:$0xff]
        %v1880 = vld [vmem:[%s1668 + $0x698] sm:$0xff]
        %v1881 = vld [vmem:[%s1668 + $0x6a0] sm:$0xff]
        %v1882 = vld [vmem:[%s1668 + $0x6a8] sm:$0xff]
        %v1883 = vld [vmem:[%s1668 + $0x6b0] sm:$0xff]
        %v1884 = vld [vmem:[%s1668 + $0x6b8] sm:$0xff]
        %v1885 = vld [vmem:[%s1668 + $0x6c0] sm:$0xff]
        %v1886 = vld [vmem:[%s1668 + $0x6c8] sm:$0xff]
        %v1887 = vld [vmem:[%s1668 + $0x6d0] sm:$0xff]
        %v1888 = vld [vmem:[%s1668 + $0x6d8] sm:$0xff]
        %v1889 = vld [vmem:[%s1668 + $0x6e0] sm:$0xff]
        %v1890 = vld [vmem:[%s1668 + $0x6e8] sm:$0xff]
        %v1891 = vld [vmem:[%s1668 + $0x6f0] sm:$0xff]
        %v1892 = vld [vmem:[%s1668 + $0x6f8] sm:$0xff]
        %v1893 = vld [vmem:[%s1668 + $0x700] sm:$0xff]
        %v1894 = vld [vmem:[%s1668 + $0x708] sm:$0xff]
        %v1895 = vld [vmem:[%s1668 + $0x710] sm:$0xff]
        %v1896 = vld [vmem:[%s1668 + $0x718] sm:$0xff]
        %v1897 = vld [vmem:[%s1668 + $0x720] sm:$0xff]
        %v1898 = vld [vmem:[%s1668 + $0x728] sm:$0xff]
        %v1899 = vld [vmem:[%s1668 + $0x730] sm:$0xff]
        %v1900 = vld [vmem:[%s1668 + $0x738] sm:$0xff]
        %v1901 = vld [vmem:[%s1668 + $0x740] sm:$0xff]
        %v1902 = vld [vmem:[%s1668 + $0x748] sm:$0xff]
        %v1903 = vld [vmem:[%s1668 + $0x750] sm:$0xff]
        %v1904 = vld [vmem:[%s1668 + $0x758] sm:$0xff]
        %v1905 = vld [vmem:[%s1668 + $0x760] sm:$0xff]
        %v1906 = vld [vmem:[%s1668 + $0x768] sm:$0xff]
        %v1907 = vld [vmem:[%s1668 + $0x770] sm:$0xff]
        %v1908 = vld [vmem:[%s1668 + $0x778] sm:$0xff]
        %v1909 = vld [vmem:[%s1668 + $0x780] sm:$0xff]
        %v1910 = vld [vmem:[%s1668 + $0x788] sm:$0xff]
        %v1911 = vld [vmem:[%s1668 + $0x790] sm:$0xff]
        %v1912 = vld [vmem:[%s1668 + $0x798] sm:$0xff]
        %v1913 = vld [vmem:[%s1668 + $0x7a0] sm:$0xff]
        %v1914 = vld [vmem:[%s1668 + $0x7a8] sm:$0xff]
        %v1915 = vld [vmem:[%s1668 + $0x7b0] sm:$0xff]
        %v1916 = vld [vmem:[%s1668 + $0x7b8] sm:$0xff]
        %v1917 = vld [vmem:[%s1668 + $0x7c0] sm:$0xff]
        %v1918 = vld [vmem:[%s1668 + $0x7c8] sm:$0xff]
        %v1919 = vld [vmem:[%s1668 + $0x7d0] sm:$0xff]
        %v1920 = vld [vmem:[%s1668 + $0x7d8] sm:$0xff]
        %v1921 = vld [vmem:[%s1668 + $0x7e0] sm:$0xff]
        %v1922 = vld [vmem:[%s1668 + $0x7e8] sm:$0xff]
        %v1923 = vld [vmem:[%s1668 + $0x7f0] sm:$0xff]
        %v1924 = vld [vmem:[%s1668 + $0x7f8] sm:$0xff]
        %1925 = vmatprep.subr.mxu0 %v1670
        %1926 = vmatpush1.msra.mxu0 %v1669
        %1927 = vmatprep.subr.mxu0 %v1678
        %1928 = vmatpush1.msra.mxu0 %v1677
        %1929 = vmatprep.subr.mxu0 %v1686
        %1930 = vmatpush1.msra.mxu0 %v1685
        %1931 = vmatprep.subr.mxu0 %v1694
        %1932 = vmatpush1.msra.mxu0 %v1693
        %1933 = vmatprep.subr.mxu0 %v1702
        %1934 = vmatpush1.msra.mxu0 %v1701
        %1935 = vmatprep.subr.mxu0 %v1710
        %1936 = vmatpush1.msra.mxu0 %v1709
        %1937 = vmatprep.subr.mxu0 %v1718
        %1938 = vmatpush1.msra.mxu0 %v1717
        %1939 = vmatprep.subr.mxu0 %v1726
        %1940 = vmatpush1.msra.mxu0 %v1725
        %1941 = vmatprep.subr.mxu0 %v1734
        %1942 = vmatpush1.msra.mxu0 %v1733
        %1943 = vmatprep.subr.mxu0 %v1742
        %1944 = vmatpush1.msra.mxu0 %v1741
        %1945 = vmatprep.subr.mxu0 %v1750
        %1946 = vmatpush1.msra.mxu0 %v1749
        %1947 = vmatprep.subr.mxu0 %v1758
        %1948 = vmatpush1.msra.mxu0 %v1757
        %1949 = vmatprep.subr.mxu0 %v1766
        %1950 = vmatpush1.msra.mxu0 %v1765
        %1951 = vmatprep.subr.mxu0 %v1774
        %1952 = vmatpush1.msra.mxu0 %v1773
        %1953 = vmatprep.subr.mxu0 %v1782
        %1954 = vmatpush1.msra.mxu0 %v1781
        %1955 = vmatprep.subr.mxu0 %v1790
        %1956 = vmatpush1.msra.mxu0 %v1789
        %1957 = vmatprep.subr.mxu0 %v1798
        %1958 = vmatpush1.msra.mxu0 %v1797
        %1959 = vmatprep.subr.mxu0 %v1806
        %1960 = vmatpush1.msra.mxu0 %v1805
        %1961 = vmatprep.subr.mxu0 %v1814
        %1962 = vmatpush1.msra.mxu0 %v1813
        %1963 = vmatprep.subr.mxu0 %v1822
        %1964 = vmatpush1.msra.mxu0 %v1821
        %1965 = vmatprep.subr.mxu0 %v1830
        %1966 = vmatpush1.msra.mxu0 %v1829
        %1967 = vmatprep.subr.mxu0 %v1838
        %1968 = vmatpush1.msra.mxu0 %v1837
        %1969 = vmatprep.subr.mxu0 %v1846
        %1970 = vmatpush1.msra.mxu0 %v1845
        %1971 = vmatprep.subr.mxu0 %v1854
        %1972 = vmatpush1.msra.mxu0 %v1853
        %1973 = vmatprep.subr.mxu0 %v1862
        %1974 = vmatpush1.msra.mxu0 %v1861
        %1975 = vmatprep.subr.mxu0 %v1870
        %1976 = vmatpush1.msra.mxu0 %v1869
        %1977 = vmatprep.subr.mxu0 %v1878
        %1978 = vmatpush1.msra.mxu0 %v1877
        %1979 = vmatprep.subr.mxu0 %v1886
        %1980 = vmatpush1.msra.mxu0 %v1885
        %1981 = vmatprep.subr.mxu0 %v1894
        %1982 = vmatpush1.msra.mxu0 %v1893
        %1983 = vmatprep.subr.mxu0 %v1902
        %1984 = vmatpush1.msra.mxu0 %v1901
        %1985 = vmatprep.subr.mxu0 %v1910
        %1986 = vmatpush1.msra.mxu0 %v1909
        %1987 = vmatprep.subr.mxu0 %v1918
        %1988 = vmatpush1.msra.mxu0 %v1917
        %1989 = vmatprep.mubr.f32.mxu0 %v584
        %1990 = vmatmul.mubr.f32.gmra.mrb[0].mxu0 %v583
        %v1991 = vpop.f32.mrb[0].mxu0
        %v1992 = vadd.f32 0.0, %v1991
        %v1993 = vpop.f32.mrb[0].mxu0
        %v1994 = vadd.f32 0.0, %v1993
        %1995 = vdwg.mxu0
        %1996 = vmatprep.subr.mxu0 %v1672
        %1997 = vmatpush1.msra.mxu0 %v1671
        %1998 = vmatprep.subr.mxu0 %v1680
        %1999 = vmatpush1.msra.mxu0 %v1679
        %2000 = vmatprep.subr.mxu0 %v1688
        %2001 = vmatpush1.msra.mxu0 %v1687
        %2002 = vmatprep.subr.mxu0 %v1696
        %2003 = vmatpush1.msra.mxu0 %v1695
        %2004 = vmatprep.subr.mxu0 %v1704
        %2005 = vmatpush1.msra.mxu0 %v1703
        %2006 = vmatprep.subr.mxu0 %v1712
        %2007 = vmatpush1.msra.mxu0 %v1711
        %2008 = vmatprep.subr.mxu0 %v1720
        %2009 = vmatpush1.msra.mxu0 %v1719
        %2010 = vmatprep.subr.mxu0 %v1728
        %2011 = vmatpush1.msra.mxu0 %v1727
        %2012 = vmatprep.subr.mxu0 %v1736
        %2013 = vmatpush1.msra.mxu0 %v1735
        %2014 = vmatprep.subr.mxu0 %v1744
        %2015 = vmatpush1.msra.mxu0 %v1743
        %2016 = vmatprep.subr.mxu0 %v1752
        %2017 = vmatpush1.msra.mxu0 %v1751
        %2018 = vmatprep.subr.mxu0 %v1760
        %2019 = vmatpush1.msra.mxu0 %v1759
        %2020 = vmatprep.subr.mxu0 %v1768
        %2021 = vmatpush1.msra.mxu0 %v1767
        %2022 = vmatprep.subr.mxu0 %v1776
        %2023 = vmatpush1.msra.mxu0 %v1775
        %2024 = vmatprep.subr.mxu0 %v1784
        %2025 = vmatpush1.msra.mxu0 %v1783
        %2026 = vmatprep.subr.mxu0 %v1792
        %2027 = vmatpush1.msra.mxu0 %v1791
        %2028 = vmatprep.subr.mxu0 %v1800
        %2029 = vmatpush1.msra.mxu0 %v1799
        %2030 = vmatprep.subr.mxu0 %v1808
        %2031 = vmatpush1.msra.mxu0 %v1807
        %2032 = vmatprep.subr.mxu0 %v1816
        %2033 = vmatpush1.msra.mxu0 %v1815
        %2034 = vmatprep.subr.mxu0 %v1824
        %2035 = vmatpush1.msra.mxu0 %v1823
        %2036 = vmatprep.subr.mxu0 %v1832
        %2037 = vmatpush1.msra.mxu0 %v1831
        %2038 = vmatprep.subr.mxu0 %v1840
        %2039 = vmatpush1.msra.mxu0 %v1839
        %2040 = vmatprep.subr.mxu0 %v1848
        %2041 = vmatpush1.msra.mxu0 %v1847
        %2042 = vmatprep.subr.mxu0 %v1856
        %2043 = vmatpush1.msra.mxu0 %v1855
        %2044 = vmatprep.subr.mxu0 %v1864
        %2045 = vmatpush1.msra.mxu0 %v1863
        %2046 = vmatprep.subr.mxu0 %v1872
        %2047 = vmatpush1.msra.mxu0 %v1871
        %2048 = vmatprep.subr.mxu0 %v1880
        %2049 = vmatpush1.msra.mxu0 %v1879
        %2050 = vmatprep.subr.mxu0 %v1888
        %2051 = vmatpush1.msra.mxu0 %v1887
        %2052 = vmatprep.subr.mxu0 %v1896
        %2053 = vmatpush1.msra.mxu0 %v1895
        %2054 = vmatprep.subr.mxu0 %v1904
        %2055 = vmatpush1.msra.mxu0 %v1903
        %2056 = vmatprep.subr.mxu0 %v1912
        %2057 = vmatpush1.msra.mxu0 %v1911
        %2058 = vmatprep.subr.mxu0 %v1920
        %2059 = vmatpush1.msra.mxu0 %v1919
        %2060 = vmatprep.mubr.f32.mxu0 %v584
        %2061 = vmatmul.mubr.f32.gmra.mrb[0].mxu0 %v583
        %v2062 = vpop.f32.mrb[0].mxu0
        %v2063 = vadd.f32 0.0, %v2062
        %v2064 = vpop.f32.mrb[0].mxu0
        %v2065 = vadd.f32 0.0, %v2064
        %2066 = vdwg.mxu0
        %2067 = vmatprep.subr.mxu0 %v1674
        %2068 = vmatpush1.msra.mxu0 %v1673
        %2069 = vmatprep.subr.mxu0 %v1682
        %2070 = vmatpush1.msra.mxu0 %v1681
        %2071 = vmatprep.subr.mxu0 %v1690
        %2072 = vmatpush1.msra.mxu0 %v1689
        %2073 = vmatprep.subr.mxu0 %v1698
        %2074 = vmatpush1.msra.mxu0 %v1697
        %2075 = vmatprep.subr.mxu0 %v1706
        %2076 = vmatpush1.msra.mxu0 %v1705
        %2077 = vmatprep.subr.mxu0 %v1714
        %2078 = vmatpush1.msra.mxu0 %v1713
        %2079 = vmatprep.subr.mxu0 %v1722
        %2080 = vmatpush1.msra.mxu0 %v1721
        %2081 = vmatprep.subr.mxu0 %v1730
        %2082 = vmatpush1.msra.mxu0 %v1729
        %2083 = vmatprep.subr.mxu0 %v1738
        %2084 = vmatpush1.msra.mxu0 %v1737
        %2085 = vmatprep.subr.mxu0 %v1746
        %2086 = vmatpush1.msra.mxu0 %v1745
        %2087 = vmatprep.subr.mxu0 %v1754
        %2088 = vmatpush1.msra.mxu0 %v1753
        %2089 = vmatprep.subr.mxu0 %v1762
        %2090 = vmatpush1.msra.mxu0 %v1761
        %2091 = vmatprep.subr.mxu0 %v1770
        %2092 = vmatpush1.msra.mxu0 %v1769
        %2093 = vmatprep.subr.mxu0 %v1778
        %2094 = vmatpush1.msra.mxu0 %v1777
        %2095 = vmatprep.subr.mxu0 %v1786
        %2096 = vmatpush1.msra.mxu0 %v1785
        %2097 = vmatprep.subr.mxu0 %v1794
        %2098 = vmatpush1.msra.mxu0 %v1793
        %2099 = vmatprep.subr.mxu0 %v1802
        %2100 = vmatpush1.msra.mxu0 %v1801
        %2101 = vmatprep.subr.mxu0 %v1810
        %2102 = vmatpush1.msra.mxu0 %v1809
        %2103 = vmatprep.subr.mxu0 %v1818
        %2104 = vmatpush1.msra.mxu0 %v1817
        %2105 = vmatprep.subr.mxu0 %v1826
        %2106 = vmatpush1.msra.mxu0 %v1825
        %2107 = vmatprep.subr.mxu0 %v1834
        %2108 = vmatpush1.msra.mxu0 %v1833
        %2109 = vmatprep.subr.mxu0 %v1842
        %2110 = vmatpush1.msra.mxu0 %v1841
        %2111 = vmatprep.subr.mxu0 %v1850
        %2112 = vmatpush1.msra.mxu0 %v1849
        %2113 = vmatprep.subr.mxu0 %v1858
        %2114 = vmatpush1.msra.mxu0 %v1857
        %2115 = vmatprep.subr.mxu0 %v1866
        %2116 = vmatpush1.msra.mxu0 %v1865
        %2117 = vmatprep.subr.mxu0 %v1874
        %2118 = vmatpush1.msra.mxu0 %v1873
        %2119 = vmatprep.subr.mxu0 %v1882
        %2120 = vmatpush1.msra.mxu0 %v1881
        %2121 = vmatprep.subr.mxu0 %v1890
        %2122 = vmatpush1.msra.mxu0 %v1889
        %2123 = vmatprep.subr.mxu0 %v1898
        %2124 = vmatpush1.msra.mxu0 %v1897
        %2125 = vmatprep.subr.mxu0 %v1906
        %2126 = vmatpush1.msra.mxu0 %v1905
        %2127 = vmatprep.subr.mxu0 %v1914
        %2128 = vmatpush1.msra.mxu0 %v1913
        %2129 = vmatprep.subr.mxu0 %v1922
        %2130 = vmatpush1.msra.mxu0 %v1921
        %2131 = vmatprep.mubr.f32.mxu0 %v584
        %2132 = vmatmul.mubr.f32.gmra.mrb[0].mxu0 %v583
        %v2133 = vpop.f32.mrb[0].mxu0
        %v2134 = vadd.f32 0.0, %v2133
        %v2135 = vpop.f32.mrb[0].mxu0
        %v2136 = vadd.f32 0.0, %v2135
        %2137 = vdwg.mxu0
        %2138 = vmatprep.subr.mxu0 %v1676
        %2139 = vmatpush1.msra.mxu0 %v1675
        %2140 = vmatprep.subr.mxu0 %v1684
        %2141 = vmatpush1.msra.mxu0 %v1683
        %2142 = vmatprep.subr.mxu0 %v1692
        %2143 = vmatpush1.msra.mxu0 %v1691
        %2144 = vmatprep.subr.mxu0 %v1700
        %2145 = vmatpush1.msra.mxu0 %v1699
        %2146 = vmatprep.subr.mxu0 %v1708
        %2147 = vmatpush1.msra.mxu0 %v1707
        %2148 = vmatprep.subr.mxu0 %v1716
        %2149 = vmatpush1.msra.mxu0 %v1715
        %2150 = vmatprep.subr.mxu0 %v1724
        %2151 = vmatpush1.msra.mxu0 %v1723
        %2152 = vmatprep.subr.mxu0 %v1732
        %2153 = vmatpush1.msra.mxu0 %v1731
        %2154 = vmatprep.subr.mxu0 %v1740
        %2155 = vmatpush1.msra.mxu0 %v1739
        %2156 = vmatprep.subr.mxu0 %v1748
        %2157 = vmatpush1.msra.mxu0 %v1747
        %2158 = vmatprep.subr.mxu0 %v1756
        %2159 = vmatpush1.msra.mxu0 %v1755
        %2160 = vmatprep.subr.mxu0 %v1764
        %2161 = vmatpush1.msra.mxu0 %v1763
        %2162 = vmatprep.subr.mxu0 %v1772
        %2163 = vmatpush1.msra.mxu0 %v1771
        %2164 = vmatprep.subr.mxu0 %v1780
        %2165 = vmatpush1.msra.mxu0 %v1779
        %2166 = vmatprep.subr.mxu0 %v1788
        %2167 = vmatpush1.msra.mxu0 %v1787
        %2168 = vmatprep.subr.mxu0 %v1796
        %2169 = vmatpush1.msra.mxu0 %v1795
        %2170 = vmatprep.subr.mxu0 %v1804
        %2171 = vmatpush1.msra.mxu0 %v1803
        %2172 = vmatprep.subr.mxu0 %v1812
        %2173 = vmatpush1.msra.mxu0 %v1811
        %2174 = vmatprep.subr.mxu0 %v1820
        %2175 = vmatpush1.msra.mxu0 %v1819
        %2176 = vmatprep.subr.mxu0 %v1828
        %2177 = vmatpush1.msra.mxu0 %v1827
        %2178 = vmatprep.subr.mxu0 %v1836
        %2179 = vmatpush1.msra.mxu0 %v1835
        %2180 = vmatprep.subr.mxu0 %v1844
        %2181 = vmatpush1.msra.mxu0 %v1843
        %2182 = vmatprep.subr.mxu0 %v1852
        %2183 = vmatpush1.msra.mxu0 %v1851
        %2184 = vmatprep.subr.mxu0 %v1860
        %2185 = vmatpush1.msra.mxu0 %v1859
        %2186 = vmatprep.subr.mxu0 %v1868
        %2187 = vmatpush1.msra.mxu0 %v1867
        %2188 = vmatprep.subr.mxu0 %v1876
        %2189 = vmatpush1.msra.mxu0 %v1875
        %2190 = vmatprep.subr.mxu0 %v1884
        %2191 = vmatpush1.msra.mxu0 %v1883
        %2192 = vmatprep.subr.mxu0 %v1892
        %2193 = vmatpush1.msra.mxu0 %v1891
        %2194 = vmatprep.subr.mxu0 %v1900
        %2195 = vmatpush1.msra.mxu0 %v1899
        %2196 = vmatprep.subr.mxu0 %v1908
        %2197 = vmatpush1.msra.mxu0 %v1907
        %2198 = vmatprep.subr.mxu0 %v1916
        %2199 = vmatpush1.msra.mxu0 %v1915
        %2200 = vmatprep.subr.mxu0 %v1924
        %2201 = vmatpush1.msra.mxu0 %v1923
        %2202 = vmatprep.mubr.f32.mxu0 %v584
        %2203 = vmatmul.mubr.f32.gmra.mrb[0].mxu0 %v583
        %v2204 = vpop.f32.mrb[0].mxu0
        %v2205 = vadd.f32 0.0, %v2204
        %v2206 = vpop.f32.mrb[0].mxu0
        %v2207 = vadd.f32 0.0, %v2206
        %2208 = vdwg.mxu0
        %v2209 = vadd.f32 %v1451, %v1992
        %v2210 = vadd.f32 %v1453, %v1994
        %v2211 = vadd.f32 %v1522, %v2063
        %v2212 = vadd.f32 %v1524, %v2065
        %v2213 = vadd.f32 %v1593, %v2134
        %v2214 = vadd.f32 %v1595, %v2136
        %v2215 = vadd.f32 %v1664, %v2205
        %v2216 = vadd.f32 %v1666, %v2207
        %s2217 = scalar_lea.vmem [#allocation4], 6144
        %v2218 = vld [vmem:[%s2217] sm:$0xff]
        %v2219 = vld [vmem:[%s2217 + $0x8] sm:$0xff]
        %v2220 = vld [vmem:[%s2217 + $0x10] sm:$0xff]
        %v2221 = vld [vmem:[%s2217 + $0x18] sm:$0xff]
        %v2222 = vld [vmem:[%s2217 + $0x20] sm:$0xff]
        %v2223 = vld [vmem:[%s2217 + $0x28] sm:$0xff]
        %v2224 = vld [vmem:[%s2217 + $0x30] sm:$0xff]
        %v2225 = vld [vmem:[%s2217 + $0x38] sm:$0xff]
        %v2226 = vld [vmem:[%s2217 + $0x40] sm:$0xff]
        %v2227 = vld [vmem:[%s2217 + $0x48] sm:$0xff]
        %v2228 = vld [vmem:[%s2217 + $0x50] sm:$0xff]
        %v2229 = vld [vmem:[%s2217 + $0x58] sm:$0xff]
        %v2230 = vld [vmem:[%s2217 + $0x60] sm:$0xff]
        %v2231 = vld [vmem:[%s2217 + $0x68] sm:$0xff]
        %v2232 = vld [vmem:[%s2217 + $0x70] sm:$0xff]
        %v2233 = vld [vmem:[%s2217 + $0x78] sm:$0xff]
        %v2234 = vld [vmem:[%s2217 + $0x80] sm:$0xff]
        %v2235 = vld [vmem:[%s2217 + $0x88] sm:$0xff]
        %v2236 = vld [vmem:[%s2217 + $0x90] sm:$0xff]
        %v2237 = vld [vmem:[%s2217 + $0x98] sm:$0xff]
        %v2238 = vld [vmem:[%s2217 + $0xa0] sm:$0xff]
        %v2239 = vld [vmem:[%s2217 + $0xa8] sm:$0xff]
        %v2240 = vld [vmem:[%s2217 + $0xb0] sm:$0xff]
        %v2241 = vld [vmem:[%s2217 + $0xb8] sm:$0xff]
        %v2242 = vld [vmem:[%s2217 + $0xc0] sm:$0xff]
        %v2243 = vld [vmem:[%s2217 + $0xc8] sm:$0xff]
        %v2244 = vld [vmem:[%s2217 + $0xd0] sm:$0xff]
        %v2245 = vld [vmem:[%s2217 + $0xd8] sm:$0xff]
        %v2246 = vld [vmem:[%s2217 + $0xe0] sm:$0xff]
        %v2247 = vld [vmem:[%s2217 + $0xe8] sm:$0xff]
        %v2248 = vld [vmem:[%s2217 + $0xf0] sm:$0xff]
        %v2249 = vld [vmem:[%s2217 + $0xf8] sm:$0xff]
        %v2250 = vld [vmem:[%s2217 + $0x100] sm:$0xff]
        %v2251 = vld [vmem:[%s2217 + $0x108] sm:$0xff]
        %v2252 = vld [vmem:[%s2217 + $0x110] sm:$0xff]
        %v2253 = vld [vmem:[%s2217 + $0x118] sm:$0xff]
        %v2254 = vld [vmem:[%s2217 + $0x120] sm:$0xff]
        %v2255 = vld [vmem:[%s2217 + $0x128] sm:$0xff]
        %v2256 = vld [vmem:[%s2217 + $0x130] sm:$0xff]
        %v2257 = vld [vmem:[%s2217 + $0x138] sm:$0xff]
        %v2258 = vld [vmem:[%s2217 + $0x140] sm:$0xff]
        %v2259 = vld [vmem:[%s2217 + $0x148] sm:$0xff]
        %v2260 = vld [vmem:[%s2217 + $0x150] sm:$0xff]
        %v2261 = vld [vmem:[%s2217 + $0x158] sm:$0xff]
        %v2262 = vld [vmem:[%s2217 + $0x160] sm:$0xff]
        %v2263 = vld [vmem:[%s2217 + $0x168] sm:$0xff]
        %v2264 = vld [vmem:[%s2217 + $0x170] sm:$0xff]
        %v2265 = vld [vmem:[%s2217 + $0x178] sm:$0xff]
        %v2266 = vld [vmem:[%s2217 + $0x180] sm:$0xff]
        %v2267 = vld [vmem:[%s2217 + $0x188] sm:$0xff]
        %v2268 = vld [vmem:[%s2217 + $0x190] sm:$0xff]
        %v2269 = vld [vmem:[%s2217 + $0x198] sm:$0xff]
        %v2270 = vld [vmem:[%s2217 + $0x1a0] sm:$0xff]
        %v2271 = vld [vmem:[%s2217 + $0x1a8] sm:$0xff]
        %v2272 = vld [vmem:[%s2217 + $0x1b0] sm:$0xff]
        %v2273 = vld [vmem:[%s2217 + $0x1b8] sm:$0xff]
        %v2274 = vld [vmem:[%s2217 + $0x1c0] sm:$0xff]
        %v2275 = vld [vmem:[%s2217 + $0x1c8] sm:$0xff]
        %v2276 = vld [vmem:[%s2217 + $0x1d0] sm:$0xff]
        %v2277 = vld [vmem:[%s2217 + $0x1d8] sm:$0xff]
        %v2278 = vld [vmem:[%s2217 + $0x1e0] sm:$0xff]
        %v2279 = vld [vmem:[%s2217 + $0x1e8] sm:$0xff]
        %v2280 = vld [vmem:[%s2217 + $0x1f0] sm:$0xff]
        %v2281 = vld [vmem:[%s2217 + $0x1f8] sm:$0xff]
        %v2282 = vld [vmem:[%s2217 + $0x200] sm:$0xff]
        %v2283 = vld [vmem:[%s2217 + $0x208] sm:$0xff]
        %v2284 = vld [vmem:[%s2217 + $0x210] sm:$0xff]
        %v2285 = vld [vmem:[%s2217 + $0x218] sm:$0xff]
        %v2286 = vld [vmem:[%s2217 + $0x220] sm:$0xff]
        %v2287 = vld [vmem:[%s2217 + $0x228] sm:$0xff]
        %v2288 = vld [vmem:[%s2217 + $0x230] sm:$0xff]
        %v2289 = vld [vmem:[%s2217 + $0x238] sm:$0xff]
        %v2290 = vld [vmem:[%s2217 + $0x240] sm:$0xff]
        %v2291 = vld [vmem:[%s2217 + $0x248] sm:$0xff]
        %v2292 = vld [vmem:[%s2217 + $0x250] sm:$0xff]
        %v2293 = vld [vmem:[%s2217 + $0x258] sm:$0xff]
        %v2294 = vld [vmem:[%s2217 + $0x260] sm:$0xff]
        %v2295 = vld [vmem:[%s2217 + $0x268] sm:$0xff]
        %v2296 = vld [vmem:[%s2217 + $0x270] sm:$0xff]
        %v2297 = vld [vmem:[%s2217 + $0x278] sm:$0xff]
        %v2298 = vld [vmem:[%s2217 + $0x280] sm:$0xff]
        %v2299 = vld [vmem:[%s2217 + $0x288] sm:$0xff]
        %v2300 = vld [vmem:[%s2217 + $0x290] sm:$0xff]
        %v2301 = vld [vmem:[%s2217 + $0x298] sm:$0xff]
        %v2302 = vld [vmem:[%s2217 + $0x2a0] sm:$0xff]
        %v2303 = vld [vmem:[%s2217 + $0x2a8] sm:$0xff]
        %v2304 = vld [vmem:[%s2217 + $0x2b0] sm:$0xff]
        %v2305 = vld [vmem:[%s2217 + $0x2b8] sm:$0xff]
        %v2306 = vld [vmem:[%s2217 + $0x2c0] sm:$0xff]
        %v2307 = vld [vmem:[%s2217 + $0x2c8] sm:$0xff]
        %v2308 = vld [vmem:[%s2217 + $0x2d0] sm:$0xff]
        %v2309 = vld [vmem:[%s2217 + $0x2d8] sm:$0xff]
        %v2310 = vld [vmem:[%s2217 + $0x2e0] sm:$0xff]
        %v2311 = vld [vmem:[%s2217 + $0x2e8] sm:$0xff]
        %v2312 = vld [vmem:[%s2217 + $0x2f0] sm:$0xff]
        %v2313 = vld [vmem:[%s2217 + $0x2f8] sm:$0xff]
        %v2314 = vld [vmem:[%s2217 + $0x300] sm:$0xff]
        %v2315 = vld [vmem:[%s2217 + $0x308] sm:$0xff]
        %v2316 = vld [vmem:[%s2217 + $0x310] sm:$0xff]
        %v2317 = vld [vmem:[%s2217 + $0x318] sm:$0xff]
        %v2318 = vld [vmem:[%s2217 + $0x320] sm:$0xff]
        %v2319 = vld [vmem:[%s2217 + $0x328] sm:$0xff]
        %v2320 = vld [vmem:[%s2217 + $0x330] sm:$0xff]
        %v2321 = vld [vmem:[%s2217 + $0x338] sm:$0xff]
        %v2322 = vld [vmem:[%s2217 + $0x340] sm:$0xff]
        %v2323 = vld [vmem:[%s2217 + $0x348] sm:$0xff]
        %v2324 = vld [vmem:[%s2217 + $0x350] sm:$0xff]
        %v2325 = vld [vmem:[%s2217 + $0x358] sm:$0xff]
        %v2326 = vld [vmem:[%s2217 + $0x360] sm:$0xff]
        %v2327 = vld [vmem:[%s2217 + $0x368] sm:$0xff]
        %v2328 = vld [vmem:[%s2217 + $0x370] sm:$0xff]
        %v2329 = vld [vmem:[%s2217 + $0x378] sm:$0xff]
        %v2330 = vld [vmem:[%s2217 + $0x380] sm:$0xff]
        %v2331 = vld [vmem:[%s2217 + $0x388] sm:$0xff]
        %v2332 = vld [vmem:[%s2217 + $0x390] sm:$0xff]
        %v2333 = vld [vmem:[%s2217 + $0x398] sm:$0xff]
        %v2334 = vld [vmem:[%s2217 + $0x3a0] sm:$0xff]
        %v2335 = vld [vmem:[%s2217 + $0x3a8] sm:$0xff]
        %v2336 = vld [vmem:[%s2217 + $0x3b0] sm:$0xff]
        %v2337 = vld [vmem:[%s2217 + $0x3b8] sm:$0xff]
        %v2338 = vld [vmem:[%s2217 + $0x3c0] sm:$0xff]
        %v2339 = vld [vmem:[%s2217 + $0x3c8] sm:$0xff]
        %v2340 = vld [vmem:[%s2217 + $0x3d0] sm:$0xff]
        %v2341 = vld [vmem:[%s2217 + $0x3d8] sm:$0xff]
        %v2342 = vld [vmem:[%s2217 + $0x3e0] sm:$0xff]
        %v2343 = vld [vmem:[%s2217 + $0x3e8] sm:$0xff]
        %v2344 = vld [vmem:[%s2217 + $0x3f0] sm:$0xff]
        %v2345 = vld [vmem:[%s2217 + $0x3f8] sm:$0xff]
        %v2346 = vld [vmem:[%s2217 + $0x400] sm:$0xff]
        %v2347 = vld [vmem:[%s2217 + $0x408] sm:$0xff]
        %v2348 = vld [vmem:[%s2217 + $0x410] sm:$0xff]
        %v2349 = vld [vmem:[%s2217 + $0x418] sm:$0xff]
        %v2350 = vld [vmem:[%s2217 + $0x420] sm:$0xff]
        %v2351 = vld [vmem:[%s2217 + $0x428] sm:$0xff]
        %v2352 = vld [vmem:[%s2217 + $0x430] sm:$0xff]
        %v2353 = vld [vmem:[%s2217 + $0x438] sm:$0xff]
        %v2354 = vld [vmem:[%s2217 + $0x440] sm:$0xff]
        %v2355 = vld [vmem:[%s2217 + $0x448] sm:$0xff]
        %v2356 = vld [vmem:[%s2217 + $0x450] sm:$0xff]
        %v2357 = vld [vmem:[%s2217 + $0x458] sm:$0xff]
        %v2358 = vld [vmem:[%s2217 + $0x460] sm:$0xff]
        %v2359 = vld [vmem:[%s2217 + $0x468] sm:$0xff]
        %v2360 = vld [vmem:[%s2217 + $0x470] sm:$0xff]
        %v2361 = vld [vmem:[%s2217 + $0x478] sm:$0xff]
        %v2362 = vld [vmem:[%s2217 + $0x480] sm:$0xff]
        %v2363 = vld [vmem:[%s2217 + $0x488] sm:$0xff]
        %v2364 = vld [vmem:[%s2217 + $0x490] sm:$0xff]
        %v2365 = vld [vmem:[%s2217 + $0x498] sm:$0xff]
        %v2366 = vld [vmem:[%s2217 + $0x4a0] sm:$0xff]
        %v2367 = vld [vmem:[%s2217 + $0x4a8] sm:$0xff]
        %v2368 = vld [vmem:[%s2217 + $0x4b0] sm:$0xff]
        %v2369 = vld [vmem:[%s2217 + $0x4b8] sm:$0xff]
        %v2370 = vld [vmem:[%s2217 + $0x4c0] sm:$0xff]
        %v2371 = vld [vmem:[%s2217 + $0x4c8] sm:$0xff]
        %v2372 = vld [vmem:[%s2217 + $0x4d0] sm:$0xff]
        %v2373 = vld [vmem:[%s2217 + $0x4d8] sm:$0xff]
        %v2374 = vld [vmem:[%s2217 + $0x4e0] sm:$0xff]
        %v2375 = vld [vmem:[%s2217 + $0x4e8] sm:$0xff]
        %v2376 = vld [vmem:[%s2217 + $0x4f0] sm:$0xff]
        %v2377 = vld [vmem:[%s2217 + $0x4f8] sm:$0xff]
        %v2378 = vld [vmem:[%s2217 + $0x500] sm:$0xff]
        %v2379 = vld [vmem:[%s2217 + $0x508] sm:$0xff]
        %v2380 = vld [vmem:[%s2217 + $0x510] sm:$0xff]
        %v2381 = vld [vmem:[%s2217 + $0x518] sm:$0xff]
        %v2382 = vld [vmem:[%s2217 + $0x520] sm:$0xff]
        %v2383 = vld [vmem:[%s2217 + $0x528] sm:$0xff]
        %v2384 = vld [vmem:[%s2217 + $0x530] sm:$0xff]
        %v2385 = vld [vmem:[%s2217 + $0x538] sm:$0xff]
        %v2386 = vld [vmem:[%s2217 + $0x540] sm:$0xff]
        %v2387 = vld [vmem:[%s2217 + $0x548] sm:$0xff]
        %v2388 = vld [vmem:[%s2217 + $0x550] sm:$0xff]
        %v2389 = vld [vmem:[%s2217 + $0x558] sm:$0xff]
        %v2390 = vld [vmem:[%s2217 + $0x560] sm:$0xff]
        %v2391 = vld [vmem:[%s2217 + $0x568] sm:$0xff]
        %v2392 = vld [vmem:[%s2217 + $0x570] sm:$0xff]
        %v2393 = vld [vmem:[%s2217 + $0x578] sm:$0xff]
        %v2394 = vld [vmem:[%s2217 + $0x580] sm:$0xff]
        %v2395 = vld [vmem:[%s2217 + $0x588] sm:$0xff]
        %v2396 = vld [vmem:[%s2217 + $0x590] sm:$0xff]
        %v2397 = vld [vmem:[%s2217 + $0x598] sm:$0xff]
        %v2398 = vld [vmem:[%s2217 + $0x5a0] sm:$0xff]
        %v2399 = vld [vmem:[%s2217 + $0x5a8] sm:$0xff]
        %v2400 = vld [vmem:[%s2217 + $0x5b0] sm:$0xff]
        %v2401 = vld [vmem:[%s2217 + $0x5b8] sm:$0xff]
        %v2402 = vld [vmem:[%s2217 + $0x5c0] sm:$0xff]
        %v2403 = vld [vmem:[%s2217 + $0x5c8] sm:$0xff]
        %v2404 = vld [vmem:[%s2217 + $0x5d0] sm:$0xff]
        %v2405 = vld [vmem:[%s2217 + $0x5d8] sm:$0xff]
        %v2406 = vld [vmem:[%s2217 + $0x5e0] sm:$0xff]
        %v2407 = vld [vmem:[%s2217 + $0x5e8] sm:$0xff]
        %v2408 = vld [vmem:[%s2217 + $0x5f0] sm:$0xff]
        %v2409 = vld [vmem:[%s2217 + $0x5f8] sm:$0xff]
        %v2410 = vld [vmem:[%s2217 + $0x600] sm:$0xff]
        %v2411 = vld [vmem:[%s2217 + $0x608] sm:$0xff]
        %v2412 = vld [vmem:[%s2217 + $0x610] sm:$0xff]
        %v2413 = vld [vmem:[%s2217 + $0x618] sm:$0xff]
        %v2414 = vld [vmem:[%s2217 + $0x620] sm:$0xff]
        %v2415 = vld [vmem:[%s2217 + $0x628] sm:$0xff]
        %v2416 = vld [vmem:[%s2217 + $0x630] sm:$0xff]
        %v2417 = vld [vmem:[%s2217 + $0x638] sm:$0xff]
        %v2418 = vld [vmem:[%s2217 + $0x640] sm:$0xff]
        %v2419 = vld [vmem:[%s2217 + $0x648] sm:$0xff]
        %v2420 = vld [vmem:[%s2217 + $0x650] sm:$0xff]
        %v2421 = vld [vmem:[%s2217 + $0x658] sm:$0xff]
        %v2422 = vld [vmem:[%s2217 + $0x660] sm:$0xff]
        %v2423 = vld [vmem:[%s2217 + $0x668] sm:$0xff]
        %v2424 = vld [vmem:[%s2217 + $0x670] sm:$0xff]
        %v2425 = vld [vmem:[%s2217 + $0x678] sm:$0xff]
        %v2426 = vld [vmem:[%s2217 + $0x680] sm:$0xff]
        %v2427 = vld [vmem:[%s2217 + $0x688] sm:$0xff]
        %v2428 = vld [vmem:[%s2217 + $0x690] sm:$0xff]
        %v2429 = vld [vmem:[%s2217 + $0x698] sm:$0xff]
        %v2430 = vld [vmem:[%s2217 + $0x6a0] sm:$0xff]
        %v2431 = vld [vmem:[%s2217 + $0x6a8] sm:$0xff]
        %v2432 = vld [vmem:[%s2217 + $0x6b0] sm:$0xff]
        %v2433 = vld [vmem:[%s2217 + $0x6b8] sm:$0xff]
        %v2434 = vld [vmem:[%s2217 + $0x6c0] sm:$0xff]
        %v2435 = vld [vmem:[%s2217 + $0x6c8] sm:$0xff]
        %v2436 = vld [vmem:[%s2217 + $0x6d0] sm:$0xff]
        %v2437 = vld [vmem:[%s2217 + $0x6d8] sm:$0xff]
        %v2438 = vld [vmem:[%s2217 + $0x6e0] sm:$0xff]
        %v2439 = vld [vmem:[%s2217 + $0x6e8] sm:$0xff]
        %v2440 = vld [vmem:[%s2217 + $0x6f0] sm:$0xff]
        %v2441 = vld [vmem:[%s2217 + $0x6f8] sm:$0xff]
        %v2442 = vld [vmem:[%s2217 + $0x700] sm:$0xff]
        %v2443 = vld [vmem:[%s2217 + $0x708] sm:$0xff]
        %v2444 = vld [vmem:[%s2217 + $0x710] sm:$0xff]
        %v2445 = vld [vmem:[%s2217 + $0x718] sm:$0xff]
        %v2446 = vld [vmem:[%s2217 + $0x720] sm:$0xff]
        %v2447 = vld [vmem:[%s2217 + $0x728] sm:$0xff]
        %v2448 = vld [vmem:[%s2217 + $0x730] sm:$0xff]
        %v2449 = vld [vmem:[%s2217 + $0x738] sm:$0xff]
        %v2450 = vld [vmem:[%s2217 + $0x740] sm:$0xff]
        %v2451 = vld [vmem:[%s2217 + $0x748] sm:$0xff]
        %v2452 = vld [vmem:[%s2217 + $0x750] sm:$0xff]
        %v2453 = vld [vmem:[%s2217 + $0x758] sm:$0xff]
        %v2454 = vld [vmem:[%s2217 + $0x760] sm:$0xff]
        %v2455 = vld [vmem:[%s2217 + $0x768] sm:$0xff]
        %v2456 = vld [vmem:[%s2217 + $0x770] sm:$0xff]
        %v2457 = vld [vmem:[%s2217 + $0x778] sm:$0xff]
        %v2458 = vld [vmem:[%s2217 + $0x780] sm:$0xff]
        %v2459 = vld [vmem:[%s2217 + $0x788] sm:$0xff]
        %v2460 = vld [vmem:[%s2217 + $0x790] sm:$0xff]
        %v2461 = vld [vmem:[%s2217 + $0x798] sm:$0xff]
        %v2462 = vld [vmem:[%s2217 + $0x7a0] sm:$0xff]
        %v2463 = vld [vmem:[%s2217 + $0x7a8] sm:$0xff]
        %v2464 = vld [vmem:[%s2217 + $0x7b0] sm:$0xff]
        %v2465 = vld [vmem:[%s2217 + $0x7b8] sm:$0xff]
        %v2466 = vld [vmem:[%s2217 + $0x7c0] sm:$0xff]
        %v2467 = vld [vmem:[%s2217 + $0x7c8] sm:$0xff]
        %v2468 = vld [vmem:[%s2217 + $0x7d0] sm:$0xff]
        %v2469 = vld [vmem:[%s2217 + $0x7d8] sm:$0xff]
        %v2470 = vld [vmem:[%s2217 + $0x7e0] sm:$0xff]
        %v2471 = vld [vmem:[%s2217 + $0x7e8] sm:$0xff]
        %v2472 = vld [vmem:[%s2217 + $0x7f0] sm:$0xff]
        %v2473 = vld [vmem:[%s2217 + $0x7f8] sm:$0xff]
        %2474 = vmatprep.subr.mxu0 %v2219
        %2475 = vmatpush1.msra.mxu0 %v2218
        %2476 = vmatprep.subr.mxu0 %v2227
        %2477 = vmatpush1.msra.mxu0 %v2226
        %2478 = vmatprep.subr.mxu0 %v2235
        %2479 = vmatpush1.msra.mxu0 %v2234
        %2480 = vmatprep.subr.mxu0 %v2243
        %2481 = vmatpush1.msra.mxu0 %v2242
        %2482 = vmatprep.subr.mxu0 %v2251
        %2483 = vmatpush1.msra.mxu0 %v2250
        %2484 = vmatprep.subr.mxu0 %v2259
        %2485 = vmatpush1.msra.mxu0 %v2258
        %2486 = vmatprep.subr.mxu0 %v2267
        %2487 = vmatpush1.msra.mxu0 %v2266
        %2488 = vmatprep.subr.mxu0 %v2275
        %2489 = vmatpush1.msra.mxu0 %v2274
        %2490 = vmatprep.subr.mxu0 %v2283
        %2491 = vmatpush1.msra.mxu0 %v2282
        %2492 = vmatprep.subr.mxu0 %v2291
        %2493 = vmatpush1.msra.mxu0 %v2290
        %2494 = vmatprep.subr.mxu0 %v2299
        %2495 = vmatpush1.msra.mxu0 %v2298
        %2496 = vmatprep.subr.mxu0 %v2307
        %2497 = vmatpush1.msra.mxu0 %v2306
        %2498 = vmatprep.subr.mxu0 %v2315
        %2499 = vmatpush1.msra.mxu0 %v2314
        %2500 = vmatprep.subr.mxu0 %v2323
        %2501 = vmatpush1.msra.mxu0 %v2322
        %2502 = vmatprep.subr.mxu0 %v2331
        %2503 = vmatpush1.msra.mxu0 %v2330
        %2504 = vmatprep.subr.mxu0 %v2339
        %2505 = vmatpush1.msra.mxu0 %v2338
        %2506 = vmatprep.subr.mxu0 %v2347
        %2507 = vmatpush1.msra.mxu0 %v2346
        %2508 = vmatprep.subr.mxu0 %v2355
        %2509 = vmatpush1.msra.mxu0 %v2354
        %2510 = vmatprep.subr.mxu0 %v2363
        %2511 = vmatpush1.msra.mxu0 %v2362
        %2512 = vmatprep.subr.mxu0 %v2371
        %2513 = vmatpush1.msra.mxu0 %v2370
        %2514 = vmatprep.subr.mxu0 %v2379
        %2515 = vmatpush1.msra.mxu0 %v2378
        %2516 = vmatprep.subr.mxu0 %v2387
        %2517 = vmatpush1.msra.mxu0 %v2386
        %2518 = vmatprep.subr.mxu0 %v2395
        %2519 = vmatpush1.msra.mxu0 %v2394
        %2520 = vmatprep.subr.mxu0 %v2403
        %2521 = vmatpush1.msra.mxu0 %v2402
        %2522 = vmatprep.subr.mxu0 %v2411
        %2523 = vmatpush1.msra.mxu0 %v2410
        %2524 = vmatprep.subr.mxu0 %v2419
        %2525 = vmatpush1.msra.mxu0 %v2418
        %2526 = vmatprep.subr.mxu0 %v2427
        %2527 = vmatpush1.msra.mxu0 %v2426
        %2528 = vmatprep.subr.mxu0 %v2435
        %2529 = vmatpush1.msra.mxu0 %v2434
        %2530 = vmatprep.subr.mxu0 %v2443
        %2531 = vmatpush1.msra.mxu0 %v2442
        %2532 = vmatprep.subr.mxu0 %v2451
        %2533 = vmatpush1.msra.mxu0 %v2450
        %2534 = vmatprep.subr.mxu0 %v2459
        %2535 = vmatpush1.msra.mxu0 %v2458
        %2536 = vmatprep.subr.mxu0 %v2467
        %2537 = vmatpush1.msra.mxu0 %v2466
        %2538 = vmatprep.mubr.f32.mxu0 %v586
        %2539 = vmatmul.mubr.f32.gmra.mrb[0].mxu0 %v585
        %v2540 = vpop.f32.mrb[0].mxu0
        %v2541 = vadd.f32 0.0, %v2540
        %v2542 = vpop.f32.mrb[0].mxu0
        %v2543 = vadd.f32 0.0, %v2542
        %2544 = vdwg.mxu0
        %2545 = vmatprep.subr.mxu0 %v2221
        %2546 = vmatpush1.msra.mxu0 %v2220
        %2547 = vmatprep.subr.mxu0 %v2229
        %2548 = vmatpush1.msra.mxu0 %v2228
        %2549 = vmatprep.subr.mxu0 %v2237
        %2550 = vmatpush1.msra.mxu0 %v2236
        %2551 = vmatprep.subr.mxu0 %v2245
        %2552 = vmatpush1.msra.mxu0 %v2244
        %2553 = vmatprep.subr.mxu0 %v2253
        %2554 = vmatpush1.msra.mxu0 %v2252
        %2555 = vmatprep.subr.mxu0 %v2261
        %2556 = vmatpush1.msra.mxu0 %v2260
        %2557 = vmatprep.subr.mxu0 %v2269
        %2558 = vmatpush1.msra.mxu0 %v2268
        %2559 = vmatprep.subr.mxu0 %v2277
        %2560 = vmatpush1.msra.mxu0 %v2276
        %2561 = vmatprep.subr.mxu0 %v2285
        %2562 = vmatpush1.msra.mxu0 %v2284
        %2563 = vmatprep.subr.mxu0 %v2293
        %2564 = vmatpush1.msra.mxu0 %v2292
        %2565 = vmatprep.subr.mxu0 %v2301
        %2566 = vmatpush1.msra.mxu0 %v2300
        %2567 = vmatprep.subr.mxu0 %v2309
        %2568 = vmatpush1.msra.mxu0 %v2308
        %2569 = vmatprep.subr.mxu0 %v2317
        %2570 = vmatpush1.msra.mxu0 %v2316
        %2571 = vmatprep.subr.mxu0 %v2325
        %2572 = vmatpush1.msra.mxu0 %v2324
        %2573 = vmatprep.subr.mxu0 %v2333
        %2574 = vmatpush1.msra.mxu0 %v2332
        %2575 = vmatprep.subr.mxu0 %v2341
        %2576 = vmatpush1.msra.mxu0 %v2340
        %2577 = vmatprep.subr.mxu0 %v2349
        %2578 = vmatpush1.msra.mxu0 %v2348
        %2579 = vmatprep.subr.mxu0 %v2357
        %2580 = vmatpush1.msra.mxu0 %v2356
        %2581 = vmatprep.subr.mxu0 %v2365
        %2582 = vmatpush1.msra.mxu0 %v2364
        %2583 = vmatprep.subr.mxu0 %v2373
        %2584 = vmatpush1.msra.mxu0 %v2372
        %2585 = vmatprep.subr.mxu0 %v2381
        %2586 = vmatpush1.msra.mxu0 %v2380
        %2587 = vmatprep.subr.mxu0 %v2389
        %2588 = vmatpush1.msra.mxu0 %v2388
        %2589 = vmatprep.subr.mxu0 %v2397
        %2590 = vmatpush1.msra.mxu0 %v2396
        %2591 = vmatprep.subr.mxu0 %v2405
        %2592 = vmatpush1.msra.mxu0 %v2404
        %2593 = vmatprep.subr.mxu0 %v2413
        %2594 = vmatpush1.msra.mxu0 %v2412
        %2595 = vmatprep.subr.mxu0 %v2421
        %2596 = vmatpush1.msra.mxu0 %v2420
        %2597 = vmatprep.subr.mxu0 %v2429
        %2598 = vmatpush1.msra.mxu0 %v2428
        %2599 = vmatprep.subr.mxu0 %v2437
        %2600 = vmatpush1.msra.mxu0 %v2436
        %2601 = vmatprep.subr.mxu0 %v2445
        %2602 = vmatpush1.msra.mxu0 %v2444
        %2603 = vmatprep.subr.mxu0 %v2453
        %2604 = vmatpush1.msra.mxu0 %v2452
        %2605 = vmatprep.subr.mxu0 %v2461
        %2606 = vmatpush1.msra.mxu0 %v2460
        %2607 = vmatprep.subr.mxu0 %v2469
        %2608 = vmatpush1.msra.mxu0 %v2468
        %2609 = vmatprep.mubr.f32.mxu0 %v586
        %2610 = vmatmul.mubr.f32.gmra.mrb[0].mxu0 %v585
        %v2611 = vpop.f32.mrb[0].mxu0
        %v2612 = vadd.f32 0.0, %v2611
        %v2613 = vpop.f32.mrb[0].mxu0
        %v2614 = vadd.f32 0.0, %v2613
        %2615 = vdwg.mxu0
        %2616 = vmatprep.subr.mxu0 %v2223
        %2617 = vmatpush1.msra.mxu0 %v2222
        %2618 = vmatprep.subr.mxu0 %v2231
        %2619 = vmatpush1.msra.mxu0 %v2230
        %2620 = vmatprep.subr.mxu0 %v2239
        %2621 = vmatpush1.msra.mxu0 %v2238
        %2622 = vmatprep.subr.mxu0 %v2247
        %2623 = vmatpush1.msra.mxu0 %v2246
        %2624 = vmatprep.subr.mxu0 %v2255
        %2625 = vmatpush1.msra.mxu0 %v2254
        %2626 = vmatprep.subr.mxu0 %v2263
        %2627 = vmatpush1.msra.mxu0 %v2262
        %2628 = vmatprep.subr.mxu0 %v2271
        %2629 = vmatpush1.msra.mxu0 %v2270
        %2630 = vmatprep.subr.mxu0 %v2279
        %2631 = vmatpush1.msra.mxu0 %v2278
        %2632 = vmatprep.subr.mxu0 %v2287
        %2633 = vmatpush1.msra.mxu0 %v2286
        %2634 = vmatprep.subr.mxu0 %v2295
        %2635 = vmatpush1.msra.mxu0 %v2294
        %2636 = vmatprep.subr.mxu0 %v2303
        %2637 = vmatpush1.msra.mxu0 %v2302
        %2638 = vmatprep.subr.mxu0 %v2311
        %2639 = vmatpush1.msra.mxu0 %v2310
        %2640 = vmatprep.subr.mxu0 %v2319
        %2641 = vmatpush1.msra.mxu0 %v2318
        %2642 = vmatprep.subr.mxu0 %v2327
        %2643 = vmatpush1.msra.mxu0 %v2326
        %2644 = vmatprep.subr.mxu0 %v2335
        %2645 = vmatpush1.msra.mxu0 %v2334
        %2646 = vmatprep.subr.mxu0 %v2343
        %2647 = vmatpush1.msra.mxu0 %v2342
        %2648 = vmatprep.subr.mxu0 %v2351
        %2649 = vmatpush1.msra.mxu0 %v2350
        %2650 = vmatprep.subr.mxu0 %v2359
        %2651 = vmatpush1.msra.mxu0 %v2358
        %2652 = vmatprep.subr.mxu0 %v2367
        %2653 = vmatpush1.msra.mxu0 %v2366
        %2654 = vmatprep.subr.mxu0 %v2375
        %2655 = vmatpush1.msra.mxu0 %v2374
        %2656 = vmatprep.subr.mxu0 %v2383
        %2657 = vmatpush1.msra.mxu0 %v2382
        %2658 = vmatprep.subr.mxu0 %v2391
        %2659 = vmatpush1.msra.mxu0 %v2390
        %2660 = vmatprep.subr.mxu0 %v2399
        %2661 = vmatpush1.msra.mxu0 %v2398
        %2662 = vmatprep.subr.mxu0 %v2407
        %2663 = vmatpush1.msra.mxu0 %v2406
        %2664 = vmatprep.subr.mxu0 %v2415
        %2665 = vmatpush1.msra.mxu0 %v2414
        %2666 = vmatprep.subr.mxu0 %v2423
        %2667 = vmatpush1.msra.mxu0 %v2422
        %2668 = vmatprep.subr.mxu0 %v2431
        %2669 = vmatpush1.msra.mxu0 %v2430
        %2670 = vmatprep.subr.mxu0 %v2439
        %2671 = vmatpush1.msra.mxu0 %v2438
        %2672 = vmatprep.subr.mxu0 %v2447
        %2673 = vmatpush1.msra.mxu0 %v2446
        %2674 = vmatprep.subr.mxu0 %v2455
        %2675 = vmatpush1.msra.mxu0 %v2454
        %2676 = vmatprep.subr.mxu0 %v2463
        %2677 = vmatpush1.msra.mxu0 %v2462
        %2678 = vmatprep.subr.mxu0 %v2471
        %2679 = vmatpush1.msra.mxu0 %v2470
        %2680 = vmatprep.mubr.f32.mxu0 %v586
        %2681 = vmatmul.mubr.f32.gmra.mrb[0].mxu0 %v585
        %v2682 = vpop.f32.mrb[0].mxu0
        %v2683 = vadd.f32 0.0, %v2682
        %v2684 = vpop.f32.mrb[0].mxu0
        %v2685 = vadd.f32 0.0, %v2684
        %2686 = vdwg.mxu0
        %2687 = vmatprep.subr.mxu0 %v2225
        %2688 = vmatpush1.msra.mxu0 %v2224
        %2689 = vmatprep.subr.mxu0 %v2233
        %2690 = vmatpush1.msra.mxu0 %v2232
        %2691 = vmatprep.subr.mxu0 %v2241
        %2692 = vmatpush1.msra.mxu0 %v2240
        %2693 = vmatprep.subr.mxu0 %v2249
        %2694 = vmatpush1.msra.mxu0 %v2248
        %2695 = vmatprep.subr.mxu0 %v2257
        %2696 = vmatpush1.msra.mxu0 %v2256
        %2697 = vmatprep.subr.mxu0 %v2265
        %2698 = vmatpush1.msra.mxu0 %v2264
        %2699 = vmatprep.subr.mxu0 %v2273
        %2700 = vmatpush1.msra.mxu0 %v2272
        %2701 = vmatprep.subr.mxu0 %v2281
        %2702 = vmatpush1.msra.mxu0 %v2280
        %2703 = vmatprep.subr.mxu0 %v2289
        %2704 = vmatpush1.msra.mxu0 %v2288
        %2705 = vmatprep.subr.mxu0 %v2297
        %2706 = vmatpush1.msra.mxu0 %v2296
        %2707 = vmatprep.subr.mxu0 %v2305
        %2708 = vmatpush1.msra.mxu0 %v2304
        %2709 = vmatprep.subr.mxu0 %v2313
        %2710 = vmatpush1.msra.mxu0 %v2312
        %2711 = vmatprep.subr.mxu0 %v2321
        %2712 = vmatpush1.msra.mxu0 %v2320
        %2713 = vmatprep.subr.mxu0 %v2329
        %2714 = vmatpush1.msra.mxu0 %v2328
        %2715 = vmatprep.subr.mxu0 %v2337
        %2716 = vmatpush1.msra.mxu0 %v2336
        %2717 = vmatprep.subr.mxu0 %v2345
        %2718 = vmatpush1.msra.mxu0 %v2344
        %2719 = vmatprep.subr.mxu0 %v2353
        %2720 = vmatpush1.msra.mxu0 %v2352
        %2721 = vmatprep.subr.mxu0 %v2361
        %2722 = vmatpush1.msra.mxu0 %v2360
        %2723 = vmatprep.subr.mxu0 %v2369
        %2724 = vmatpush1.msra.mxu0 %v2368
        %2725 = vmatprep.subr.mxu0 %v2377
        %2726 = vmatpush1.msra.mxu0 %v2376
        %2727 = vmatprep.subr.mxu0 %v2385
        %2728 = vmatpush1.msra.mxu0 %v2384
        %2729 = vmatprep.subr.mxu0 %v2393
        %2730 = vmatpush1.msra.mxu0 %v2392
        %2731 = vmatprep.subr.mxu0 %v2401
        %2732 = vmatpush1.msra.mxu0 %v2400
        %2733 = vmatprep.subr.mxu0 %v2409
        %2734 = vmatpush1.msra.mxu0 %v2408
        %2735 = vmatprep.subr.mxu0 %v2417
        %2736 = vmatpush1.msra.mxu0 %v2416
        %2737 = vmatprep.subr.mxu0 %v2425
        %2738 = vmatpush1.msra.mxu0 %v2424
        %2739 = vmatprep.subr.mxu0 %v2433
        %2740 = vmatpush1.msra.mxu0 %v2432
        %2741 = vmatprep.subr.mxu0 %v2441
        %2742 = vmatpush1.msra.mxu0 %v2440
        %2743 = vmatprep.subr.mxu0 %v2449
        %2744 = vmatpush1.msra.mxu0 %v2448
        %2745 = vmatprep.subr.mxu0 %v2457
        %2746 = vmatpush1.msra.mxu0 %v2456
        %2747 = vmatprep.subr.mxu0 %v2465
        %2748 = vmatpush1.msra.mxu0 %v2464
        %2749 = vmatprep.subr.mxu0 %v2473
        %2750 = vmatpush1.msra.mxu0 %v2472
        %2751 = vmatprep.mubr.f32.mxu0 %v586
        %2752 = vmatmul.mubr.f32.gmra.mrb[0].mxu0 %v585
        %v2753 = vpop.f32.mrb[0].mxu0
        %v2754 = vadd.f32 0.0, %v2753
        %v2755 = vpop.f32.mrb[0].mxu0
        %v2756 = vadd.f32 0.0, %v2755
        %2757 = vdwg.mxu0
        %v2758 = vadd.f32 %v2209, %v2541
        %v2759 = vadd.f32 %v2210, %v2543
        %v2760 = vadd.f32 %v2211, %v2612
        %v2761 = vadd.f32 %v2212, %v2614
        %v2762 = vadd.f32 %v2213, %v2683
        %v2763 = vadd.f32 %v2214, %v2685
        %v2764 = vadd.f32 %v2215, %v2754
        %v2765 = vadd.f32 %v2216, %v2756
        %2766 = vst [vmem:[%s279] sm:$0xff] %v2758
        %2767 = vst [vmem:[%s279 + $0x8] sm:$0xff] %v2759
        %2768 = vst [vmem:[%s279 + $0x10] sm:$0xff] %v2760
        %2769 = vst [vmem:[%s279 + $0x18] sm:$0xff] %v2761
        %2770 = vst [vmem:[%s279 + $0x20] sm:$0xff] %v2762
        %2771 = vst [vmem:[%s279 + $0x28] sm:$0xff] %v2763
        %2772 = vst [vmem:[%s279 + $0x30] sm:$0xff] %v2764
        %2773 = vst [vmem:[%s279 + $0x38] sm:$0xff] %v2765
        %p2774 = scmp.lt.s32.totalorder %s19, 1
        %s2775 = scalar_select %p2774, %s19, 1
        %s2776 = smul.addr %s2775, 8
        %s2777 = smul.addr %s2776, 8
        %s2778 = scalar_lea.vmem %s6, %s2777
        // Predicated region
        $region53: #{upsample_block_forward.3} parent=43 // pred_check
          %p2779 = pneg %p168
        $region54: #{upsample_block_forward.3} parent=43 // pred_check_branch
          %2781 = sbr.rel (%p2779) target = $region56
        $region55: #{upsample_block_forward.3} parent=43 // pred_region
          _
        $region56: #{upsample_block_forward.3} parent=43 // pred_fallthru
          _
      $region44: #{upsample_block_forward.3} parent=5 // pred_fallthru
        _
      %p2782 = scmp.le.s32.totalorder 2, %s14
      // Predicated region
      $region57: #{upsample_block_forward.3} parent=5 // pred_check
        %p2783 = pneg %p2782
      $region58: #{upsample_block_forward.3} parent=5 // pred_check_branch
        %2785 = sbr.rel (%p2783) target = $region60
      $region59: #{upsample_block_forward.3} parent=5 // pred_region
        %s2786 = ssub.s32 %s14, 2
        // Predicated region
        $region61: #{upsample_block_forward.3} parent=59 // pred_check
          %p2787 = pneg %p174
        $region62: #{upsample_block_forward.3} parent=59 // pred_check_branch
          %2789 = sbr.rel (%p2787) target = $region64
        $region63: #{upsample_block_forward.3} parent=59 // pred_region
          %p2790 = scmp.lt.s32.totalorder %s20, 1
          %s2791 = scalar_select %p2790, %s20, 1
          %s2792 = smul.addr %s2791, 8
          %s2793 = smul.addr %s2792, 8
          %s2794 = scalar_lea.vmem %s6, %s2793
        $region64: #{upsample_block_forward.3} parent=59 // pred_fallthru
          _
      $region60: #{upsample_block_forward.3} parent=5 // pred_fallthru
        _
    $region6: #{upsample_block_forward.3} parent=1 // loop_footer
      %s18 = sadd.s32 1, %s14
    $region7: #{upsample_block_forward.3} parent=1 // loop_footer_branch
      %13 = sbr.rel target = $region3
    $region8: #{upsample_block_forward.3} parent=1 // loop_exit
      _
    %2795 = vsyncpa [#allocation3], 1
    %s2796 = scalar_lea.sflag [#allocation3], 1
    %2797 = vsyncpa %s2796, 1
    %2798 = vsyncpa [#allocation5], 1

</llo_original>
